<compile_context>
chip_gen: v5e
topology: v5e:2x2
jax: 0.10.0
libtpu: 0.0.40
codegen_flags: <defaults>
</compile_context>

<pallas_src>
import functools

import jax
import jax.numpy as jnp
from jax import lax
from jax.experimental import pallas as pl
from jax.experimental.pallas import tpu as pltpu

IGNORE_INDEX = -100
RMS_EPS = 1e-5     # moshi ScaledEmbedding rms_norm eps
LN_EPS = 1e-12     # BERT LayerNorm eps


# --------------------------------------------------------------------------- #
# Fused kernel, grid=(num_layers,):
#   l == 0        : embedding-row DMAs + depformer_in + BertEmbeddings LayerNorm
#   every l       : one depth-transformer layer (weights indexed by l)
#   l == L - 1    : streamed per-quantizer output heads
# --------------------------------------------------------------------------- #
def fused_talking_head_kernel(
        # scalar prefetch (SMEM)
        row_idx_ref,
        # inputs
        x_ref, w_in_ref, b_in_ref, emb_tab_hbm, emb_norm_w_ref, mask_ref,
        emb_ln_w_ref, emb_ln_b_ref,
        wqkv_ref, bqkv_ref, wo_ref, bo_ref, ln1_w_ref, ln1_b_ref,
        w1_ref, b1_ref, w2_ref, b2_ref, ln2_w_ref, ln2_b_ref,
        w_out_hbm, b_out_ref,
        # output
        out_ref,
        # scratch
        h_ref, emb_buf, emb_sem, w_out_buf, w_out_sem,
        *, num_heads):
    l = pl.program_id(0)
    n_layers = pl.num_programs(0)
    K, Dd = h_ref.shape
    H = num_heads
    dh = Dd // H
    Dt = x_ref.shape[1]

    def layer_norm(v, w, b):
        mu = jnp.mean(v, axis=-1, keepdims=True)
        var = jnp.mean((v - mu) ** 2, axis=-1, keepdims=True)
        return (v - mu) * lax.rsqrt(var + LN_EPS) * w + b

    def emb_row_copy(k):
        return pltpu.make_async_copy(
            emb_tab_hbm.at[pl.ds(row_idx_ref[k], 1), :],
            emb_buf.at[pl.ds(k, 1), :],
            emb_sem.at[k])

    def w_out_copy(k, slot):
        return pltpu.make_async_copy(
            w_out_hbm.at[k], w_out_buf.at[slot], w_out_sem.at[slot])

    # ---- prologue (layer 0 only): gathers + depformer_in + embeddings -------
    @pl.when(l == 0)
    def _prologue():
        # Kick off the K embedding-row gathers and the first output-head weight
        # chunk; both overlap the depformer_in matmul / the whole transformer.
        for k in range(K):
            emb_row_copy(k).start()
        w_out_copy(0, 0).start()

        # depformer_in: K-batched [1,Dt]@[Dt,Dd] projections -> [K, Dd]
        xb = jnp.broadcast_to(x_ref[...].astype(jnp.bfloat16)[None], (K, 1, Dt))
        proj = lax.dot_general(
            xb, w_in_ref[...], (((2,), (1,)), ((0,), (0,))),
            preferred_element_type=jnp.float32).reshape(K, Dd) + b_in_ref[...]

        # ScaledEmbedding: gathered rows -> rms_norm * weight -> zero at zero_idx
        for k in range(K):
            emb_row_copy(k).wait()
        emb = emb_buf[...]                                           # [K, Dd] f32
        rms = lax.rsqrt(jnp.mean(emb * emb, axis=-1, keepdims=True) + RMS_EPS)
        emb = emb * rms * emb_norm_w_ref[...] * mask_ref[...]

        # BertEmbeddings LayerNorm (word/position embeddings disabled in module)
        h_ref[...] = layer_norm(proj + emb, emb_ln_w_ref[...], emb_ln_b_ref[...])

    # ---- depth-transformer layer l -------------------------------------------
    h = h_ref[...]                                                   # [K, Dd] f32
    h16 = h.astype(jnp.bfloat16)

    # fused QKV projection: one lane-dense [K,Dd]@[Dd,3*Dd] matmul
    qkv = jnp.dot(h16, wqkv_ref[0],
                  preferred_element_type=jnp.float32) + bqkv_ref[0]  # [K, 3*Dd]

    row = lax.broadcasted_iota(jnp.int32, (K, K), 0)
    col = lax.broadcasted_iota(jnp.int32, (K, K), 1)
    causal = col <= row                                              # [K, K]

    # per-head scores (1/sqrt(dh) already folded into the Q weights at init)
    s_heads = []
    for hh in range(H):
        qh = qkv[:, hh * dh:(hh + 1) * dh]
        kh = qkv[:, Dd + hh * dh:Dd + (hh + 1) * dh]
        s_heads.append(lax.dot_general(qh, kh, (((1,), (1,)), ((), ())),
                                       preferred_element_type=jnp.float32))
    s = jnp.stack(s_heads, axis=0)                                   # [H, K, K]
    s = jnp.where(causal, s, jnp.finfo(jnp.float32).min)
    s = s - jnp.max(s, axis=-1, keepdims=True)
    p = jnp.exp(s)
    p = p * pl.reciprocal(jnp.sum(p, axis=-1, keepdims=True), approx=True)

    ctx_heads = []
    for hh in range(H):
        vh = qkv[:, 2 * Dd + hh * dh:2 * Dd + (hh + 1) * dh]
        ctx_heads.append(jnp.dot(p[hh], vh, preferred_element_type=jnp.float32))
    ctx = jnp.concatenate(ctx_heads, axis=-1)                        # [K, Dd]

    # fused attention output projection: one [K,Dd]@[Dd,Dd] matmul
    attn = jnp.dot(ctx.astype(jnp.bfloat16), wo_ref[0],
                   preferred_element_type=jnp.float32) + bo_ref[0]
    h = layer_norm(h + attn, ln1_w_ref[0], ln1_b_ref[0])

    inter = jnp.dot(h.astype(jnp.bfloat16), w1_ref[0],
                    preferred_element_type=jnp.float32) + b1_ref[0]
    # TODO(synk): BERT reference uses exact (erf) GELU; tanh approximation here.
    inter = jax.nn.gelu(inter, approximate=True)
    ffn = jnp.dot(inter.astype(jnp.bfloat16), w2_ref[0],
                  preferred_element_type=jnp.float32) + b2_ref[0]
    h = layer_norm(h + ffn, ln2_w_ref[0], ln2_b_ref[0])
    h_ref[...] = h

    # ---- epilogue (last layer): streamed per-quantizer output heads ----------
    @pl.when(l == n_layers - 1)
    def _epilogue():
        h_out = h.astype(jnp.bfloat16)
        rows = []
        for k in range(K):
            slot = k % 2
            w_out_copy(k, slot).wait()
            if k + 1 < K:                       # prefetch next chunk (other slot)
                w_out_copy(k + 1, (k + 1) % 2).start()
            rows.append(jnp.dot(h_out[k:k + 1, :], w_out_buf[slot],
                                preferred_element_type=jnp.float32))  # [1, C]
        out_ref[...] = jnp.concatenate(rows, axis=0) + b_out_ref[...]


# --------------------------------------------------------------------------- #
# Wrapper (jit-able): scalar index math, pallas_call plumbing, reshape glue.
# --------------------------------------------------------------------------- #
def moshi_nar_generation_step(params, context_vector, sequence, *, cfg):
    """context_vector: [1, 1, tempformer_dim] f32, sequence: [1, 1, K] int32."""
    K = cfg["num_quantizers"]
    C = cfg["codebook_size"]
    V = cfg["text_vocab_size"]
    Dt = cfg["tempformer_dim"]
    Dd = cfg["depformer_dim"]
    F = cfg["depformer_dim_feedforward"]
    L = cfg["depformer_num_layers"]
    H = cfg["depformer_num_heads"]

    x = context_vector.reshape(1, Dt).astype(jnp.float32)
    toks = sequence.reshape(K).astype(jnp.int32)

    # ScaledEmbedding index math (clamp + per-quantizer table offset).  The row
    # gather itself happens in-kernel via DMA from the HBM-resident table.
    clamped = jnp.maximum(toks, 0)
    base = jnp.concatenate(
        [jnp.zeros((1,), jnp.int32),
         V + (C + 1) * jnp.arange(K - 1, dtype=jnp.int32)])
    row_idx = clamped + base                                         # [K] int32
    mask = (toks != IGNORE_INDEX).astype(jnp.float32)[:, None]       # [K, 1]

    grid_spec = pltpu.PrefetchScalarGridSpec(
        num_scalar_prefetch=1,
        grid=(L,),
        in_specs=[
            # layer-invariant blocks (constant index maps -> loaded once)
            pl.BlockSpec((1, Dt), lambda l, s: (0, 0)),              # x
            pl.BlockSpec((K, Dt, Dd), lambda l, s: (0, 0, 0)),       # w_in
            pl.BlockSpec((K, Dd), lambda l, s: (0, 0)),              # b_in
            pl.BlockSpec(memory_space=pl.ANY),                       # emb table (HBM)
            pl.BlockSpec((K, Dd), lambda l, s: (0, 0)),              # emb rms weight
            pl.BlockSpec((K, 1), lambda l, s: (0, 0)),               # zero-idx mask
            pl.BlockSpec((1, Dd), lambda l, s: (0, 0)),              # emb LN weight
            pl.BlockSpec((1, Dd), lambda l, s: (0, 0)),              # emb LN bias
            # per-layer weight stacks (auto double-buffered across the grid)
            pl.BlockSpec((1, Dd, 3 * Dd), lambda l, s: (l, 0, 0)),   # w_qkv
            pl.BlockSpec((1, 1, 3 * Dd), lambda l, s: (l, 0, 0)),    # b_qkv
            pl.BlockSpec((1, Dd, Dd), lambda l, s: (l, 0, 0)),       # wo
            pl.BlockSpec((1, 1, Dd), lambda l, s: (l, 0, 0)),        # bo
            pl.BlockSpec((1, 1, Dd), lambda l, s: (l, 0, 0)),        # ln1_w
            pl.BlockSpec((1, 1, Dd), lambda l, s: (l, 0, 0)),        # ln1_b
            pl.BlockSpec((1, Dd, F), lambda l, s: (l, 0, 0)),        # w1
            pl.BlockSpec((1, 1, F), lambda l, s: (l, 0, 0)),         # b1
            pl.BlockSpec((1, F, Dd), lambda l, s: (l, 0, 0)),        # w2
            pl.BlockSpec((1, 1, Dd), lambda l, s: (l, 0, 0)),        # b2
            pl.BlockSpec((1, 1, Dd), lambda l, s: (l, 0, 0)),        # ln2_w
            pl.BlockSpec((1, 1, Dd), lambda l, s: (l, 0, 0)),        # ln2_b
            # output heads: weights stay in HBM and are streamed in-kernel
            pl.BlockSpec(memory_space=pl.ANY),                       # w_out [K,Dd,C]
            pl.BlockSpec((K, C), lambda l, s: (0, 0)),               # b_out
        ],
        out_specs=pl.BlockSpec((K, C), lambda l, s: (0, 0)),
        scratch_shapes=[
            pltpu.VMEM((K, Dd), jnp.float32),        # hidden state (carried)
            pltpu.VMEM((K, Dd), jnp.float32),        # gathered embedding rows
            pltpu.SemaphoreType.DMA((K,)),           # embedding DMA sems
            pltpu.VMEM((2, Dd, C), jnp.bfloat16),    # W_out double buffer
            pltpu.SemaphoreType.DMA((2,)),           # W_out DMA sems
        ],
    )

    kern = functools.partial(fused_talking_head_kernel, num_heads=H)
    logits = pl.pallas_call(
        kern,
        out_shape=jax.ShapeDtypeStruct((K, C), jnp.float32),
        grid_spec=grid_spec,
        compiler_params=pltpu.CompilerParams(
            dimension_semantics=("arbitrary",),
            vmem_limit_bytes=32 * 1024 * 1024),
    )(row_idx, x,
      params["w_in"], params["b_in"], params["emb_table"],
      params["emb_norm_w"], mask, params["emb_ln_w"], params["emb_ln_b"],
      params["w_qkv"], params["b_qkv"], params["wo"], params["bo"],
      params["ln1_w"], params["ln1_b"], params["w1"], params["b1"],
      params["w2"], params["b2"], params["ln2_w"], params["ln2_b"],
      params["w_out"], params["b_out"])

    # torch reference stacks logits into [B, S, K, codebook_size] with B=S=1.
    return logits.reshape(1, 1, K, C)


# --------------------------------------------------------------------------- #
# Deterministic synthetic parameters (module-natural shapes, packed into the
# kernel-friendly layouts: fused QKV with folded score scale, concatenated
# embedding table, per-layer stacks, bf16 matmul weights).
# --------------------------------------------------------------------------- #
def init_params(key):
    cfg = dict(num_quantizers=8, codebook_size=256, text_vocab_size=512,
               tempformer_dim=128, depformer_dim=128,
               depformer_dim_feedforward=256,
               depformer_num_heads=4, depformer_num_layers=2)
    K, C, V = cfg["num_quantizers"], cfg["codebook_size"], cfg["text_vocab_size"]
    Dt, Dd, F = (cfg["tempformer_dim"], cfg["depformer_dim"],
                 cfg["depformer_dim_feedforward"])
    L, H = cfg["depformer_num_layers"], cfg["depformer_num_heads"]
    dh = Dd // H
    bf16 = jnp.bfloat16
    std = 0.02

    ks = iter(jax.random.split(key, 24))
    n = lambda shape: jax.random.normal(next(ks), shape, jnp.float32) * std

    # module-natural ("torch") parameter shapes
    w_in, b_in = n((K, Dt, Dd)), n((K, Dd))
    text_emb = n((V, Dd))
    code_emb = n((K - 1, C + 1, Dd))
    wq, wk, wv, wo = n((L, Dd, Dd)), n((L, Dd, Dd)), n((L, Dd, Dd)), n((L, Dd, Dd))
    bq, bk, bv, bo = n((L, 1, Dd)), n((L, 1, Dd)), n((L, 1, Dd)), n((L, 1, Dd))
    w1, b1 = n((L, Dd, F)), n((L, 1, F))
    w2, b2 = n((L, F, Dd)), n((L, 1, Dd))
    w_out, b_out = n((K, Dd, C)), n((K, C))

    scale = 1.0 / (dh ** 0.5)
    # TODO(synk): at real Moshi scale, quantize the streamed weights (w_out, w1,
    # w2) to int8 (v5e/v6e) or fp8 (v7x) with per-channel scales to halve the
    # HBM weight traffic; kept bf16 here.
    params = dict(
        w_in=w_in.astype(bf16), b_in=b_in,
        # depformer_text_emb + depformer_emb tables concatenated row-wise (HBM)
        emb_table=jnp.concatenate(
            [text_emb, code_emb.reshape((K - 1) * (C + 1), Dd)], axis=0),
        emb_norm_w=jnp.ones((K, Dd), jnp.float32),
        emb_ln_w=jnp.ones((1, Dd), jnp.float32),
        emb_ln_b=jnp.zeros((1, Dd), jnp.float32),
        # fused QKV with the 1/sqrt(dh) score scale folded into the Q half
        w_qkv=jnp.concatenate([wq * scale, wk, wv], axis=-1).astype(bf16),
        b_qkv=jnp.concatenate([bq * scale, bk, bv], axis=-1),
        wo=wo.astype(bf16), bo=bo,
        ln1_w=jnp.ones((L, 1, Dd), jnp.float32),
        ln1_b=jnp.zeros((L, 1, Dd), jnp.float32),
        w1=w1.astype(bf16), b1=b1,
        w2=w2.astype(bf16), b2=b2,
        ln2_w=jnp.ones((L, 1, Dd), jnp.float32),
        ln2_b=jnp.zeros((L, 1, Dd), jnp.float32),
        # linears: per-quantizer head weights [K, Dd, C] (HBM, streamed), bias
        w_out=w_out.astype(bf16), b_out=b_out,
    )
    return params, cfg


if __name__ == "__main__":
    key = jax.random.PRNGKey(0)
    pkey, xkey, tkey, ckey = jax.random.split(key, 4)
    params, cfg = init_params(pkey)
    K = cfg["num_quantizers"]

    # generation_step asserts B == 1 and S == 1.
    context_vector = jax.random.normal(
        xkey, (1, 1, cfg["tempformer_dim"]), jnp.float32)
    text_token = jax.random.randint(
        tkey, (1, 1, 1), 0, cfg["text_vocab_size"], jnp.int32)
    codes = jax.random.randint(
        ckey, (1, 1, K - 1), 0, cfg["codebook_size"], jnp.int32)
    sequence = jnp.concatenate([text_token, codes], axis=-1)   # [1, 1, K]

    step = jax.jit(
        lambda p, cv, seq: moshi_nar_generation_step(p, cv, seq, cfg=cfg))
    logits = jax.block_until_ready(step(params, context_vector, sequence))
    assert logits.shape == (1, 1, K, cfg["codebook_size"])
    assert bool(jnp.all(jnp.isfinite(logits)))
    print("KERNEL_OK")
</pallas_src>

<mosaic_0001>
module attributes {stable_mosaic.version = 11 : i64} {
  func.func @fused_talking_head_kernel(%arg0: i32, %arg1: memref<8xi32, #tpu.memory_space<smem>>, %arg2: memref<1x128xf32, #tpu.memory_space<vmem>>, %arg3: memref<8x128x128xbf16, #tpu.memory_space<vmem>>, %arg4: memref<8x128xf32, #tpu.memory_space<vmem>>, %arg5: memref<2311x128xf32, #tpu.memory_space<any>>, %arg6: memref<8x128xf32, #tpu.memory_space<vmem>>, %arg7: memref<8x1xf32, #tpu.memory_space<vmem>>, %arg8: memref<1x128xf32, #tpu.memory_space<vmem>>, %arg9: memref<1x128xf32, #tpu.memory_space<vmem>>, %arg10: memref<1x128x384xbf16, #tpu.memory_space<vmem>>, %arg11: memref<1x1x384xf32, #tpu.memory_space<vmem>>, %arg12: memref<1x128x128xbf16, #tpu.memory_space<vmem>>, %arg13: memref<1x1x128xf32, #tpu.memory_space<vmem>>, %arg14: memref<1x1x128xf32, #tpu.memory_space<vmem>>, %arg15: memref<1x1x128xf32, #tpu.memory_space<vmem>>, %arg16: memref<1x128x256xbf16, #tpu.memory_space<vmem>>, %arg17: memref<1x1x256xf32, #tpu.memory_space<vmem>>, %arg18: memref<1x256x128xbf16, #tpu.memory_space<vmem>>, %arg19: memref<1x1x128xf32, #tpu.memory_space<vmem>>, %arg20: memref<1x1x128xf32, #tpu.memory_space<vmem>>, %arg21: memref<1x1x128xf32, #tpu.memory_space<vmem>>, %arg22: memref<8x128x256xbf16, #tpu.memory_space<any>>, %arg23: memref<8x256xf32, #tpu.memory_space<vmem>>, %arg24: memref<8x256xf32, #tpu.memory_space<vmem>>, %arg25: memref<8x128xf32, #tpu.memory_space<vmem>>, %arg26: memref<8x128xf32, #tpu.memory_space<vmem>>, %arg27: memref<8x!tpu.dma_semaphore, #tpu.memory_space<semaphore_mem>>, %arg28: memref<2x128x256xbf16, #tpu.memory_space<vmem>>, %arg29: memref<2x!tpu.dma_semaphore, #tpu.memory_space<semaphore_mem>>) attributes {dimension_semantics = [#tpu.dimension_semantics<arbitrary>], iteration_bounds = array<i64: 2>, scalar_prefetch = 1 : i64, scratch_operands = 5 : i64, tpu.core_type = #tpu.core_type<tc>, window_params = [{pipeline_mode = #tpu.pipeline_mode<synchronous>, transform_indices = @transform_0, window_bounds = array<i64: 1, 128>}, {pipeline_mode = #tpu.pipeline_mode<synchronous>, transform_indices = @transform_1, window_bounds = array<i64: 8, 128, 128>}, {pipeline_mode = #tpu.pipeline_mode<synchronous>, transform_indices = @transform_2, window_bounds = array<i64: 8, 128>}, {}, {pipeline_mode = #tpu.pipeline_mode<synchronous>, transform_indices = @transform_4, window_bounds = array<i64: 8, 128>}, {pipeline_mode = #tpu.pipeline_mode<synchronous>, transform_indices = @transform_5, window_bounds = array<i64: 8, 1>}, {pipeline_mode = #tpu.pipeline_mode<synchronous>, transform_indices = @transform_6, window_bounds = array<i64: 1, 128>}, {pipeline_mode = #tpu.pipeline_mode<synchronous>, transform_indices = @transform_7, window_bounds = array<i64: 1, 128>}, {transform_indices = @transform_8, window_bounds = array<i64: 1, 128, 384>}, {transform_indices = @transform_9, window_bounds = array<i64: 1, 1, 384>}, {transform_indices = @transform_10, window_bounds = array<i64: 1, 128, 128>}, {transform_indices = @transform_11, window_bounds = array<i64: 1, 1, 128>}, {transform_indices = @transform_12, window_bounds = array<i64: 1, 1, 128>}, {transform_indices = @transform_13, window_bounds = array<i64: 1, 1, 128>}, {transform_indices = @transform_14, window_bounds = array<i64: 1, 128, 256>}, {transform_indices = @transform_15, window_bounds = array<i64: 1, 1, 256>}, {transform_indices = @transform_16, window_bounds = array<i64: 1, 256, 128>}, {transform_indices = @transform_17, window_bounds = array<i64: 1, 1, 128>}, {transform_indices = @transform_18, window_bounds = array<i64: 1, 1, 128>}, {transform_indices = @transform_19, window_bounds = array<i64: 1, 1, 128>}, {}, {pipeline_mode = #tpu.pipeline_mode<synchronous>, transform_indices = @transform_21, window_bounds = array<i64: 8, 256>}, {pipeline_mode = #tpu.pipeline_mode<synchronous>, transform_indices = @transform_22, window_bounds = array<i64: 8, 256>}]} {
    %c0_i32 = arith.constant 0 : i32
    %0 = arith.cmpi eq, %arg0, %c0_i32 : i32
    %1 = arith.extui %0 : i1 to i32
    %c0_i32_0 = arith.constant 0 : i32
    %2 = arith.cmpi ne, %1, %c0_i32_0 : i32
    scf.if %2 {
      %c0_69 = arith.constant 0 : index
      %158 = memref.load %arg1[%c0_69] : memref<8xi32, #tpu.memory_space<smem>>
      %c0_i32_70 = arith.constant 0 : i32
      %c0_i32_71 = arith.constant 0 : i32
      %159 = tpu.memref_slice %arg5[%158, %c0_i32_71] : memref<2311x128xf32, #tpu.memory_space<any>> -> memref<1x128xf32, #tpu.memory_space<any>>
      %c0_i32_72 = arith.constant 0 : i32
      %c0_i32_73 = arith.constant 0 : i32
      %160 = tpu.memref_slice %arg26[%c0_i32_72, %c0_i32_73] : memref<8x128xf32, #tpu.memory_space<vmem>> -> memref<1x128xf32, #tpu.memory_space<vmem>>
      %161 = tpu.memref_slice %arg27[%c0_i32_70] : memref<8x!tpu.dma_semaphore, #tpu.memory_space<semaphore_mem>> -> memref<1x!tpu.dma_semaphore, #tpu.memory_space<semaphore_mem>>
      %162 = tpu.memref_squeeze %161 : memref<1x!tpu.dma_semaphore, #tpu.memory_space<semaphore_mem>> -> memref<!tpu.dma_semaphore, #tpu.memory_space<semaphore_mem>>
      tpu.enqueue_dma source(%159 : memref<1x128xf32, #tpu.memory_space<any>>) target(%160 : memref<1x128xf32, #tpu.memory_space<vmem>>) target_semaphore(%162 : memref<!tpu.dma_semaphore, #tpu.memory_space<semaphore_mem>>)
      %c1 = arith.constant 1 : index
      %163 = memref.load %arg1[%c1] : memref<8xi32, #tpu.memory_space<smem>>
      %c1_i32_74 = arith.constant 1 : i32
      %c0_i32_75 = arith.constant 0 : i32
      %164 = tpu.memref_slice %arg5[%163, %c0_i32_75] : memref<2311x128xf32, #tpu.memory_space<any>> -> memref<1x128xf32, #tpu.memory_space<any>>
      %c1_i32_76 = arith.constant 1 : i32
      %c0_i32_77 = arith.constant 0 : i32
      %165 = tpu.memref_slice %arg26[%c1_i32_76, %c0_i32_77] : memref<8x128xf32, #tpu.memory_space<vmem>> -> memref<1x128xf32, #tpu.memory_space<vmem>>
      %166 = tpu.memref_slice %arg27[%c1_i32_74] : memref<8x!tpu.dma_semaphore, #tpu.memory_space<semaphore_mem>> -> memref<1x!tpu.dma_semaphore, #tpu.memory_space<semaphore_mem>>
      %167 = tpu.memref_squeeze %166 : memref<1x!tpu.dma_semaphore, #tpu.memory_space<semaphore_mem>> -> memref<!tpu.dma_semaphore, #tpu.memory_space<semaphore_mem>>
      tpu.enqueue_dma source(%164 : memref<1x128xf32, #tpu.memory_space<any>>) target(%165 : memref<1x128xf32, #tpu.memory_space<vmem>>) target_semaphore(%167 : memref<!tpu.dma_semaphore, #tpu.memory_space<semaphore_mem>>)
      %c2 = arith.constant 2 : index
      %168 = memref.load %arg1[%c2] : memref<8xi32, #tpu.memory_space<smem>>
      %c2_i32 = arith.constant 2 : i32
      %c0_i32_78 = arith.constant 0 : i32
      %169 = tpu.memref_slice %arg5[%168, %c0_i32_78] : memref<2311x128xf32, #tpu.memory_space<any>> -> memref<1x128xf32, #tpu.memory_space<any>>
      %c2_i32_79 = arith.constant 2 : i32
      %c0_i32_80 = arith.constant 0 : i32
      %170 = tpu.memref_slice %arg26[%c2_i32_79, %c0_i32_80] : memref<8x128xf32, #tpu.memory_space<vmem>> -> memref<1x128xf32, #tpu.memory_space<vmem>>
      %171 = tpu.memref_slice %arg27[%c2_i32] : memref<8x!tpu.dma_semaphore, #tpu.memory_space<semaphore_mem>> -> memref<1x!tpu.dma_semaphore, #tpu.memory_space<semaphore_mem>>
      %172 = tpu.memref_squeeze %171 : memref<1x!tpu.dma_semaphore, #tpu.memory_space<semaphore_mem>> -> memref<!tpu.dma_semaphore, #tpu.memory_space<semaphore_mem>>
      tpu.enqueue_dma source(%169 : memref<1x128xf32, #tpu.memory_space<any>>) target(%170 : memref<1x128xf32, #tpu.memory_space<vmem>>) target_semaphore(%172 : memref<!tpu.dma_semaphore, #tpu.memory_space<semaphore_mem>>)
      %c3 = arith.constant 3 : index
      %173 = memref.load %arg1[%c3] : memref<8xi32, #tpu.memory_space<smem>>
      %c3_i32 = arith.constant 3 : i32
      %c0_i32_81 = arith.constant 0 : i32
      %174 = tpu.memref_slice %arg5[%173, %c0_i32_81] : memref<2311x128xf32, #tpu.memory_space<any>> -> memref<1x128xf32, #tpu.memory_space<any>>
      %c3_i32_82 = arith.constant 3 : i32
      %c0_i32_83 = arith.constant 0 : i32
      %175 = tpu.memref_slice %arg26[%c3_i32_82, %c0_i32_83] : memref<8x128xf32, #tpu.memory_space<vmem>> -> memref<1x128xf32, #tpu.memory_space<vmem>>
      %176 = tpu.memref_slice %arg27[%c3_i32] : memref<8x!tpu.dma_semaphore, #tpu.memory_space<semaphore_mem>> -> memref<1x!tpu.dma_semaphore, #tpu.memory_space<semaphore_mem>>
      %177 = tpu.memref_squeeze %176 : memref<1x!tpu.dma_semaphore, #tpu.memory_space<semaphore_mem>> -> memref<!tpu.dma_semaphore, #tpu.memory_space<semaphore_mem>>
      tpu.enqueue_dma source(%174 : memref<1x128xf32, #tpu.memory_space<any>>) target(%175 : memref<1x128xf32, #tpu.memory_space<vmem>>) target_semaphore(%177 : memref<!tpu.dma_semaphore, #tpu.memory_space<semaphore_mem>>)
      %c4 = arith.constant 4 : index
      %178 = memref.load %arg1[%c4] : memref<8xi32, #tpu.memory_space<smem>>
      %c4_i32 = arith.constant 4 : i32
      %c0_i32_84 = arith.constant 0 : i32
      %179 = tpu.memref_slice %arg5[%178, %c0_i32_84] : memref<2311x128xf32, #tpu.memory_space<any>> -> memref<1x128xf32, #tpu.memory_space<any>>
      %c4_i32_85 = arith.constant 4 : i32
      %c0_i32_86 = arith.constant 0 : i32
      %180 = tpu.memref_slice %arg26[%c4_i32_85, %c0_i32_86] : memref<8x128xf32, #tpu.memory_space<vmem>> -> memref<1x128xf32, #tpu.memory_space<vmem>>
      %181 = tpu.memref_slice %arg27[%c4_i32] : memref<8x!tpu.dma_semaphore, #tpu.memory_space<semaphore_mem>> -> memref<1x!tpu.dma_semaphore, #tpu.memory_space<semaphore_mem>>
      %182 = tpu.memref_squeeze %181 : memref<1x!tpu.dma_semaphore, #tpu.memory_space<semaphore_mem>> -> memref<!tpu.dma_semaphore, #tpu.memory_space<semaphore_mem>>
      tpu.enqueue_dma source(%179 : memref<1x128xf32, #tpu.memory_space<any>>) target(%180 : memref<1x128xf32, #tpu.memory_space<vmem>>) target_semaphore(%182 : memref<!tpu.dma_semaphore, #tpu.memory_space<semaphore_mem>>)
      %c5 = arith.constant 5 : index
      %183 = memref.load %arg1[%c5] : memref<8xi32, #tpu.memory_space<smem>>
      %c5_i32 = arith.constant 5 : i32
      %c0_i32_87 = arith.constant 0 : i32
      %184 = tpu.memref_slice %arg5[%183, %c0_i32_87] : memref<2311x128xf32, #tpu.memory_space<any>> -> memref<1x128xf32, #tpu.memory_space<any>>
      %c5_i32_88 = arith.constant 5 : i32
      %c0_i32_89 = arith.constant 0 : i32
      %185 = tpu.memref_slice %arg26[%c5_i32_88, %c0_i32_89] : memref<8x128xf32, #tpu.memory_space<vmem>> -> memref<1x128xf32, #tpu.memory_space<vmem>>
      %186 = tpu.memref_slice %arg27[%c5_i32] : memref<8x!tpu.dma_semaphore, #tpu.memory_space<semaphore_mem>> -> memref<1x!tpu.dma_semaphore, #tpu.memory_space<semaphore_mem>>
      %187 = tpu.memref_squeeze %186 : memref<1x!tpu.dma_semaphore, #tpu.memory_space<semaphore_mem>> -> memref<!tpu.dma_semaphore, #tpu.memory_space<semaphore_mem>>
      tpu.enqueue_dma source(%184 : memref<1x128xf32, #tpu.memory_space<any>>) target(%185 : memref<1x128xf32, #tpu.memory_space<vmem>>) target_semaphore(%187 : memref<!tpu.dma_semaphore, #tpu.memory_space<semaphore_mem>>)
      %c6 = arith.constant 6 : index
      %188 = memref.load %arg1[%c6] : memref<8xi32, #tpu.memory_space<smem>>
      %c6_i32 = arith.constant 6 : i32
      %c0_i32_90 = arith.constant 0 : i32
      %189 = tpu.memref_slice %arg5[%188, %c0_i32_90] : memref<2311x128xf32, #tpu.memory_space<any>> -> memref<1x128xf32, #tpu.memory_space<any>>
      %c6_i32_91 = arith.constant 6 : i32
      %c0_i32_92 = arith.constant 0 : i32
      %190 = tpu.memref_slice %arg26[%c6_i32_91, %c0_i32_92] : memref<8x128xf32, #tpu.memory_space<vmem>> -> memref<1x128xf32, #tpu.memory_space<vmem>>
      %191 = tpu.memref_slice %arg27[%c6_i32] : memref<8x!tpu.dma_semaphore, #tpu.memory_space<semaphore_mem>> -> memref<1x!tpu.dma_semaphore, #tpu.memory_space<semaphore_mem>>
      %192 = tpu.memref_squeeze %191 : memref<1x!tpu.dma_semaphore, #tpu.memory_space<semaphore_mem>> -> memref<!tpu.dma_semaphore, #tpu.memory_space<semaphore_mem>>
      tpu.enqueue_dma source(%189 : memref<1x128xf32, #tpu.memory_space<any>>) target(%190 : memref<1x128xf32, #tpu.memory_space<vmem>>) target_semaphore(%192 : memref<!tpu.dma_semaphore, #tpu.memory_space<semaphore_mem>>)
      %c7 = arith.constant 7 : index
      %193 = memref.load %arg1[%c7] : memref<8xi32, #tpu.memory_space<smem>>
      %c7_i32 = arith.constant 7 : i32
      %c0_i32_93 = arith.constant 0 : i32
      %194 = tpu.memref_slice %arg5[%193, %c0_i32_93] : memref<2311x128xf32, #tpu.memory_space<any>> -> memref<1x128xf32, #tpu.memory_space<any>>
      %c7_i32_94 = arith.constant 7 : i32
      %c0_i32_95 = arith.constant 0 : i32
      %195 = tpu.memref_slice %arg26[%c7_i32_94, %c0_i32_95] : memref<8x128xf32, #tpu.memory_space<vmem>> -> memref<1x128xf32, #tpu.memory_space<vmem>>
      %196 = tpu.memref_slice %arg27[%c7_i32] : memref<8x!tpu.dma_semaphore, #tpu.memory_space<semaphore_mem>> -> memref<1x!tpu.dma_semaphore, #tpu.memory_space<semaphore_mem>>
      %197 = tpu.memref_squeeze %196 : memref<1x!tpu.dma_semaphore, #tpu.memory_space<semaphore_mem>> -> memref<!tpu.dma_semaphore, #tpu.memory_space<semaphore_mem>>
      tpu.enqueue_dma source(%194 : memref<1x128xf32, #tpu.memory_space<any>>) target(%195 : memref<1x128xf32, #tpu.memory_space<vmem>>) target_semaphore(%197 : memref<!tpu.dma_semaphore, #tpu.memory_space<semaphore_mem>>)
      %c0_i32_96 = arith.constant 0 : i32
      %c0_i32_97 = arith.constant 0 : i32
      %c0_i32_98 = arith.constant 0 : i32
      %c0_i32_99 = arith.constant 0 : i32
      %c0_i32_100 = arith.constant 0 : i32
      %198 = tpu.memref_slice %arg22[%c0_i32_96, %c0_i32_99, %c0_i32_100] : memref<8x128x256xbf16, #tpu.memory_space<any>> -> memref<1x128x256xbf16, #tpu.memory_space<any>>
      %199 = tpu.memref_squeeze %198 : memref<1x128x256xbf16, #tpu.memory_space<any>> -> memref<128x256xbf16, #tpu.memory_space<any>>
      %c0_i32_101 = arith.constant 0 : i32
      %c0_i32_102 = arith.constant 0 : i32
      %200 = tpu.memref_slice %arg28[%c0_i32_97, %c0_i32_101, %c0_i32_102] : memref<2x128x256xbf16, #tpu.memory_space<vmem>> -> memref<1x128x256xbf16, #tpu.memory_space<vmem>>
      %201 = tpu.memref_squeeze %200 : memref<1x128x256xbf16, #tpu.memory_space<vmem>> -> memref<128x256xbf16, #tpu.memory_space<vmem>>
      %202 = tpu.memref_slice %arg29[%c0_i32_98] : memref<2x!tpu.dma_semaphore, #tpu.memory_space<semaphore_mem>> -> memref<1x!tpu.dma_semaphore, #tpu.memory_space<semaphore_mem>>
      %203 = tpu.memref_squeeze %202 : memref<1x!tpu.dma_semaphore, #tpu.memory_space<semaphore_mem>> -> memref<!tpu.dma_semaphore, #tpu.memory_space<semaphore_mem>>
      tpu.enqueue_dma source(%199 : memref<128x256xbf16, #tpu.memory_space<any>>) target(%201 : memref<128x256xbf16, #tpu.memory_space<vmem>>) target_semaphore(%203 : memref<!tpu.dma_semaphore, #tpu.memory_space<semaphore_mem>>)
      %c0_103 = arith.constant 0 : index
      %c0_104 = arith.constant 0 : index
      %204 = vector.load %arg2[%c0_103, %c0_104] : memref<1x128xf32, #tpu.memory_space<vmem>>, vector<1x128xf32>
      %205 = arith.truncf %204 : vector<1x128xf32> to vector<1x128xbf16>
      %206 = vector.shape_cast %205 : vector<1x128xbf16> to vector<1x1x128xbf16>
      %207 = vector.shape_cast %206 : vector<1x1x128xbf16> to vector<1x1x128xbf16>
      %208 = vector.broadcast %207 : vector<1x1x128xbf16> to vector<8x1x128xbf16>
      %c0_105 = arith.constant 0 : index
      %c0_106 = arith.constant 0 : index
      %c0_107 = arith.constant 0 : index
      %209 = vector.load %arg3[%c0_105, %c0_106, %c0_107] : memref<8x128x128xbf16, #tpu.memory_space<vmem>>, vector<8x128x128xbf16>
      %cst_108 = arith.constant dense<0.000000e+00> : vector<8x1x128xf32>
      %210 = tpu.matmul %208, %209, %cst_108 {dimension_numbers = #tpu.dot_dimension_numbers<[2], [1], [1], [2], [0, 0, 0, 1, 1, 2], [0], [0]>} : vector<8x1x128xbf16>, vector<8x128x128xbf16>, vector<8x1x128xf32> -> vector<8x1x128xf32>
      %211 = vector.shape_cast %210 : vector<8x1x128xf32> to vector<8x128xf32>
      %c0_109 = arith.constant 0 : index
      %c0_110 = arith.constant 0 : index
      %212 = vector.load %arg4[%c0_109, %c0_110] : memref<8x128xf32, #tpu.memory_space<vmem>>, vector<8x128xf32>
      %213 = arith.addf %211, %212 : vector<8x128xf32>
      %c0_111 = arith.constant 0 : index
      %214 = memref.load %arg1[%c0_111] : memref<8xi32, #tpu.memory_space<smem>>
      %c0_i32_112 = arith.constant 0 : i32
      %c0_i32_113 = arith.constant 0 : i32
      %215 = tpu.memref_slice %arg5[%214, %c0_i32_113] : memref<2311x128xf32, #tpu.memory_space<any>> -> memref<1x128xf32, #tpu.memory_space<any>>
      %c0_i32_114 = arith.constant 0 : i32
      %c0_i32_115 = arith.constant 0 : i32
      %216 = tpu.memref_slice %arg26[%c0_i32_114, %c0_i32_115] : memref<8x128xf32, #tpu.memory_space<vmem>> -> memref<1x128xf32, #tpu.memory_space<vmem>>
      %217 = tpu.memref_slice %arg27[%c0_i32_112] : memref<8x!tpu.dma_semaphore, #tpu.memory_space<semaphore_mem>> -> memref<1x!tpu.dma_semaphore, #tpu.memory_space<semaphore_mem>>
      %218 = tpu.memref_squeeze %217 : memref<1x!tpu.dma_semaphore, #tpu.memory_space<semaphore_mem>> -> memref<!tpu.dma_semaphore, #tpu.memory_space<semaphore_mem>>
      tpu.wait_dma2 semaphore(%218 : memref<!tpu.dma_semaphore, #tpu.memory_space<semaphore_mem>>) src(%215 : memref<1x128xf32, #tpu.memory_space<any>>) dst(%216 : memref<1x128xf32, #tpu.memory_space<vmem>>)
      %c1_116 = arith.constant 1 : index
      %219 = memref.load %arg1[%c1_116] : memref<8xi32, #tpu.memory_space<smem>>
      %c1_i32_117 = arith.constant 1 : i32
      %c0_i32_118 = arith.constant 0 : i32
      %220 = tpu.memref_slice %arg5[%219, %c0_i32_118] : memref<2311x128xf32, #tpu.memory_space<any>> -> memref<1x128xf32, #tpu.memory_space<any>>
      %c1_i32_119 = arith.constant 1 : i32
      %c0_i32_120 = arith.constant 0 : i32
      %221 = tpu.memref_slice %arg26[%c1_i32_119, %c0_i32_120] : memref<8x128xf32, #tpu.memory_space<vmem>> -> memref<1x128xf32, #tpu.memory_space<vmem>>
      %222 = tpu.memref_slice %arg27[%c1_i32_117] : memref<8x!tpu.dma_semaphore, #tpu.memory_space<semaphore_mem>> -> memref<1x!tpu.dma_semaphore, #tpu.memory_space<semaphore_mem>>
      %223 = tpu.memref_squeeze %222 : memref<1x!tpu.dma_semaphore, #tpu.memory_space<semaphore_mem>> -> memref<!tpu.dma_semaphore, #tpu.memory_space<semaphore_mem>>
      tpu.wait_dma2 semaphore(%223 : memref<!tpu.dma_semaphore, #tpu.memory_space<semaphore_mem>>) src(%220 : memref<1x128xf32, #tpu.memory_space<any>>) dst(%221 : memref<1x128xf32, #tpu.memory_space<vmem>>)
      %c2_121 = arith.constant 2 : index
      %224 = memref.load %arg1[%c2_121] : memref<8xi32, #tpu.memory_space<smem>>
      %c2_i32_122 = arith.constant 2 : i32
      %c0_i32_123 = arith.constant 0 : i32
      %225 = tpu.memref_slice %arg5[%224, %c0_i32_123] : memref<2311x128xf32, #tpu.memory_space<any>> -> memref<1x128xf32, #tpu.memory_space<any>>
      %c2_i32_124 = arith.constant 2 : i32
      %c0_i32_125 = arith.constant 0 : i32
      %226 = tpu.memref_slice %arg26[%c2_i32_124, %c0_i32_125] : memref<8x128xf32, #tpu.memory_space<vmem>> -> memref<1x128xf32, #tpu.memory_space<vmem>>
      %227 = tpu.memref_slice %arg27[%c2_i32_122] : memref<8x!tpu.dma_semaphore, #tpu.memory_space<semaphore_mem>> -> memref<1x!tpu.dma_semaphore, #tpu.memory_space<semaphore_mem>>
      %228 = tpu.memref_squeeze %227 : memref<1x!tpu.dma_semaphore, #tpu.memory_space<semaphore_mem>> -> memref<!tpu.dma_semaphore, #tpu.memory_space<semaphore_mem>>
      tpu.wait_dma2 semaphore(%228 : memref<!tpu.dma_semaphore, #tpu.memory_space<semaphore_mem>>) src(%225 : memref<1x128xf32, #tpu.memory_space<any>>) dst(%226 : memref<1x128xf32, #tpu.memory_space<vmem>>)
      %c3_126 = arith.constant 3 : index
      %229 = memref.load %arg1[%c3_126] : memref<8xi32, #tpu.memory_space<smem>>
      %c3_i32_127 = arith.constant 3 : i32
      %c0_i32_128 = arith.constant 0 : i32
      %230 = tpu.memref_slice %arg5[%229, %c0_i32_128] : memref<2311x128xf32, #tpu.memory_space<any>> -> memref<1x128xf32, #tpu.memory_space<any>>
      %c3_i32_129 = arith.constant 3 : i32
      %c0_i32_130 = arith.constant 0 : i32
      %231 = tpu.memref_slice %arg26[%c3_i32_129, %c0_i32_130] : memref<8x128xf32, #tpu.memory_space<vmem>> -> memref<1x128xf32, #tpu.memory_space<vmem>>
      %232 = tpu.memref_slice %arg27[%c3_i32_127] : memref<8x!tpu.dma_semaphore, #tpu.memory_space<semaphore_mem>> -> memref<1x!tpu.dma_semaphore, #tpu.memory_space<semaphore_mem>>
      %233 = tpu.memref_squeeze %232 : memref<1x!tpu.dma_semaphore, #tpu.memory_space<semaphore_mem>> -> memref<!tpu.dma_semaphore, #tpu.memory_space<semaphore_mem>>
      tpu.wait_dma2 semaphore(%233 : memref<!tpu.dma_semaphore, #tpu.memory_space<semaphore_mem>>) src(%230 : memref<1x128xf32, #tpu.memory_space<any>>) dst(%231 : memref<1x128xf32, #tpu.memory_space<vmem>>)
      %c4_131 = arith.constant 4 : index
      %234 = memref.load %arg1[%c4_131] : memref<8xi32, #tpu.memory_space<smem>>
      %c4_i32_132 = arith.constant 4 : i32
      %c0_i32_133 = arith.constant 0 : i32
      %235 = tpu.memref_slice %arg5[%234, %c0_i32_133] : memref<2311x128xf32, #tpu.memory_space<any>> -> memref<1x128xf32, #tpu.memory_space<any>>
      %c4_i32_134 = arith.constant 4 : i32
      %c0_i32_135 = arith.constant 0 : i32
      %236 = tpu.memref_slice %arg26[%c4_i32_134, %c0_i32_135] : memref<8x128xf32, #tpu.memory_space<vmem>> -> memref<1x128xf32, #tpu.memory_space<vmem>>
      %237 = tpu.memref_slice %arg27[%c4_i32_132] : memref<8x!tpu.dma_semaphore, #tpu.memory_space<semaphore_mem>> -> memref<1x!tpu.dma_semaphore, #tpu.memory_space<semaphore_mem>>
      %238 = tpu.memref_squeeze %237 : memref<1x!tpu.dma_semaphore, #tpu.memory_space<semaphore_mem>> -> memref<!tpu.dma_semaphore, #tpu.memory_space<semaphore_mem>>
      tpu.wait_dma2 semaphore(%238 : memref<!tpu.dma_semaphore, #tpu.memory_space<semaphore_mem>>) src(%235 : memref<1x128xf32, #tpu.memory_space<any>>) dst(%236 : memref<1x128xf32, #tpu.memory_space<vmem>>)
      %c5_136 = arith.constant 5 : index
      %239 = memref.load %arg1[%c5_136] : memref<8xi32, #tpu.memory_space<smem>>
      %c5_i32_137 = arith.constant 5 : i32
      %c0_i32_138 = arith.constant 0 : i32
      %240 = tpu.memref_slice %arg5[%239, %c0_i32_138] : memref<2311x128xf32, #tpu.memory_space<any>> -> memref<1x128xf32, #tpu.memory_space<any>>
      %c5_i32_139 = arith.constant 5 : i32
      %c0_i32_140 = arith.constant 0 : i32
      %241 = tpu.memref_slice %arg26[%c5_i32_139, %c0_i32_140] : memref<8x128xf32, #tpu.memory_space<vmem>> -> memref<1x128xf32, #tpu.memory_space<vmem>>
      %242 = tpu.memref_slice %arg27[%c5_i32_137] : memref<8x!tpu.dma_semaphore, #tpu.memory_space<semaphore_mem>> -> memref<1x!tpu.dma_semaphore, #tpu.memory_space<semaphore_mem>>
      %243 = tpu.memref_squeeze %242 : memref<1x!tpu.dma_semaphore, #tpu.memory_space<semaphore_mem>> -> memref<!tpu.dma_semaphore, #tpu.memory_space<semaphore_mem>>
      tpu.wait_dma2 semaphore(%243 : memref<!tpu.dma_semaphore, #tpu.memory_space<semaphore_mem>>) src(%240 : memref<1x128xf32, #tpu.memory_space<any>>) dst(%241 : memref<1x128xf32, #tpu.memory_space<vmem>>)
      %c6_141 = arith.constant 6 : index
      %244 = memref.load %arg1[%c6_141] : memref<8xi32, #tpu.memory_space<smem>>
      %c6_i32_142 = arith.constant 6 : i32
      %c0_i32_143 = arith.constant 0 : i32
      %245 = tpu.memref_slice %arg5[%244, %c0_i32_143] : memref<2311x128xf32, #tpu.memory_space<any>> -> memref<1x128xf32, #tpu.memory_space<any>>
      %c6_i32_144 = arith.constant 6 : i32
      %c0_i32_145 = arith.constant 0 : i32
      %246 = tpu.memref_slice %arg26[%c6_i32_144, %c0_i32_145] : memref<8x128xf32, #tpu.memory_space<vmem>> -> memref<1x128xf32, #tpu.memory_space<vmem>>
      %247 = tpu.memref_slice %arg27[%c6_i32_142] : memref<8x!tpu.dma_semaphore, #tpu.memory_space<semaphore_mem>> -> memref<1x!tpu.dma_semaphore, #tpu.memory_space<semaphore_mem>>
      %248 = tpu.memref_squeeze %247 : memref<1x!tpu.dma_semaphore, #tpu.memory_space<semaphore_mem>> -> memref<!tpu.dma_semaphore, #tpu.memory_space<semaphore_mem>>
      tpu.wait_dma2 semaphore(%248 : memref<!tpu.dma_semaphore, #tpu.memory_space<semaphore_mem>>) src(%245 : memref<1x128xf32, #tpu.memory_space<any>>) dst(%246 : memref<1x128xf32, #tpu.memory_space<vmem>>)
      %c7_146 = arith.constant 7 : index
      %249 = memref.load %arg1[%c7_146] : memref<8xi32, #tpu.memory_space<smem>>
      %c7_i32_147 = arith.constant 7 : i32
      %c0_i32_148 = arith.constant 0 : i32
      %250 = tpu.memref_slice %arg5[%249, %c0_i32_148] : memref<2311x128xf32, #tpu.memory_space<any>> -> memref<1x128xf32, #tpu.memory_space<any>>
      %c7_i32_149 = arith.constant 7 : i32
      %c0_i32_150 = arith.constant 0 : i32
      %251 = tpu.memref_slice %arg26[%c7_i32_149, %c0_i32_150] : memref<8x128xf32, #tpu.memory_space<vmem>> -> memref<1x128xf32, #tpu.memory_space<vmem>>
      %252 = tpu.memref_slice %arg27[%c7_i32_147] : memref<8x!tpu.dma_semaphore, #tpu.memory_space<semaphore_mem>> -> memref<1x!tpu.dma_semaphore, #tpu.memory_space<semaphore_mem>>
      %253 = tpu.memref_squeeze %252 : memref<1x!tpu.dma_semaphore, #tpu.memory_space<semaphore_mem>> -> memref<!tpu.dma_semaphore, #tpu.memory_space<semaphore_mem>>
      tpu.wait_dma2 semaphore(%253 : memref<!tpu.dma_semaphore, #tpu.memory_space<semaphore_mem>>) src(%250 : memref<1x128xf32, #tpu.memory_space<any>>) dst(%251 : memref<1x128xf32, #tpu.memory_space<vmem>>)
      %c0_151 = arith.constant 0 : index
      %c0_152 = arith.constant 0 : index
      %254 = vector.load %arg26[%c0_151, %c0_152] : memref<8x128xf32, #tpu.memory_space<vmem>>, vector<8x128xf32>
      %255 = arith.mulf %254, %254 : vector<8x128xf32>
      %cst_153 = arith.constant dense<0.000000e+00> : vector<8xf32>
      %256 = vector.multi_reduction <add>, %255, %cst_153 [1] : vector<8x128xf32> to vector<8xf32>
      %257 = vector.shape_cast %256 : vector<8xf32> to vector<8x1xf32>
      %cst_154 = arith.constant 1.280000e+02 : f32
      %258 = vector.broadcast %cst_154 : f32 to vector<8x1xf32>
      %259 = arith.divf %257, %258 : vector<8x1xf32>
      %cst_155 = arith.constant 9.99999974E-6 : f32
      %260 = vector.broadcast %cst_155 : f32 to vector<8x1xf32>
      %261 = arith.addf %259, %260 : vector<8x1xf32>
      %262 = math.rsqrt %261 : vector<8x1xf32>
      %263 = vector.broadcast %262 : vector<8x1xf32> to vector<8x128xf32>
      %264 = arith.mulf %254, %263 : vector<8x128xf32>
      %c0_156 = arith.constant 0 : index
      %c0_157 = arith.constant 0 : index
      %265 = vector.load %arg6[%c0_156, %c0_157] : memref<8x128xf32, #tpu.memory_space<vmem>>, vector<8x128xf32>
      %266 = arith.mulf %264, %265 : vector<8x128xf32>
      %c0_158 = arith.constant 0 : index
      %c0_159 = arith.constant 0 : index
      %267 = vector.load %arg7[%c0_158, %c0_159] : memref<8x1xf32, #tpu.memory_space<vmem>>, vector<8x1xf32>
      %268 = vector.broadcast %267 : vector<8x1xf32> to vector<8x128xf32>
      %269 = arith.mulf %266, %268 : vector<8x128xf32>
      %270 = arith.addf %213, %269 : vector<8x128xf32>
      %c0_160 = arith.constant 0 : index
      %c0_161 = arith.constant 0 : index
      %271 = vector.load %arg8[%c0_160, %c0_161] : memref<1x128xf32, #tpu.memory_space<vmem>>, vector<1x128xf32>
      %c0_162 = arith.constant 0 : index
      %c0_163 = arith.constant 0 : index
      %272 = vector.load %arg9[%c0_162, %c0_163] : memref<1x128xf32, #tpu.memory_space<vmem>>, vector<1x128xf32>
      %cst_164 = arith.constant dense<0.000000e+00> : vector<8xf32>
      %273 = vector.multi_reduction <add>, %270, %cst_164 [1] : vector<8x128xf32> to vector<8xf32>
      %274 = vector.shape_cast %273 : vector<8xf32> to vector<8x1xf32>
      %cst_165 = arith.constant 1.280000e+02 : f32
      %275 = vector.broadcast %cst_165 : f32 to vector<8x1xf32>
      %276 = arith.divf %274, %275 : vector<8x1xf32>
      %277 = vector.broadcast %276 : vector<8x1xf32> to vector<8x128xf32>
      %278 = arith.subf %270, %277 : vector<8x128xf32>
      %279 = arith.mulf %278, %278 : vector<8x128xf32>
      %cst_166 = arith.constant dense<0.000000e+00> : vector<8xf32>
      %280 = vector.multi_reduction <add>, %279, %cst_166 [1] : vector<8x128xf32> to vector<8xf32>
      %281 = vector.shape_cast %280 : vector<8xf32> to vector<8x1xf32>
      %cst_167 = arith.constant 1.280000e+02 : f32
      %282 = vector.broadcast %cst_167 : f32 to vector<8x1xf32>
      %283 = arith.divf %281, %282 : vector<8x1xf32>
      %284 = vector.broadcast %276 : vector<8x1xf32> to vector<8x128xf32>
      %285 = arith.subf %270, %284 : vector<8x128xf32>
      %cst_168 = arith.constant 9.99999996E-13 : f32
      %286 = vector.broadcast %cst_168 : f32 to vector<8x1xf32>
      %287 = arith.addf %283, %286 : vector<8x1xf32>
      %288 = math.rsqrt %287 : vector<8x1xf32>
      %289 = vector.broadcast %288 : vector<8x1xf32> to vector<8x128xf32>
      %290 = arith.mulf %285, %289 : vector<8x128xf32>
      %291 = vector.broadcast %271 : vector<1x128xf32> to vector<8x128xf32>
      %292 = arith.mulf %290, %291 : vector<8x128xf32>
      %293 = vector.broadcast %272 : vector<1x128xf32> to vector<8x128xf32>
      %294 = arith.addf %292, %293 : vector<8x128xf32>
      %c0_169 = arith.constant 0 : index
      %c0_170 = arith.constant 0 : index
      %295 = vector.load %arg25[%c0_169, %c0_170] : memref<8x128xf32, #tpu.memory_space<vmem>>, vector<8x128xf32>
      tpu.vector_store %arg25[%c0_169, %c0_170], %294 {strides = array<i32>} : memref<8x128xf32, #tpu.memory_space<vmem>>, vector<8x128xf32>,
    } else {
    }
    %c0 = arith.constant 0 : index
    %c0_1 = arith.constant 0 : index
    %3 = vector.load %arg25[%c0, %c0_1] : memref<8x128xf32, #tpu.memory_space<vmem>>, vector<8x128xf32>
    %4 = arith.truncf %3 : vector<8x128xf32> to vector<8x128xbf16>
    %c0_2 = arith.constant 0 : index
    %c0_3 = arith.constant 0 : index
    %c0_4 = arith.constant 0 : index
    %5 = vector.load %arg10[%c0_2, %c0_3, %c0_4] : memref<1x128x384xbf16, #tpu.memory_space<vmem>>, vector<1x128x384xbf16>
    %6 = vector.shape_cast %5 : vector<1x128x384xbf16> to vector<128x384xbf16>
    %cst = arith.constant dense<0.000000e+00> : vector<8x384xf32>
    %7 = tpu.matmul %4, %6, %cst {dimension_numbers = #tpu.dot_dimension_numbers<[1], [0], [0], [1], [0, 0, 1, 1], [], []>} : vector<8x128xbf16>, vector<128x384xbf16>, vector<8x384xf32> -> vector<8x384xf32>
    %c0_5 = arith.constant 0 : index
    %c0_6 = arith.constant 0 : index
    %c0_7 = arith.constant 0 : index
    %8 = vector.load %arg11[%c0_5, %c0_6, %c0_7] : memref<1x1x384xf32, #tpu.memory_space<vmem>>, vector<1x1x384xf32>
    %9 = vector.shape_cast %8 : vector<1x1x384xf32> to vector<1x384xf32>
    %10 = vector.broadcast %9 : vector<1x384xf32> to vector<8x384xf32>
    %11 = arith.addf %7, %10 : vector<8x384xf32>
    %12 = tpu.iota {dimensions = array<i32: 0>} : vector<8x8xi32>
    %13 = tpu.iota {dimensions = array<i32: 1>} : vector<8x8xi32>
    %14 = arith.cmpi sle, %13, %12 : vector<8x8xi32>
    %15 = vector.extract_strided_slice %11 {offsets = [0, 0], sizes = [8, 32], strides = [1, 1]} : vector<8x384xf32> to vector<8x32xf32>
    %16 = vector.extract_strided_slice %11 {offsets = [0, 128], sizes = [8, 32], strides = [1, 1]} : vector<8x384xf32> to vector<8x32xf32>
    %cst_8 = arith.constant dense<0.000000e+00> : vector<8x8xf32>
    %17 = tpu.matmul %15, %16, %cst_8 {dimension_numbers = #tpu.dot_dimension_numbers<[1], [1], [0], [0], [0, 0, 1, 0], [], []>} : vector<8x32xf32>, vector<8x32xf32>, vector<8x8xf32> -> vector<8x8xf32>
    %18 = vector.extract_strided_slice %11 {offsets = [0, 32], sizes = [8, 32], strides = [1, 1]} : vector<8x384xf32> to vector<8x32xf32>
    %19 = vector.extract_strided_slice %11 {offsets = [0, 160], sizes = [8, 32], strides = [1, 1]} : vector<8x384xf32> to vector<8x32xf32>
    %cst_9 = arith.constant dense<0.000000e+00> : vector<8x8xf32>
    %20 = tpu.matmul %18, %19, %cst_9 {dimension_numbers = #tpu.dot_dimension_numbers<[1], [1], [0], [0], [0, 0, 1, 0], [], []>} : vector<8x32xf32>, vector<8x32xf32>, vector<8x8xf32> -> vector<8x8xf32>
    %21 = vector.extract_strided_slice %11 {offsets = [0, 64], sizes = [8, 32], strides = [1, 1]} : vector<8x384xf32> to vector<8x32xf32>
    %22 = vector.extract_strided_slice %11 {offsets = [0, 192], sizes = [8, 32], strides = [1, 1]} : vector<8x384xf32> to vector<8x32xf32>
    %cst_10 = arith.constant dense<0.000000e+00> : vector<8x8xf32>
    %23 = tpu.matmul %21, %22, %cst_10 {dimension_numbers = #tpu.dot_dimension_numbers<[1], [1], [0], [0], [0, 0, 1, 0], [], []>} : vector<8x32xf32>, vector<8x32xf32>, vector<8x8xf32> -> vector<8x8xf32>
    %24 = vector.extract_strided_slice %11 {offsets = [0, 96], sizes = [8, 32], strides = [1, 1]} : vector<8x384xf32> to vector<8x32xf32>
    %25 = vector.extract_strided_slice %11 {offsets = [0, 224], sizes = [8, 32], strides = [1, 1]} : vector<8x384xf32> to vector<8x32xf32>
    %cst_11 = arith.constant dense<0.000000e+00> : vector<8x8xf32>
    %26 = tpu.matmul %24, %25, %cst_11 {dimension_numbers = #tpu.dot_dimension_numbers<[1], [1], [0], [0], [0, 0, 1, 0], [], []>} : vector<8x32xf32>, vector<8x32xf32>, vector<8x8xf32> -> vector<8x8xf32>
    %27 = vector.shape_cast %17 : vector<8x8xf32> to vector<1x8x8xf32>
    %28 = vector.shape_cast %20 : vector<8x8xf32> to vector<1x8x8xf32>
    %29 = vector.shape_cast %23 : vector<8x8xf32> to vector<1x8x8xf32>
    %30 = vector.shape_cast %26 : vector<8x8xf32> to vector<1x8x8xf32>
    %31 = tpu.concatenate %27, %28, %29, %30 in 0 : vector<1x8x8xf32>, vector<1x8x8xf32>, vector<1x8x8xf32>, vector<1x8x8xf32> -> vector<4x8x8xf32>
    %cst_12 = arith.constant -3.40282347E+38 : f32
    %32 = vector.shape_cast %14 : vector<8x8xi1> to vector<1x8x8xi1>
    %33 = vector.broadcast %32 : vector<1x8x8xi1> to vector<4x8x8xi1>
    %34 = vector.broadcast %cst_12 : f32 to vector<4x8x8xf32>
    %35 = arith.select %33, %31, %34 : vector<4x8x8xi1>, vector<4x8x8xf32>
    %cst_13 = arith.constant dense<0xFF800000> : vector<4x8xf32>
    %36 = vector.multi_reduction <maximumf>, %35, %cst_13 [2] : vector<4x8x8xf32> to vector<4x8xf32>
    %37 = vector.shape_cast %36 : vector<4x8xf32> to vector<4x8x1xf32>
    %38 = vector.broadcast %37 : vector<4x8x1xf32> to vector<4x8x8xf32>
    %39 = arith.subf %35, %38 : vector<4x8x8xf32>
    %40 = math.exp %39 : vector<4x8x8xf32>
    %cst_14 = arith.constant dense<0.000000e+00> : vector<4x8xf32>
    %41 = vector.multi_reduction <add>, %40, %cst_14 [2] : vector<4x8x8xf32> to vector<4x8xf32>
    %42 = vector.shape_cast %41 : vector<4x8xf32> to vector<4x8x1xf32>
    %43 = tpu.reciprocal %42 {approx = true} : vector<4x8x1xf32> -> vector<4x8x1xf32>
    %44 = vector.broadcast %43 : vector<4x8x1xf32> to vector<4x8x8xf32>
    %45 = arith.mulf %40, %44 : vector<4x8x8xf32>
    %46 = vector.extract_strided_slice %11 {offsets = [0, 256], sizes = [8, 32], strides = [1, 1]} : vector<8x384xf32> to vector<8x32xf32>
    %47 = vector.extract_strided_slice %45 {offsets = [0, 0, 0], sizes = [1, 8, 8], strides = [1, 1, 1]} : vector<4x8x8xf32> to vector<1x8x8xf32>
    %48 = vector.shape_cast %47 : vector<1x8x8xf32> to vector<8x8xf32>
    %cst_15 = arith.constant dense<0.000000e+00> : vector<8x32xf32>
    %49 = tpu.matmul %48, %46, %cst_15 {dimension_numbers = #tpu.dot_dimension_numbers<[1], [0], [0], [1], [0, 0, 1, 1], [], []>} : vector<8x8xf32>, vector<8x32xf32>, vector<8x32xf32> -> vector<8x32xf32>
    %50 = vector.extract_strided_slice %11 {offsets = [0, 288], sizes = [8, 32], strides = [1, 1]} : vector<8x384xf32> to vector<8x32xf32>
    %51 = vector.extract_strided_slice %45 {offsets = [1, 0, 0], sizes = [1, 8, 8], strides = [1, 1, 1]} : vector<4x8x8xf32> to vector<1x8x8xf32>
    %52 = vector.shape_cast %51 : vector<1x8x8xf32> to vector<8x8xf32>
    %cst_16 = arith.constant dense<0.000000e+00> : vector<8x32xf32>
    %53 = tpu.matmul %52, %50, %cst_16 {dimension_numbers = #tpu.dot_dimension_numbers<[1], [0], [0], [1], [0, 0, 1, 1], [], []>} : vector<8x8xf32>, vector<8x32xf32>, vector<8x32xf32> -> vector<8x32xf32>
    %54 = vector.extract_strided_slice %11 {offsets = [0, 320], sizes = [8, 32], strides = [1, 1]} : vector<8x384xf32> to vector<8x32xf32>
    %55 = vector.extract_strided_slice %45 {offsets = [2, 0, 0], sizes = [1, 8, 8], strides = [1, 1, 1]} : vector<4x8x8xf32> to vector<1x8x8xf32>
    %56 = vector.shape_cast %55 : vector<1x8x8xf32> to vector<8x8xf32>
    %cst_17 = arith.constant dense<0.000000e+00> : vector<8x32xf32>
    %57 = tpu.matmul %56, %54, %cst_17 {dimension_numbers = #tpu.dot_dimension_numbers<[1], [0], [0], [1], [0, 0, 1, 1], [], []>} : vector<8x8xf32>, vector<8x32xf32>, vector<8x32xf32> -> vector<8x32xf32>
    %58 = vector.extract_strided_slice %11 {offsets = [0, 352], sizes = [8, 32], strides = [1, 1]} : vector<8x384xf32> to vector<8x32xf32>
    %59 = vector.extract_strided_slice %45 {offsets = [3, 0, 0], sizes = [1, 8, 8], strides = [1, 1, 1]} : vector<4x8x8xf32> to vector<1x8x8xf32>
    %60 = vector.shape_cast %59 : vector<1x8x8xf32> to vector<8x8xf32>
    %cst_18 = arith.constant dense<0.000000e+00> : vector<8x32xf32>
    %61 = tpu.matmul %60, %58, %cst_18 {dimension_numbers = #tpu.dot_dimension_numbers<[1], [0], [0], [1], [0, 0, 1, 1], [], []>} : vector<8x8xf32>, vector<8x32xf32>, vector<8x32xf32> -> vector<8x32xf32>
    %62 = tpu.concatenate %49, %53, %57, %61 in 1 : vector<8x32xf32>, vector<8x32xf32>, vector<8x32xf32>, vector<8x32xf32> -> vector<8x128xf32>
    %63 = arith.truncf %62 : vector<8x128xf32> to vector<8x128xbf16>
    %c0_19 = arith.constant 0 : index
    %c0_20 = arith.constant 0 : index
    %c0_21 = arith.constant 0 : index
    %64 = vector.load %arg12[%c0_19, %c0_20, %c0_21] : memref<1x128x128xbf16, #tpu.memory_space<vmem>>, vector<1x128x128xbf16>
    %65 = vector.shape_cast %64 : vector<1x128x128xbf16> to vector<128x128xbf16>
    %cst_22 = arith.constant dense<0.000000e+00> : vector<8x128xf32>
    %66 = tpu.matmul %63, %65, %cst_22 {dimension_numbers = #tpu.dot_dimension_numbers<[1], [0], [0], [1], [0, 0, 1, 1], [], []>} : vector<8x128xbf16>, vector<128x128xbf16>, vector<8x128xf32> -> vector<8x128xf32>
    %c0_23 = arith.constant 0 : index
    %c0_24 = arith.constant 0 : index
    %c0_25 = arith.constant 0 : index
    %67 = vector.load %arg13[%c0_23, %c0_24, %c0_25] : memref<1x1x128xf32, #tpu.memory_space<vmem>>, vector<1x1x128xf32>
    %68 = vector.shape_cast %67 : vector<1x1x128xf32> to vector<1x128xf32>
    %69 = vector.broadcast %68 : vector<1x128xf32> to vector<8x128xf32>
    %70 = arith.addf %66, %69 : vector<8x128xf32>
    %71 = arith.addf %3, %70 : vector<8x128xf32>
    %c0_26 = arith.constant 0 : index
    %c0_27 = arith.constant 0 : index
    %c0_28 = arith.constant 0 : index
    %72 = vector.load %arg14[%c0_26, %c0_27, %c0_28] : memref<1x1x128xf32, #tpu.memory_space<vmem>>, vector<1x1x128xf32>
    %73 = vector.shape_cast %72 : vector<1x1x128xf32> to vector<1x128xf32>
    %c0_29 = arith.constant 0 : index
    %c0_30 = arith.constant 0 : index
    %c0_31 = arith.constant 0 : index
    %74 = vector.load %arg15[%c0_29, %c0_30, %c0_31] : memref<1x1x128xf32, #tpu.memory_space<vmem>>, vector<1x1x128xf32>
    %75 = vector.shape_cast %74 : vector<1x1x128xf32> to vector<1x128xf32>
    %cst_32 = arith.constant dense<0.000000e+00> : vector<8xf32>
    %76 = vector.multi_reduction <add>, %71, %cst_32 [1] : vector<8x128xf32> to vector<8xf32>
    %77 = vector.shape_cast %76 : vector<8xf32> to vector<8x1xf32>
    %cst_33 = arith.constant 1.280000e+02 : f32
    %78 = vector.broadcast %cst_33 : f32 to vector<8x1xf32>
    %79 = arith.divf %77, %78 : vector<8x1xf32>
    %80 = vector.broadcast %79 : vector<8x1xf32> to vector<8x128xf32>
    %81 = arith.subf %71, %80 : vector<8x128xf32>
    %82 = arith.mulf %81, %81 : vector<8x128xf32>
    %cst_34 = arith.constant dense<0.000000e+00> : vector<8xf32>
    %83 = vector.multi_reduction <add>, %82, %cst_34 [1] : vector<8x128xf32> to vector<8xf32>
    %84 = vector.shape_cast %83 : vector<8xf32> to vector<8x1xf32>
    %cst_35 = arith.constant 1.280000e+02 : f32
    %85 = vector.broadcast %cst_35 : f32 to vector<8x1xf32>
    %86 = arith.divf %84, %85 : vector<8x1xf32>
    %87 = vector.broadcast %79 : vector<8x1xf32> to vector<8x128xf32>
    %88 = arith.subf %71, %87 : vector<8x128xf32>
    %cst_36 = arith.constant 9.99999996E-13 : f32
    %89 = vector.broadcast %cst_36 : f32 to vector<8x1xf32>
    %90 = arith.addf %86, %89 : vector<8x1xf32>
    %91 = math.rsqrt %90 : vector<8x1xf32>
    %92 = vector.broadcast %91 : vector<8x1xf32> to vector<8x128xf32>
    %93 = arith.mulf %88, %92 : vector<8x128xf32>
    %94 = vector.broadcast %73 : vector<1x128xf32> to vector<8x128xf32>
    %95 = arith.mulf %93, %94 : vector<8x128xf32>
    %96 = vector.broadcast %75 : vector<1x128xf32> to vector<8x128xf32>
    %97 = arith.addf %95, %96 : vector<8x128xf32>
    %98 = arith.truncf %97 : vector<8x128xf32> to vector<8x128xbf16>
    %c0_37 = arith.constant 0 : index
    %c0_38 = arith.constant 0 : index
    %c0_39 = arith.constant 0 : index
    %99 = vector.load %arg16[%c0_37, %c0_38, %c0_39] : memref<1x128x256xbf16, #tpu.memory_space<vmem>>, vector<1x128x256xbf16>
    %100 = vector.shape_cast %99 : vector<1x128x256xbf16> to vector<128x256xbf16>
    %cst_40 = arith.constant dense<0.000000e+00> : vector<8x256xf32>
    %101 = tpu.matmul %98, %100, %cst_40 {dimension_numbers = #tpu.dot_dimension_numbers<[1], [0], [0], [1], [0, 0, 1, 1], [], []>} : vector<8x128xbf16>, vector<128x256xbf16>, vector<8x256xf32> -> vector<8x256xf32>
    %c0_41 = arith.constant 0 : index
    %c0_42 = arith.constant 0 : index
    %c0_43 = arith.constant 0 : index
    %102 = vector.load %arg17[%c0_41, %c0_42, %c0_43] : memref<1x1x256xf32, #tpu.memory_space<vmem>>, vector<1x1x256xf32>
    %103 = vector.shape_cast %102 : vector<1x1x256xf32> to vector<1x256xf32>
    %104 = vector.broadcast %103 : vector<1x256xf32> to vector<8x256xf32>
    %105 = arith.addf %101, %104 : vector<8x256xf32>
    %106 = arith.mulf %105, %105 : vector<8x256xf32>
    %107 = arith.mulf %105, %106 : vector<8x256xf32>
    %cst_44 = arith.constant 4.471500e-02 : f32
    %108 = vector.broadcast %cst_44 : f32 to vector<8x256xf32>
    %109 = arith.mulf %108, %107 : vector<8x256xf32>
    %110 = arith.addf %105, %109 : vector<8x256xf32>
    %cst_45 = arith.constant 0.797884583 : f32
    %111 = vector.broadcast %cst_45 : f32 to vector<8x256xf32>
    %112 = arith.mulf %111, %110 : vector<8x256xf32>
    %113 = math.tanh %112 : vector<8x256xf32>
    %cst_46 = arith.constant 1.000000e+00 : f32
    %114 = vector.broadcast %cst_46 : f32 to vector<8x256xf32>
    %115 = arith.addf %114, %113 : vector<8x256xf32>
    %cst_47 = arith.constant 5.000000e-01 : f32
    %116 = vector.broadcast %cst_47 : f32 to vector<8x256xf32>
    %117 = arith.mulf %116, %115 : vector<8x256xf32>
    %118 = arith.mulf %105, %117 : vector<8x256xf32>
    %119 = arith.truncf %118 : vector<8x256xf32> to vector<8x256xbf16>
    %c0_48 = arith.constant 0 : index
    %c0_49 = arith.constant 0 : index
    %c0_50 = arith.constant 0 : index
    %120 = vector.load %arg18[%c0_48, %c0_49, %c0_50] : memref<1x256x128xbf16, #tpu.memory_space<vmem>>, vector<1x256x128xbf16>
    %121 = vector.shape_cast %120 : vector<1x256x128xbf16> to vector<256x128xbf16>
    %cst_51 = arith.constant dense<0.000000e+00> : vector<8x128xf32>
    %122 = tpu.matmul %119, %121, %cst_51 {dimension_numbers = #tpu.dot_dimension_numbers<[1], [0], [0], [1], [0, 0, 1, 1], [], []>} : vector<8x256xbf16>, vector<256x128xbf16>, vector<8x128xf32> -> vector<8x128xf32>
    %c0_52 = arith.constant 0 : index
    %c0_53 = arith.constant 0 : index
    %c0_54 = arith.constant 0 : index
    %123 = vector.load %arg19[%c0_52, %c0_53, %c0_54] : memref<1x1x128xf32, #tpu.memory_space<vmem>>, vector<1x1x128xf32>
    %124 = vector.shape_cast %123 : vector<1x1x128xf32> to vector<1x128xf32>
    %125 = vector.broadcast %124 : vector<1x128xf32> to vector<8x128xf32>
    %126 = arith.addf %122, %125 : vector<8x128xf32>
    %127 = arith.addf %97, %126 : vector<8x128xf32>
    %c0_55 = arith.constant 0 : index
    %c0_56 = arith.constant 0 : index
    %c0_57 = arith.constant 0 : index
    %128 = vector.load %arg20[%c0_55, %c0_56, %c0_57] : memref<1x1x128xf32, #tpu.memory_space<vmem>>, vector<1x1x128xf32>
    %129 = vector.shape_cast %128 : vector<1x1x128xf32> to vector<1x128xf32>
    %c0_58 = arith.constant 0 : index
    %c0_59 = arith.constant 0 : index
    %c0_60 = arith.constant 0 : index
    %130 = vector.load %arg21[%c0_58, %c0_59, %c0_60] : memref<1x1x128xf32, #tpu.memory_space<vmem>>, vector<1x1x128xf32>
    %131 = vector.shape_cast %130 : vector<1x1x128xf32> to vector<1x128xf32>
    %cst_61 = arith.constant dense<0.000000e+00> : vector<8xf32>
    %132 = vector.multi_reduction <add>, %127, %cst_61 [1] : vector<8x128xf32> to vector<8xf32>
    %133 = vector.shape_cast %132 : vector<8xf32> to vector<8x1xf32>
    %cst_62 = arith.constant 1.280000e+02 : f32
    %134 = vector.broadcast %cst_62 : f32 to vector<8x1xf32>
    %135 = arith.divf %133, %134 : vector<8x1xf32>
    %136 = vector.broadcast %135 : vector<8x1xf32> to vector<8x128xf32>
    %137 = arith.subf %127, %136 : vector<8x128xf32>
    %138 = arith.mulf %137, %137 : vector<8x128xf32>
    %cst_63 = arith.constant dense<0.000000e+00> : vector<8xf32>
    %139 = vector.multi_reduction <add>, %138, %cst_63 [1] : vector<8x128xf32> to vector<8xf32>
    %140 = vector.shape_cast %139 : vector<8xf32> to vector<8x1xf32>
    %cst_64 = arith.constant 1.280000e+02 : f32
    %141 = vector.broadcast %cst_64 : f32 to vector<8x1xf32>
    %142 = arith.divf %140, %141 : vector<8x1xf32>
    %143 = vector.broadcast %135 : vector<8x1xf32> to vector<8x128xf32>
    %144 = arith.subf %127, %143 : vector<8x128xf32>
    %cst_65 = arith.constant 9.99999996E-13 : f32
    %145 = vector.broadcast %cst_65 : f32 to vector<8x1xf32>
    %146 = arith.addf %142, %145 : vector<8x1xf32>
    %147 = math.rsqrt %146 : vector<8x1xf32>
    %148 = vector.broadcast %147 : vector<8x1xf32> to vector<8x128xf32>
    %149 = arith.mulf %144, %148 : vector<8x128xf32>
    %150 = vector.broadcast %129 : vector<1x128xf32> to vector<8x128xf32>
    %151 = arith.mulf %149, %150 : vector<8x128xf32>
    %152 = vector.broadcast %131 : vector<1x128xf32> to vector<8x128xf32>
    %153 = arith.addf %151, %152 : vector<8x128xf32>
    %c0_66 = arith.constant 0 : index
    %c0_67 = arith.constant 0 : index
    %154 = vector.load %arg25[%c0_66, %c0_67] : memref<8x128xf32, #tpu.memory_space<vmem>>, vector<8x128xf32>
    tpu.vector_store %arg25[%c0_66, %c0_67], %153 {strides = array<i32>} : memref<8x128xf32, #tpu.memory_space<vmem>>, vector<8x128xf32>,
    %c1_i32 = arith.constant 1 : i32
    %155 = arith.cmpi eq, %arg0, %c1_i32 : i32
    %156 = arith.extui %155 : i1 to i32
    %c0_i32_68 = arith.constant 0 : i32
    %157 = arith.cmpi ne, %156, %c0_i32_68 : i32
    scf.if %157 {
      %158 = arith.truncf %153 : vector<8x128xf32> to vector<8x128xbf16>
      %c0_i32_69 = arith.constant 0 : i32
      %c0_i32_70 = arith.constant 0 : i32
      %c0_i32_71 = arith.constant 0 : i32
      %c0_i32_72 = arith.constant 0 : i32
      %c0_i32_73 = arith.constant 0 : i32
      %159 = tpu.memref_slice %arg22[%c0_i32_69, %c0_i32_72, %c0_i32_73] : memref<8x128x256xbf16, #tpu.memory_space<any>> -> memref<1x128x256xbf16, #tpu.memory_space<any>>
      %160 = tpu.memref_squeeze %159 : memref<1x128x256xbf16, #tpu.memory_space<any>> -> memref<128x256xbf16, #tpu.memory_space<any>>
      %c0_i32_74 = arith.constant 0 : i32
      %c0_i32_75 = arith.constant 0 : i32
      %161 = tpu.memref_slice %arg28[%c0_i32_70, %c0_i32_74, %c0_i32_75] : memref<2x128x256xbf16, #tpu.memory_space<vmem>> -> memref<1x128x256xbf16, #tpu.memory_space<vmem>>
      %162 = tpu.memref_squeeze %161 : memref<1x128x256xbf16, #tpu.memory_space<vmem>> -> memref<128x256xbf16, #tpu.memory_space<vmem>>
      %163 = tpu.memref_slice %arg29[%c0_i32_71] : memref<2x!tpu.dma_semaphore, #tpu.memory_space<semaphore_mem>> -> memref<1x!tpu.dma_semaphore, #tpu.memory_space<semaphore_mem>>
      %164 = tpu.memref_squeeze %163 : memref<1x!tpu.dma_semaphore, #tpu.memory_space<semaphore_mem>> -> memref<!tpu.dma_semaphore, #tpu.memory_space<semaphore_mem>>
      tpu.wait_dma2 semaphore(%164 : memref<!tpu.dma_semaphore, #tpu.memory_space<semaphore_mem>>) src(%160 : memref<128x256xbf16, #tpu.memory_space<any>>) dst(%162 : memref<128x256xbf16, #tpu.memory_space<vmem>>)
      %c1_i32_76 = arith.constant 1 : i32
      %c1_i32_77 = arith.constant 1 : i32
      %c1_i32_78 = arith.constant 1 : i32
      %c0_i32_79 = arith.constant 0 : i32
      %c0_i32_80 = arith.constant 0 : i32
      %165 = tpu.memref_slice %arg22[%c1_i32_76, %c0_i32_79, %c0_i32_80] : memref<8x128x256xbf16, #tpu.memory_space<any>> -> memref<1x128x256xbf16, #tpu.memory_space<any>>
      %166 = tpu.memref_squeeze %165 : memref<1x128x256xbf16, #tpu.memory_space<any>> -> memref<128x256xbf16, #tpu.memory_space<any>>
      %c0_i32_81 = arith.constant 0 : i32
      %c0_i32_82 = arith.constant 0 : i32
      %167 = tpu.memref_slice %arg28[%c1_i32_77, %c0_i32_81, %c0_i32_82] : memref<2x128x256xbf16, #tpu.memory_space<vmem>> -> memref<1x128x256xbf16, #tpu.memory_space<vmem>>
      %168 = tpu.memref_squeeze %167 : memref<1x128x256xbf16, #tpu.memory_space<vmem>> -> memref<128x256xbf16, #tpu.memory_space<vmem>>
      %169 = tpu.memref_slice %arg29[%c1_i32_78] : memref<2x!tpu.dma_semaphore, #tpu.memory_space<semaphore_mem>> -> memref<1x!tpu.dma_semaphore, #tpu.memory_space<semaphore_mem>>
      %170 = tpu.memref_squeeze %169 : memref<1x!tpu.dma_semaphore, #tpu.memory_space<semaphore_mem>> -> memref<!tpu.dma_semaphore, #tpu.memory_space<semaphore_mem>>
      tpu.enqueue_dma source(%166 : memref<128x256xbf16, #tpu.memory_space<any>>) target(%168 : memref<128x256xbf16, #tpu.memory_space<vmem>>) target_semaphore(%170 : memref<!tpu.dma_semaphore, #tpu.memory_space<semaphore_mem>>)
      %171 = vector.extract_strided_slice %158 {offsets = [0, 0], sizes = [1, 128], strides = [1, 1]} : vector<8x128xbf16> to vector<1x128xbf16>
      %c0_83 = arith.constant 0 : index
      %c0_84 = arith.constant 0 : index
      %c0_85 = arith.constant 0 : index
      %172 = vector.load %arg28[%c0_83, %c0_84, %c0_85] : memref<2x128x256xbf16, #tpu.memory_space<vmem>>, vector<1x128x256xbf16>
      %173 = vector.shape_cast %172 : vector<1x128x256xbf16> to vector<128x256xbf16>
      %cst_86 = arith.constant dense<0.000000e+00> : vector<1x256xf32>
      %174 = tpu.matmul %171, %173, %cst_86 {dimension_numbers = #tpu.dot_dimension_numbers<[1], [0], [0], [1], [0, 0, 1, 1], [], []>} : vector<1x128xbf16>, vector<128x256xbf16>, vector<1x256xf32> -> vector<1x256xf32>
      %c1_i32_87 = arith.constant 1 : i32
      %c1_i32_88 = arith.constant 1 : i32
      %c1_i32_89 = arith.constant 1 : i32
      %c0_i32_90 = arith.constant 0 : i32
      %c0_i32_91 = arith.constant 0 : i32
      %175 = tpu.memref_slice %arg22[%c1_i32_87, %c0_i32_90, %c0_i32_91] : memref<8x128x256xbf16, #tpu.memory_space<any>> -> memref<1x128x256xbf16, #tpu.memory_space<any>>
      %176 = tpu.memref_squeeze %175 : memref<1x128x256xbf16, #tpu.memory_space<any>> -> memref<128x256xbf16, #tpu.memory_space<any>>
      %c0_i32_92 = arith.constant 0 : i32
      %c0_i32_93 = arith.constant 0 : i32
      %177 = tpu.memref_slice %arg28[%c1_i32_88, %c0_i32_92, %c0_i32_93] : memref<2x128x256xbf16, #tpu.memory_space<vmem>> -> memref<1x128x256xbf16, #tpu.memory_space<vmem>>
      %178 = tpu.memref_squeeze %177 : memref<1x128x256xbf16, #tpu.memory_space<vmem>> -> memref<128x256xbf16, #tpu.memory_space<vmem>>
      %179 = tpu.memref_slice %arg29[%c1_i32_89] : memref<2x!tpu.dma_semaphore, #tpu.memory_space<semaphore_mem>> -> memref<1x!tpu.dma_semaphore, #tpu.memory_space<semaphore_mem>>
      %180 = tpu.memref_squeeze %179 : memref<1x!tpu.dma_semaphore, #tpu.memory_space<semaphore_mem>> -> memref<!tpu.dma_semaphore, #tpu.memory_space<semaphore_mem>>
      tpu.wait_dma2 semaphore(%180 : memref<!tpu.dma_semaphore, #tpu.memory_space<semaphore_mem>>) src(%176 : memref<128x256xbf16, #tpu.memory_space<any>>) dst(%178 : memref<128x256xbf16, #tpu.memory_space<vmem>>)
      %c2_i32 = arith.constant 2 : i32
      %c0_i32_94 = arith.constant 0 : i32
      %c0_i32_95 = arith.constant 0 : i32
      %c0_i32_96 = arith.constant 0 : i32
      %c0_i32_97 = arith.constant 0 : i32
      %181 = tpu.memref_slice %arg22[%c2_i32, %c0_i32_96, %c0_i32_97] : memref<8x128x256xbf16, #tpu.memory_space<any>> -> memref<1x128x256xbf16, #tpu.memory_space<any>>
      %182 = tpu.memref_squeeze %181 : memref<1x128x256xbf16, #tpu.memory_space<any>> -> memref<128x256xbf16, #tpu.memory_space<any>>
      %c0_i32_98 = arith.constant 0 : i32
      %c0_i32_99 = arith.constant 0 : i32
      %183 = tpu.memref_slice %arg28[%c0_i32_94, %c0_i32_98, %c0_i32_99] : memref<2x128x256xbf16, #tpu.memory_space<vmem>> -> memref<1x128x256xbf16, #tpu.memory_space<vmem>>
      %184 = tpu.memref_squeeze %183 : memref<1x128x256xbf16, #tpu.memory_space<vmem>> -> memref<128x256xbf16, #tpu.memory_space<vmem>>
      %185 = tpu.memref_slice %arg29[%c0_i32_95] : memref<2x!tpu.dma_semaphore, #tpu.memory_space<semaphore_mem>> -> memref<1x!tpu.dma_semaphore, #tpu.memory_space<semaphore_mem>>
      %186 = tpu.memref_squeeze %185 : memref<1x!tpu.dma_semaphore, #tpu.memory_space<semaphore_mem>> -> memref<!tpu.dma_semaphore, #tpu.memory_space<semaphore_mem>>
      tpu.enqueue_dma source(%182 : memref<128x256xbf16, #tpu.memory_space<any>>) target(%184 : memref<128x256xbf16, #tpu.memory_space<vmem>>) target_semaphore(%186 : memref<!tpu.dma_semaphore, #tpu.memory_space<semaphore_mem>>)
      %187 = vector.extract_strided_slice %158 {offsets = [1, 0], sizes = [1, 128], strides = [1, 1]} : vector<8x128xbf16> to vector<1x128xbf16>
      %c1 = arith.constant 1 : index
      %c0_100 = arith.constant 0 : index
      %c0_101 = arith.constant 0 : index
      %188 = vector.load %arg28[%c1, %c0_100, %c0_101] : memref<2x128x256xbf16, #tpu.memory_space<vmem>>, vector<1x128x256xbf16>
      %189 = vector.shape_cast %188 : vector<1x128x256xbf16> to vector<128x256xbf16>
      %cst_102 = arith.constant dense<0.000000e+00> : vector<1x256xf32>
      %190 = tpu.matmul %187, %189, %cst_102 {dimension_numbers = #tpu.dot_dimension_numbers<[1], [0], [0], [1], [0, 0, 1, 1], [], []>} : vector<1x128xbf16>, vector<128x256xbf16>, vector<1x256xf32> -> vector<1x256xf32>
      %c2_i32_103 = arith.constant 2 : i32
      %c0_i32_104 = arith.constant 0 : i32
      %c0_i32_105 = arith.constant 0 : i32
      %c0_i32_106 = arith.constant 0 : i32
      %c0_i32_107 = arith.constant 0 : i32
      %191 = tpu.memref_slice %arg22[%c2_i32_103, %c0_i32_106, %c0_i32_107] : memref<8x128x256xbf16, #tpu.memory_space<any>> -> memref<1x128x256xbf16, #tpu.memory_space<any>>
      %192 = tpu.memref_squeeze %191 : memref<1x128x256xbf16, #tpu.memory_space<any>> -> memref<128x256xbf16, #tpu.memory_space<any>>
      %c0_i32_108 = arith.constant 0 : i32
      %c0_i32_109 = arith.constant 0 : i32
      %193 = tpu.memref_slice %arg28[%c0_i32_104, %c0_i32_108, %c0_i32_109] : memref<2x128x256xbf16, #tpu.memory_space<vmem>> -> memref<1x128x256xbf16, #tpu.memory_space<vmem>>
      %194 = tpu.memref_squeeze %193 : memref<1x128x256xbf16, #tpu.memory_space<vmem>> -> memref<128x256xbf16, #tpu.memory_space<vmem>>
      %195 = tpu.memref_slice %arg29[%c0_i32_105] : memref<2x!tpu.dma_semaphore, #tpu.memory_space<semaphore_mem>> -> memref<1x!tpu.dma_semaphore, #tpu.memory_space<semaphore_mem>>
      %196 = tpu.memref_squeeze %195 : memref<1x!tpu.dma_semaphore, #tpu.memory_space<semaphore_mem>> -> memref<!tpu.dma_semaphore, #tpu.memory_space<semaphore_mem>>
      tpu.wait_dma2 semaphore(%196 : memref<!tpu.dma_semaphore, #tpu.memory_space<semaphore_mem>>) src(%192 : memref<128x256xbf16, #tpu.memory_space<any>>) dst(%194 : memref<128x256xbf16, #tpu.memory_space<vmem>>)
      %c3_i32 = arith.constant 3 : i32
      %c1_i32_110 = arith.constant 1 : i32
      %c1_i32_111 = arith.constant 1 : i32
      %c0_i32_112 = arith.constant 0 : i32
      %c0_i32_113 = arith.constant 0 : i32
      %197 = tpu.memref_slice %arg22[%c3_i32, %c0_i32_112, %c0_i32_113] : memref<8x128x256xbf16, #tpu.memory_space<any>> -> memref<1x128x256xbf16, #tpu.memory_space<any>>
      %198 = tpu.memref_squeeze %197 : memref<1x128x256xbf16, #tpu.memory_space<any>> -> memref<128x256xbf16, #tpu.memory_space<any>>
      %c0_i32_114 = arith.constant 0 : i32
      %c0_i32_115 = arith.constant 0 : i32
      %199 = tpu.memref_slice %arg28[%c1_i32_110, %c0_i32_114, %c0_i32_115] : memref<2x128x256xbf16, #tpu.memory_space<vmem>> -> memref<1x128x256xbf16, #tpu.memory_space<vmem>>
      %200 = tpu.memref_squeeze %199 : memref<1x128x256xbf16, #tpu.memory_space<vmem>> -> memref<128x256xbf16, #tpu.memory_space<vmem>>
      %201 = tpu.memref_slice %arg29[%c1_i32_111] : memref<2x!tpu.dma_semaphore, #tpu.memory_space<semaphore_mem>> -> memref<1x!tpu.dma_semaphore, #tpu.memory_space<semaphore_mem>>
      %202 = tpu.memref_squeeze %201 : memref<1x!tpu.dma_semaphore, #tpu.memory_space<semaphore_mem>> -> memref<!tpu.dma_semaphore, #tpu.memory_space<semaphore_mem>>
      tpu.enqueue_dma source(%198 : memref<128x256xbf16, #tpu.memory_space<any>>) target(%200 : memref<128x256xbf16, #tpu.memory_space<vmem>>) target_semaphore(%202 : memref<!tpu.dma_semaphore, #tpu.memory_space<semaphore_mem>>)
      %203 = vector.extract_strided_slice %158 {offsets = [2, 0], sizes = [1, 128], strides = [1, 1]} : vector<8x128xbf16> to vector<1x128xbf16>
      %c0_116 = arith.constant 0 : index
      %c0_117 = arith.constant 0 : index
      %c0_118 = arith.constant 0 : index
      %204 = vector.load %arg28[%c0_116, %c0_117, %c0_118] : memref<2x128x256xbf16, #tpu.memory_space<vmem>>, vector<1x128x256xbf16>
      %205 = vector.shape_cast %204 : vector<1x128x256xbf16> to vector<128x256xbf16>
      %cst_119 = arith.constant dense<0.000000e+00> : vector<1x256xf32>
      %206 = tpu.matmul %203, %205, %cst_119 {dimension_numbers = #tpu.dot_dimension_numbers<[1], [0], [0], [1], [0, 0, 1, 1], [], []>} : vector<1x128xbf16>, vector<128x256xbf16>, vector<1x256xf32> -> vector<1x256xf32>
      %c3_i32_120 = arith.constant 3 : i32
      %c1_i32_121 = arith.constant 1 : i32
      %c1_i32_122 = arith.constant 1 : i32
      %c0_i32_123 = arith.constant 0 : i32
      %c0_i32_124 = arith.constant 0 : i32
      %207 = tpu.memref_slice %arg22[%c3_i32_120, %c0_i32_123, %c0_i32_124] : memref<8x128x256xbf16, #tpu.memory_space<any>> -> memref<1x128x256xbf16, #tpu.memory_space<any>>
      %208 = tpu.memref_squeeze %207 : memref<1x128x256xbf16, #tpu.memory_space<any>> -> memref<128x256xbf16, #tpu.memory_space<any>>
      %c0_i32_125 = arith.constant 0 : i32
      %c0_i32_126 = arith.constant 0 : i32
      %209 = tpu.memref_slice %arg28[%c1_i32_121, %c0_i32_125, %c0_i32_126] : memref<2x128x256xbf16, #tpu.memory_space<vmem>> -> memref<1x128x256xbf16, #tpu.memory_space<vmem>>
      %210 = tpu.memref_squeeze %209 : memref<1x128x256xbf16, #tpu.memory_space<vmem>> -> memref<128x256xbf16, #tpu.memory_space<vmem>>
      %211 = tpu.memref_slice %arg29[%c1_i32_122] : memref<2x!tpu.dma_semaphore, #tpu.memory_space<semaphore_mem>> -> memref<1x!tpu.dma_semaphore, #tpu.memory_space<semaphore_mem>>
      %212 = tpu.memref_squeeze %211 : memref<1x!tpu.dma_semaphore, #tpu.memory_space<semaphore_mem>> -> memref<!tpu.dma_semaphore, #tpu.memory_space<semaphore_mem>>
      tpu.wait_dma2 semaphore(%212 : memref<!tpu.dma_semaphore, #tpu.memory_space<semaphore_mem>>) src(%208 : memref<128x256xbf16, #tpu.memory_space<any>>) dst(%210 : memref<128x256xbf16, #tpu.memory_space<vmem>>)
      %c4_i32 = arith.constant 4 : i32
      %c0_i32_127 = arith.constant 0 : i32
      %c0_i32_128 = arith.constant 0 : i32
      %c0_i32_129 = arith.constant 0 : i32
      %c0_i32_130 = arith.constant 0 : i32
      %213 = tpu.memref_slice %arg22[%c4_i32, %c0_i32_129, %c0_i32_130] : memref<8x128x256xbf16, #tpu.memory_space<any>> -> memref<1x128x256xbf16, #tpu.memory_space<any>>
      %214 = tpu.memref_squeeze %213 : memref<1x128x256xbf16, #tpu.memory_space<any>> -> memref<128x256xbf16, #tpu.memory_space<any>>
      %c0_i32_131 = arith.constant 0 : i32
      %c0_i32_132 = arith.constant 0 : i32
      %215 = tpu.memref_slice %arg28[%c0_i32_127, %c0_i32_131, %c0_i32_132] : memref<2x128x256xbf16, #tpu.memory_space<vmem>> -> memref<1x128x256xbf16, #tpu.memory_space<vmem>>
      %216 = tpu.memref_squeeze %215 : memref<1x128x256xbf16, #tpu.memory_space<vmem>> -> memref<128x256xbf16, #tpu.memory_space<vmem>>
      %217 = tpu.memref_slice %arg29[%c0_i32_128] : memref<2x!tpu.dma_semaphore, #tpu.memory_space<semaphore_mem>> -> memref<1x!tpu.dma_semaphore, #tpu.memory_space<semaphore_mem>>
      %218 = tpu.memref_squeeze %217 : memref<1x!tpu.dma_semaphore, #tpu.memory_space<semaphore_mem>> -> memref<!tpu.dma_semaphore, #tpu.memory_space<semaphore_mem>>
      tpu.enqueue_dma source(%214 : memref<128x256xbf16, #tpu.memory_space<any>>) target(%216 : memref<128x256xbf16, #tpu.memory_space<vmem>>) target_semaphore(%218 : memref<!tpu.dma_semaphore, #tpu.memory_space<semaphore_mem>>)
      %219 = vector.extract_strided_slice %158 {offsets = [3, 0], sizes = [1, 128], strides = [1, 1]} : vector<8x128xbf16> to vector<1x128xbf16>
      %c1_133 = arith.constant 1 : index
      %c0_134 = arith.constant 0 : index
      %c0_135 = arith.constant 0 : index
      %220 = vector.load %arg28[%c1_133, %c0_134, %c0_135] : memref<2x128x256xbf16, #tpu.memory_space<vmem>>, vector<1x128x256xbf16>
      %221 = vector.shape_cast %220 : vector<1x128x256xbf16> to vector<128x256xbf16>
      %cst_136 = arith.constant dense<0.000000e+00> : vector<1x256xf32>
      %222 = tpu.matmul %219, %221, %cst_136 {dimension_numbers = #tpu.dot_dimension_numbers<[1], [0], [0], [1], [0, 0, 1, 1], [], []>} : vector<1x128xbf16>, vector<128x256xbf16>, vector<1x256xf32> -> vector<1x256xf32>
      %c4_i32_137 = arith.constant 4 : i32
      %c0_i32_138 = arith.constant 0 : i32
      %c0_i32_139 = arith.constant 0 : i32
      %c0_i32_140 = arith.constant 0 : i32
      %c0_i32_141 = arith.constant 0 : i32
      %223 = tpu.memref_slice %arg22[%c4_i32_137, %c0_i32_140, %c0_i32_141] : memref<8x128x256xbf16, #tpu.memory_space<any>> -> memref<1x128x256xbf16, #tpu.memory_space<any>>
      %224 = tpu.memref_squeeze %223 : memref<1x128x256xbf16, #tpu.memory_space<any>> -> memref<128x256xbf16, #tpu.memory_space<any>>
      %c0_i32_142 = arith.constant 0 : i32
      %c0_i32_143 = arith.constant 0 : i32
      %225 = tpu.memref_slice %arg28[%c0_i32_138, %c0_i32_142, %c0_i32_143] : memref<2x128x256xbf16, #tpu.memory_space<vmem>> -> memref<1x128x256xbf16, #tpu.memory_space<vmem>>
      %226 = tpu.memref_squeeze %225 : memref<1x128x256xbf16, #tpu.memory_space<vmem>> -> memref<128x256xbf16, #tpu.memory_space<vmem>>
      %227 = tpu.memref_slice %arg29[%c0_i32_139] : memref<2x!tpu.dma_semaphore, #tpu.memory_space<semaphore_mem>> -> memref<1x!tpu.dma_semaphore, #tpu.memory_space<semaphore_mem>>
      %228 = tpu.memref_squeeze %227 : memref<1x!tpu.dma_semaphore, #tpu.memory_space<semaphore_mem>> -> memref<!tpu.dma_semaphore, #tpu.memory_space<semaphore_mem>>
      tpu.wait_dma2 semaphore(%228 : memref<!tpu.dma_semaphore, #tpu.memory_space<semaphore_mem>>) src(%224 : memref<128x256xbf16, #tpu.memory_space<any>>) dst(%226 : memref<128x256xbf16, #tpu.memory_space<vmem>>)
      %c5_i32 = arith.constant 5 : i32
      %c1_i32_144 = arith.constant 1 : i32
      %c1_i32_145 = arith.constant 1 : i32
      %c0_i32_146 = arith.constant 0 : i32
      %c0_i32_147 = arith.constant 0 : i32
      %229 = tpu.memref_slice %arg22[%c5_i32, %c0_i32_146, %c0_i32_147] : memref<8x128x256xbf16, #tpu.memory_space<any>> -> memref<1x128x256xbf16, #tpu.memory_space<any>>
      %230 = tpu.memref_squeeze %229 : memref<1x128x256xbf16, #tpu.memory_space<any>> -> memref<128x256xbf16, #tpu.memory_space<any>>
      %c0_i32_148 = arith.constant 0 : i32
      %c0_i32_149 = arith.constant 0 : i32
      %231 = tpu.memref_slice %arg28[%c1_i32_144, %c0_i32_148, %c0_i32_149] : memref<2x128x256xbf16, #tpu.memory_space<vmem>> -> memref<1x128x256xbf16, #tpu.memory_space<vmem>>
      %232 = tpu.memref_squeeze %231 : memref<1x128x256xbf16, #tpu.memory_space<vmem>> -> memref<128x256xbf16, #tpu.memory_space<vmem>>
      %233 = tpu.memref_slice %arg29[%c1_i32_145] : memref<2x!tpu.dma_semaphore, #tpu.memory_space<semaphore_mem>> -> memref<1x!tpu.dma_semaphore, #tpu.memory_space<semaphore_mem>>
      %234 = tpu.memref_squeeze %233 : memref<1x!tpu.dma_semaphore, #tpu.memory_space<semaphore_mem>> -> memref<!tpu.dma_semaphore, #tpu.memory_space<semaphore_mem>>
      tpu.enqueue_dma source(%230 : memref<128x256xbf16, #tpu.memory_space<any>>) target(%232 : memref<128x256xbf16, #tpu.memory_space<vmem>>) target_semaphore(%234 : memref<!tpu.dma_semaphore, #tpu.memory_space<semaphore_mem>>)
      %235 = vector.extract_strided_slice %158 {offsets = [4, 0], sizes = [1, 128], strides = [1, 1]} : vector<8x128xbf16> to vector<1x128xbf16>
      %c0_150 = arith.constant 0 : index
      %c0_151 = arith.constant 0 : index
      %c0_152 = arith.constant 0 : index
      %236 = vector.load %arg28[%c0_150, %c0_151, %c0_152] : memref<2x128x256xbf16, #tpu.memory_space<vmem>>, vector<1x128x256xbf16>
      %237 = vector.shape_cast %236 : vector<1x128x256xbf16> to vector<128x256xbf16>
      %cst_153 = arith.constant dense<0.000000e+00> : vector<1x256xf32>
      %238 = tpu.matmul %235, %237, %cst_153 {dimension_numbers = #tpu.dot_dimension_numbers<[1], [0], [0], [1], [0, 0, 1, 1], [], []>} : vector<1x128xbf16>, vector<128x256xbf16>, vector<1x256xf32> -> vector<1x256xf32>
      %c5_i32_154 = arith.constant 5 : i32
      %c1_i32_155 = arith.constant 1 : i32
      %c1_i32_156 = arith.constant 1 : i32
      %c0_i32_157 = arith.constant 0 : i32
      %c0_i32_158 = arith.constant 0 : i32
      %239 = tpu.memref_slice %arg22[%c5_i32_154, %c0_i32_157, %c0_i32_158] : memref<8x128x256xbf16, #tpu.memory_space<any>> -> memref<1x128x256xbf16, #tpu.memory_space<any>>
      %240 = tpu.memref_squeeze %239 : memref<1x128x256xbf16, #tpu.memory_space<any>> -> memref<128x256xbf16, #tpu.memory_space<any>>
      %c0_i32_159 = arith.constant 0 : i32
      %c0_i32_160 = arith.constant 0 : i32
      %241 = tpu.memref_slice %arg28[%c1_i32_155, %c0_i32_159, %c0_i32_160] : memref<2x128x256xbf16, #tpu.memory_space<vmem>> -> memref<1x128x256xbf16, #tpu.memory_space<vmem>>
      %242 = tpu.memref_squeeze %241 : memref<1x128x256xbf16, #tpu.memory_space<vmem>> -> memref<128x256xbf16, #tpu.memory_space<vmem>>
      %243 = tpu.memref_slice %arg29[%c1_i32_156] : memref<2x!tpu.dma_semaphore, #tpu.memory_space<semaphore_mem>> -> memref<1x!tpu.dma_semaphore, #tpu.memory_space<semaphore_mem>>
      %244 = tpu.memref_squeeze %243 : memref<1x!tpu.dma_semaphore, #tpu.memory_space<semaphore_mem>> -> memref<!tpu.dma_semaphore, #tpu.memory_space<semaphore_mem>>
      tpu.wait_dma2 semaphore(%244 : memref<!tpu.dma_semaphore, #tpu.memory_space<semaphore_mem>>) src(%240 : memref<128x256xbf16, #tpu.memory_space<any>>) dst(%242 : memref<128x256xbf16, #tpu.memory_space<vmem>>)
      %c6_i32 = arith.constant 6 : i32
      %c0_i32_161 = arith.constant 0 : i32
      %c0_i32_162 = arith.constant 0 : i32
      %c0_i32_163 = arith.constant 0 : i32
      %c0_i32_164 = arith.constant 0 : i32
      %245 = tpu.memref_slice %arg22[%c6_i32, %c0_i32_163, %c0_i32_164] : memref<8x128x256xbf16, #tpu.memory_space<any>> -> memref<1x128x256xbf16, #tpu.memory_space<any>>
      %246 = tpu.memref_squeeze %245 : memref<1x128x256xbf16, #tpu.memory_space<any>> -> memref<128x256xbf16, #tpu.memory_space<any>>
      %c0_i32_165 = arith.constant 0 : i32
      %c0_i32_166 = arith.constant 0 : i32
      %247 = tpu.memref_slice %arg28[%c0_i32_161, %c0_i32_165, %c0_i32_166] : memref<2x128x256xbf16, #tpu.memory_space<vmem>> -> memref<1x128x256xbf16, #tpu.memory_space<vmem>>
      %248 = tpu.memref_squeeze %247 : memref<1x128x256xbf16, #tpu.memory_space<vmem>> -> memref<128x256xbf16, #tpu.memory_space<vmem>>
      %249 = tpu.memref_slice %arg29[%c0_i32_162] : memref<2x!tpu.dma_semaphore, #tpu.memory_space<semaphore_mem>> -> memref<1x!tpu.dma_semaphore, #tpu.memory_space<semaphore_mem>>
      %250 = tpu.memref_squeeze %249 : memref<1x!tpu.dma_semaphore, #tpu.memory_space<semaphore_mem>> -> memref<!tpu.dma_semaphore, #tpu.memory_space<semaphore_mem>>
      tpu.enqueue_dma source(%246 : memref<128x256xbf16, #tpu.memory_space<any>>) target(%248 : memref<128x256xbf16, #tpu.memory_space<vmem>>) target_semaphore(%250 : memref<!tpu.dma_semaphore, #tpu.memory_space<semaphore_mem>>)
      %251 = vector.extract_strided_slice %158 {offsets = [5, 0], sizes = [1, 128], strides = [1, 1]} : vector<8x128xbf16> to vector<1x128xbf16>
      %c1_167 = arith.constant 1 : index
      %c0_168 = arith.constant 0 : index
      %c0_169 = arith.constant 0 : index
      %252 = vector.load %arg28[%c1_167, %c0_168, %c0_169] : memref<2x128x256xbf16, #tpu.memory_space<vmem>>, vector<1x128x256xbf16>
      %253 = vector.shape_cast %252 : vector<1x128x256xbf16> to vector<128x256xbf16>
      %cst_170 = arith.constant dense<0.000000e+00> : vector<1x256xf32>
      %254 = tpu.matmul %251, %253, %cst_170 {dimension_numbers = #tpu.dot_dimension_numbers<[1], [0], [0], [1], [0, 0, 1, 1], [], []>} : vector<1x128xbf16>, vector<128x256xbf16>, vector<1x256xf32> -> vector<1x256xf32>
      %c6_i32_171 = arith.constant 6 : i32
      %c0_i32_172 = arith.constant 0 : i32
      %c0_i32_173 = arith.constant 0 : i32
      %c0_i32_174 = arith.constant 0 : i32
      %c0_i32_175 = arith.constant 0 : i32
      %255 = tpu.memref_slice %arg22[%c6_i32_171, %c0_i32_174, %c0_i32_175] : memref<8x128x256xbf16, #tpu.memory_space<any>> -> memref<1x128x256xbf16, #tpu.memory_space<any>>
      %256 = tpu.memref_squeeze %255 : memref<1x128x256xbf16, #tpu.memory_space<any>> -> memref<128x256xbf16, #tpu.memory_space<any>>
      %c0_i32_176 = arith.constant 0 : i32
      %c0_i32_177 = arith.constant 0 : i32
      %257 = tpu.memref_slice %arg28[%c0_i32_172, %c0_i32_176, %c0_i32_177] : memref<2x128x256xbf16, #tpu.memory_space<vmem>> -> memref<1x128x256xbf16, #tpu.memory_space<vmem>>
      %258 = tpu.memref_squeeze %257 : memref<1x128x256xbf16, #tpu.memory_space<vmem>> -> memref<128x256xbf16, #tpu.memory_space<vmem>>
      %259 = tpu.memref_slice %arg29[%c0_i32_173] : memref<2x!tpu.dma_semaphore, #tpu.memory_space<semaphore_mem>> -> memref<1x!tpu.dma_semaphore, #tpu.memory_space<semaphore_mem>>
      %260 = tpu.memref_squeeze %259 : memref<1x!tpu.dma_semaphore, #tpu.memory_space<semaphore_mem>> -> memref<!tpu.dma_semaphore, #tpu.memory_space<semaphore_mem>>
      tpu.wait_dma2 semaphore(%260 : memref<!tpu.dma_semaphore, #tpu.memory_space<semaphore_mem>>) src(%256 : memref<128x256xbf16, #tpu.memory_space<any>>) dst(%258 : memref<128x256xbf16, #tpu.memory_space<vmem>>)
      %c7_i32 = arith.constant 7 : i32
      %c1_i32_178 = arith.constant 1 : i32
      %c1_i32_179 = arith.constant 1 : i32
      %c0_i32_180 = arith.constant 0 : i32
      %c0_i32_181 = arith.constant 0 : i32
      %261 = tpu.memref_slice %arg22[%c7_i32, %c0_i32_180, %c0_i32_181] : memref<8x128x256xbf16, #tpu.memory_space<any>> -> memref<1x128x256xbf16, #tpu.memory_space<any>>
      %262 = tpu.memref_squeeze %261 : memref<1x128x256xbf16, #tpu.memory_space<any>> -> memref<128x256xbf16, #tpu.memory_space<any>>
      %c0_i32_182 = arith.constant 0 : i32
      %c0_i32_183 = arith.constant 0 : i32
      %263 = tpu.memref_slice %arg28[%c1_i32_178, %c0_i32_182, %c0_i32_183] : memref<2x128x256xbf16, #tpu.memory_space<vmem>> -> memref<1x128x256xbf16, #tpu.memory_space<vmem>>
      %264 = tpu.memref_squeeze %263 : memref<1x128x256xbf16, #tpu.memory_space<vmem>> -> memref<128x256xbf16, #tpu.memory_space<vmem>>
      %265 = tpu.memref_slice %arg29[%c1_i32_179] : memref<2x!tpu.dma_semaphore, #tpu.memory_space<semaphore_mem>> -> memref<1x!tpu.dma_semaphore, #tpu.memory_space<semaphore_mem>>
      %266 = tpu.memref_squeeze %265 : memref<1x!tpu.dma_semaphore, #tpu.memory_space<semaphore_mem>> -> memref<!tpu.dma_semaphore, #tpu.memory_space<semaphore_mem>>
      tpu.enqueue_dma source(%262 : memref<128x256xbf16, #tpu.memory_space<any>>) target(%264 : memref<128x256xbf16, #tpu.memory_space<vmem>>) target_semaphore(%266 : memref<!tpu.dma_semaphore, #tpu.memory_space<semaphore_mem>>)
      %267 = vector.extract_strided_slice %158 {offsets = [6, 0], sizes = [1, 128], strides = [1, 1]} : vector<8x128xbf16> to vector<1x128xbf16>
      %c0_184 = arith.constant 0 : index
      %c0_185 = arith.constant 0 : index
      %c0_186 = arith.constant 0 : index
      %268 = vector.load %arg28[%c0_184, %c0_185, %c0_186] : memref<2x128x256xbf16, #tpu.memory_space<vmem>>, vector<1x128x256xbf16>
      %269 = vector.shape_cast %268 : vector<1x128x256xbf16> to vector<128x256xbf16>
      %cst_187 = arith.constant dense<0.000000e+00> : vector<1x256xf32>
      %270 = tpu.matmul %267, %269, %cst_187 {dimension_numbers = #tpu.dot_dimension_numbers<[1], [0], [0], [1], [0, 0, 1, 1], [], []>} : vector<1x128xbf16>, vector<128x256xbf16>, vector<1x256xf32> -> vector<1x256xf32>
      %c7_i32_188 = arith.constant 7 : i32
      %c1_i32_189 = arith.constant 1 : i32
      %c1_i32_190 = arith.constant 1 : i32
      %c0_i32_191 = arith.constant 0 : i32
      %c0_i32_192 = arith.constant 0 : i32
      %271 = tpu.memref_slice %arg22[%c7_i32_188, %c0_i32_191, %c0_i32_192] : memref<8x128x256xbf16, #tpu.memory_space<any>> -> memref<1x128x256xbf16, #tpu.memory_space<any>>
      %272 = tpu.memref_squeeze %271 : memref<1x128x256xbf16, #tpu.memory_space<any>> -> memref<128x256xbf16, #tpu.memory_space<any>>
      %c0_i32_193 = arith.constant 0 : i32
      %c0_i32_194 = arith.constant 0 : i32
      %273 = tpu.memref_slice %arg28[%c1_i32_189, %c0_i32_193, %c0_i32_194] : memref<2x128x256xbf16, #tpu.memory_space<vmem>> -> memref<1x128x256xbf16, #tpu.memory_space<vmem>>
      %274 = tpu.memref_squeeze %273 : memref<1x128x256xbf16, #tpu.memory_space<vmem>> -> memref<128x256xbf16, #tpu.memory_space<vmem>>
      %275 = tpu.memref_slice %arg29[%c1_i32_190] : memref<2x!tpu.dma_semaphore, #tpu.memory_space<semaphore_mem>> -> memref<1x!tpu.dma_semaphore, #tpu.memory_space<semaphore_mem>>
      %276 = tpu.memref_squeeze %275 : memref<1x!tpu.dma_semaphore, #tpu.memory_space<semaphore_mem>> -> memref<!tpu.dma_semaphore, #tpu.memory_space<semaphore_mem>>
      tpu.wait_dma2 semaphore(%276 : memref<!tpu.dma_semaphore, #tpu.memory_space<semaphore_mem>>) src(%272 : memref<128x256xbf16, #tpu.memory_space<any>>) dst(%274 : memref<128x256xbf16, #tpu.memory_space<vmem>>)
      %277 = vector.extract_strided_slice %158 {offsets = [7, 0], sizes = [1, 128], strides = [1, 1]} : vector<8x128xbf16> to vector<1x128xbf16>
      %c1_195 = arith.constant 1 : index
      %c0_196 = arith.constant 0 : index
      %c0_197 = arith.constant 0 : index
      %278 = vector.load %arg28[%c1_195, %c0_196, %c0_197] : memref<2x128x256xbf16, #tpu.memory_space<vmem>>, vector<1x128x256xbf16>
      %279 = vector.shape_cast %278 : vector<1x128x256xbf16> to vector<128x256xbf16>
      %cst_198 = arith.constant dense<0.000000e+00> : vector<1x256xf32>
      %280 = tpu.matmul %277, %279, %cst_198 {dimension_numbers = #tpu.dot_dimension_numbers<[1], [0], [0], [1], [0, 0, 1, 1], [], []>} : vector<1x128xbf16>, vector<128x256xbf16>, vector<1x256xf32> -> vector<1x256xf32>
      %281 = tpu.concatenate %174, %190, %206, %222, %238, %254, %270, %280 in 0 : vector<1x256xf32>, vector<1x256xf32>, vector<1x256xf32>, vector<1x256xf32>, vector<1x256xf32>, vector<1x256xf32>, vector<1x256xf32>, vector<1x256xf32> -> vector<8x256xf32>
      %c0_199 = arith.constant 0 : index
      %c0_200 = arith.constant 0 : index
      %282 = vector.load %arg23[%c0_199, %c0_200] : memref<8x256xf32, #tpu.memory_space<vmem>>, vector<8x256xf32>
      %283 = arith.addf %281, %282 : vector<8x256xf32>
      %c0_201 = arith.constant 0 : index
      %c0_202 = arith.constant 0 : index
      %284 = vector.load %arg24[%c0_201, %c0_202] : memref<8x256xf32, #tpu.memory_space<vmem>>, vector<8x256xf32>
      tpu.vector_store %arg24[%c0_201, %c0_202], %283 {strides = array<i32>} : memref<8x256xf32, #tpu.memory_space<vmem>>, vector<8x256xf32>,
    } else {
    }
    return
  }
  func.func @transform_0(%arg0: i32, %arg1: memref<8xi32, #tpu.memory_space<smem>>) -> (i32, i32) {
    %c0_i32 = arith.constant 0 : i32
    %c0_i32_0 = arith.constant 0 : i32
    %c0_i32_1 = arith.constant 0 : i32
    return %c0_i32, %c0_i32_0 : i32, i32
  }
  func.func @transform_1(%arg0: i32, %arg1: memref<8xi32, #tpu.memory_space<smem>>) -> (i32, i32, i32) {
    %c0_i32 = arith.constant 0 : i32
    %c0_i32_0 = arith.constant 0 : i32
    %c0_i32_1 = arith.constant 0 : i32
    %c0_i32_2 = arith.constant 0 : i32
    return %c0_i32, %c0_i32_0, %c0_i32_1 : i32, i32, i32
  }
  func.func @transform_2(%arg0: i32, %arg1: memref<8xi32, #tpu.memory_space<smem>>) -> (i32, i32) {
    %c0_i32 = arith.constant 0 : i32
    %c0_i32_0 = arith.constant 0 : i32
    %c0_i32_1 = arith.constant 0 : i32
    return %c0_i32, %c0_i32_0 : i32, i32
  }
  func.func @transform_4(%arg0: i32, %arg1: memref<8xi32, #tpu.memory_space<smem>>) -> (i32, i32) {
    %c0_i32 = arith.constant 0 : i32
    %c0_i32_0 = arith.constant 0 : i32
    %c0_i32_1 = arith.constant 0 : i32
    return %c0_i32, %c0_i32_0 : i32, i32
  }
  func.func @transform_5(%arg0: i32, %arg1: memref<8xi32, #tpu.memory_space<smem>>) -> (i32, i32) {
    %c0_i32 = arith.constant 0 : i32
    %c0_i32_0 = arith.constant 0 : i32
    %c0_i32_1 = arith.constant 0 : i32
    return %c0_i32, %c0_i32_0 : i32, i32
  }
  func.func @transform_6(%arg0: i32, %arg1: memref<8xi32, #tpu.memory_space<smem>>) -> (i32, i32) {
    %c0_i32 = arith.constant 0 : i32
    %c0_i32_0 = arith.constant 0 : i32
    %c0_i32_1 = arith.constant 0 : i32
    return %c0_i32, %c0_i32_0 : i32, i32
  }
  func.func @transform_7(%arg0: i32, %arg1: memref<8xi32, #tpu.memory_space<smem>>) -> (i32, i32) {
    %c0_i32 = arith.constant 0 : i32
    %c0_i32_0 = arith.constant 0 : i32
    %c0_i32_1 = arith.constant 0 : i32
    return %c0_i32, %c0_i32_0 : i32, i32
  }
  func.func @transform_8(%arg0: i32, %arg1: memref<8xi32, #tpu.memory_space<smem>>) -> (i32, i32, i32) {
    %c0_i32 = arith.constant 0 : i32
    %c0_i32_0 = arith.constant 0 : i32
    %c0_i32_1 = arith.constant 0 : i32
    return %arg0, %c0_i32, %c0_i32_0 : i32, i32, i32
  }
  func.func @transform_9(%arg0: i32, %arg1: memref<8xi32, #tpu.memory_space<smem>>) -> (i32, i32, i32) {
    %c0_i32 = arith.constant 0 : i32
    %c0_i32_0 = arith.constant 0 : i32
    %c0_i32_1 = arith.constant 0 : i32
    return %arg0, %c0_i32, %c0_i32_0 : i32, i32, i32
  }
  func.func @transform_10(%arg0: i32, %arg1: memref<8xi32, #tpu.memory_space<smem>>) -> (i32, i32, i32) {
    %c0_i32 = arith.constant 0 : i32
    %c0_i32_0 = arith.constant 0 : i32
    %c0_i32_1 = arith.constant 0 : i32
    return %arg0, %c0_i32, %c0_i32_0 : i32, i32, i32
  }
  func.func @transform_11(%arg0: i32, %arg1: memref<8xi32, #tpu.memory_space<smem>>) -> (i32, i32, i32) {
    %c0_i32 = arith.constant 0 : i32
    %c0_i32_0 = arith.constant 0 : i32
    %c0_i32_1 = arith.constant 0 : i32
    return %arg0, %c0_i32, %c0_i32_0 : i32, i32, i32
  }
  func.func @transform_12(%arg0: i32, %arg1: memref<8xi32, #tpu.memory_space<smem>>) -> (i32, i32, i32) {
    %c0_i32 = arith.constant 0 : i32
    %c0_i32_0 = arith.constant 0 : i32
    %c0_i32_1 = arith.constant 0 : i32
    return %arg0, %c0_i32, %c0_i32_0 : i32, i32, i32
  }
  func.func @transform_13(%arg0: i32, %arg1: memref<8xi32, #tpu.memory_space<smem>>) -> (i32, i32, i32) {
    %c0_i32 = arith.constant 0 : i32
    %c0_i32_0 = arith.constant 0 : i32
    %c0_i32_1 = arith.constant 0 : i32
    return %arg0, %c0_i32, %c0_i32_0 : i32, i32, i32
  }
  func.func @transform_14(%arg0: i32, %arg1: memref<8xi32, #tpu.memory_space<smem>>) -> (i32, i32, i32) {
    %c0_i32 = arith.constant 0 : i32
    %c0_i32_0 = arith.constant 0 : i32
    %c0_i32_1 = arith.constant 0 : i32
    return %arg0, %c0_i32, %c0_i32_0 : i32, i32, i32
  }
  func.func @transform_15(%arg0: i32, %arg1: memref<8xi32, #tpu.memory_space<smem>>) -> (i32, i32, i32) {
    %c0_i32 = arith.constant 0 : i32
    %c0_i32_0 = arith.constant 0 : i32
    %c0_i32_1 = arith.constant 0 : i32
    return %arg0, %c0_i32, %c0_i32_0 : i32, i32, i32
  }
  func.func @transform_16(%arg0: i32, %arg1: memref<8xi32, #tpu.memory_space<smem>>) -> (i32, i32, i32) {
    %c0_i32 = arith.constant 0 : i32
    %c0_i32_0 = arith.constant 0 : i32
    %c0_i32_1 = arith.constant 0 : i32
    return %arg0, %c0_i32, %c0_i32_0 : i32, i32, i32
  }
  func.func @transform_17(%arg0: i32, %arg1: memref<8xi32, #tpu.memory_space<smem>>) -> (i32, i32, i32) {
    %c0_i32 = arith.constant 0 : i32
    %c0_i32_0 = arith.constant 0 : i32
    %c0_i32_1 = arith.constant 0 : i32
    return %arg0, %c0_i32, %c0_i32_0 : i32, i32, i32
  }
  func.func @transform_18(%arg0: i32, %arg1: memref<8xi32, #tpu.memory_space<smem>>) -> (i32, i32, i32) {
    %c0_i32 = arith.constant 0 : i32
    %c0_i32_0 = arith.constant 0 : i32
    %c0_i32_1 = arith.constant 0 : i32
    return %arg0, %c0_i32, %c0_i32_0 : i32, i32, i32
  }
  func.func @transform_19(%arg0: i32, %arg1: memref<8xi32, #tpu.memory_space<smem>>) -> (i32, i32, i32) {
    %c0_i32 = arith.constant 0 : i32
    %c0_i32_0 = arith.constant 0 : i32
    %c0_i32_1 = arith.constant 0 : i32
    return %arg0, %c0_i32, %c0_i32_0 : i32, i32, i32
  }
  func.func @transform_21(%arg0: i32, %arg1: memref<8xi32, #tpu.memory_space<smem>>) -> (i32, i32) {
    %c0_i32 = arith.constant 0 : i32
    %c0_i32_0 = arith.constant 0 : i32
    %c0_i32_1 = arith.constant 0 : i32
    return %c0_i32, %c0_i32_0 : i32, i32
  }
  func.func @transform_22(%arg0: i32, %arg1: memref<8xi32, #tpu.memory_space<smem>>) -> (i32, i32) {
    %c0_i32 = arith.constant 0 : i32
    %c0_i32_0 = arith.constant 0 : i32
    %c0_i32_1 = arith.constant 0 : i32
    return %c0_i32, %c0_i32_0 : i32, i32
  }
}

</mosaic_0001>

<llo_original>
// kernel: _lambda_.1
$region0: #{_lambda_.1}
  #allocation0 [shape = 'u32[]', space=smem, size = 0x4, offset = 0x4, fixed_abs, tag = 'smem constant byte address 0x4 - core index']
  #allocation1 [shape = 'u32[72,128]{1,0:T(1,128)}', space=vmem, size = 0x9000, scoped, tag = 'internal scratch']
  #allocation2 [shape = 'f32[8,128]{1,0:T(8,128)}', space=vmem, size = 0x1000, scoped, tag = 'scratch operand']
  #allocation3 [shape = 'f32[8,128]{1,0:T(8,128)}', space=vmem, size = 0x1000, scoped, tag = 'scratch operand']
  #allocation4 [shape = 's32[8]{0}', space=sflag, size = 0x20, scoped, tag = 'scratch operand']
  #allocation5 [shape = 'bf16[2,128,256]{2,1,0:T(8,128)(2,1)}', space=vmem, size = 0x20000, scoped, tag = 'scratch operand']
  #allocation6 [shape = 's32[2]{0}', space=sflag, size = 0x8, scoped, tag = 'scratch operand']
  #allocation7 [shape = 's32[1]{0}', space=sflag, size = 0x4, scoped, tag = 'scoped memory for _lambda_.1']
  #allocation8 [shape = 'u8[512]{0}', space=smem, size = 0x200, scoped, tag = 'prefetched SMEM operand 0']
  #allocation34 [shape = 's32[]', space=sflag, size = 0x4, offset = 0, fixed_abs, tag = 'sflag constant byte address 0x0 - dummy sync flag']
  #allocation35 [shape = 's32[]', space=sflag, size = 0x4, offset = 0, fixed_abs, tag = 'sflag constant byte address 0x0 - dummy sync flag']
  #allocation36 [shape = 'u32[]', space=smem, size = 0x4, offset = 0x44, fixed_abs, tag = 'smem constant byte address 0x44 - assertion arg 0']
  #allocation37 [shape = 'u32[]', space=smem, size = 0x4, offset = 0x48, fixed_abs, tag = 'smem constant byte address 0x48 - assertion arg 1']
  #allocation38 [shape = 's32[]', space=sflag, size = 0x4, offset = 0, fixed_abs, tag = 'sflag constant byte address 0x0 - dummy sync flag']
  #allocation39 [shape = 's32[]', space=sflag, size = 0x4, offset = 0, fixed_abs, tag = 'sflag constant byte address 0x0 - dummy sync flag']
  #allocation40 [shape = 's32[]', space=sflag, size = 0x4, offset = 0, fixed_abs, tag = 'sflag constant byte address 0x0 - dummy sync flag']
  #allocation41 [shape = 's32[]', space=sflag, size = 0x4, offset = 0, fixed_abs, tag = 'sflag constant byte address 0x0 - dummy sync flag']
  #allocation42 [shape = 's32[]', space=sflag, size = 0x4, offset = 0, fixed_abs, tag = 'sflag constant byte address 0x0 - dummy sync flag']
  #allocation43 [shape = 's32[]', space=sflag, size = 0x4, offset = 0, fixed_abs, tag = 'sflag constant byte address 0x0 - dummy sync flag']
  #allocation44 [shape = 's32[]', space=sflag, size = 0x4, offset = 0, fixed_abs, tag = 'sflag constant byte address 0x0 - dummy sync flag']
  #allocation45 [shape = 's32[]', space=sflag, size = 0x4, offset = 0, fixed_abs, tag = 'sflag constant byte address 0x0 - dummy sync flag']
  #allocation46 [shape = 's32[]', space=sflag, size = 0x4, offset = 0, fixed_abs, tag = 'sflag constant byte address 0x0 - dummy sync flag']
  #allocation47 [shape = 's32[]', space=sflag, size = 0x4, offset = 0, fixed_abs, tag = 'sflag constant byte address 0x0 - dummy sync flag']
  #allocation48 [shape = 's32[]', space=sflag, size = 0x4, offset = 0, fixed_abs, tag = 'sflag constant byte address 0x0 - dummy sync flag']
  #allocation49 [shape = 's32[]', space=sflag, size = 0x4, offset = 0, fixed_abs, tag = 'sflag constant byte address 0x0 - dummy sync flag']
  #allocation50 [shape = 's32[]', space=sflag, size = 0x4, offset = 0, fixed_abs, tag = 'sflag constant byte address 0x0 - dummy sync flag']
  #allocation51 [shape = 's32[]', space=sflag, size = 0x4, offset = 0, fixed_abs, tag = 'sflag constant byte address 0x0 - dummy sync flag']
  #allocation52 [shape = 's32[]', space=sflag, size = 0x4, offset = 0, fixed_abs, tag = 'sflag constant byte address 0x0 - dummy sync flag']
  #allocation53 [shape = 's32[]', space=sflag, size = 0x4, offset = 0, fixed_abs, tag = 'sflag constant byte address 0x0 - dummy sync flag']
  #allocation54 [shape = 's32[]', space=sflag, size = 0x4, offset = 0, fixed_abs, tag = 'sflag constant byte address 0x0 - dummy sync flag']
  #allocation55 [shape = 's32[]', space=sflag, size = 0x4, offset = 0, fixed_abs, tag = 'sflag constant byte address 0x0 - dummy sync flag']
  #allocation56 [shape = 's32[]', space=sflag, size = 0x4, offset = 0, fixed_abs, tag = 'sflag constant byte address 0x0 - dummy sync flag']
  #allocation57 [shape = 's32[]', space=sflag, size = 0x4, offset = 0, fixed_abs, tag = 'sflag constant byte address 0x0 - dummy sync flag']
  #allocation58 [shape = 's32[]', space=sflag, size = 0x4, offset = 0, fixed_abs, tag = 'sflag constant byte address 0x0 - dummy sync flag']
  #allocation59 [shape = 's32[]', space=sflag, size = 0x4, offset = 0, fixed_abs, tag = 'sflag constant byte address 0x0 - dummy sync flag']
  #allocation60 [shape = 's32[]', space=sflag, size = 0x4, offset = 0, fixed_abs, tag = 'sflag constant byte address 0x0 - dummy sync flag']
  #allocation61 [shape = 's32[]', space=sflag, size = 0x4, offset = 0, fixed_abs, tag = 'sflag constant byte address 0x0 - dummy sync flag']
  #allocation62 [shape = 's32[]', space=sflag, size = 0x4, offset = 0, fixed_abs, tag = 'sflag constant byte address 0x0 - dummy sync flag']
  #allocation63 [shape = 's32[]', space=sflag, size = 0x4, offset = 0, fixed_abs, tag = 'sflag constant byte address 0x0 - dummy sync flag']
  #allocation64 [shape = 's32[]', space=sflag, size = 0x4, offset = 0, fixed_abs, tag = 'sflag constant byte address 0x0 - dummy sync flag']
  #allocation65 [shape = 's32[]', space=sflag, size = 0x4, offset = 0, fixed_abs, tag = 'sflag constant byte address 0x0 - dummy sync flag']
  #allocation66 [shape = 's32[]', space=sflag, size = 0x4, offset = 0, fixed_abs, tag = 'sflag constant byte address 0x0 - dummy sync flag']
  #allocation67 [shape = 's32[]', space=sflag, size = 0x4, offset = 0, fixed_abs, tag = 'sflag constant byte address 0x0 - dummy sync flag']
  %s0 = inlined_call_operand.vmem [shape: s32[8], index: 0, kind: input, shape index: {}]
  %s1 = inlined_call_operand.hbm [shape: f32[1,128], index: 1, kind: input, shape index: {}]
  %s2 = inlined_call_operand.hbm [shape: bf16[8,128,128], index: 2, kind: input, shape index: {}]
  %s3 = inlined_call_operand.hbm [shape: f32[8,128], index: 3, kind: input, shape index: {}]
  %s4 = inlined_call_operand.hbm [shape: f32[2311,128], index: 4, kind: input, shape index: {}]
  %s5 = inlined_call_operand.hbm [shape: f32[8,128], index: 5, kind: input, shape index: {}]
  %s6 = inlined_call_operand.vmem [shape: f32[8,1], index: 6, kind: input, shape index: {}]
  %s7 = inlined_call_operand.hbm [shape: f32[1,128], index: 7, kind: input, shape index: {}]
  %s8 = inlined_call_operand.hbm [shape: f32[1,128], index: 8, kind: input, shape index: {}]
  %s9 = inlined_call_operand.hbm [shape: bf16[2,128,384], index: 9, kind: input, shape index: {}]
  %s10 = inlined_call_operand.hbm [shape: f32[2,1,384], index: 10, kind: input, shape index: {}]
  %s11 = inlined_call_operand.hbm [shape: bf16[2,128,128], index: 11, kind: input, shape index: {}]
  %s12 = inlined_call_operand.hbm [shape: f32[2,1,128], index: 12, kind: input, shape index: {}]
  %s13 = inlined_call_operand.hbm [shape: f32[2,1,128], index: 13, kind: input, shape index: {}]
  %s14 = inlined_call_operand.hbm [shape: f32[2,1,128], index: 14, kind: input, shape index: {}]
  %s15 = inlined_call_operand.hbm [shape: bf16[2,128,256], index: 15, kind: input, shape index: {}]
  %s16 = inlined_call_operand.hbm [shape: f32[2,1,256], index: 16, kind: input, shape index: {}]
  %s17 = inlined_call_operand.hbm [shape: bf16[2,256,128], index: 17, kind: input, shape index: {}]
  %s18 = inlined_call_operand.hbm [shape: f32[2,1,128], index: 18, kind: input, shape index: {}]
  %s19 = inlined_call_operand.hbm [shape: f32[2,1,128], index: 19, kind: input, shape index: {}]
  %s20 = inlined_call_operand.hbm [shape: f32[2,1,128], index: 20, kind: input, shape index: {}]
  %s21 = inlined_call_operand.hbm [shape: bf16[8,128,256], index: 21, kind: input, shape index: {}]
  %s22 = inlined_call_operand.hbm [shape: f32[8,256], index: 22, kind: input, shape index: {}]
  %s23 = inlined_call_operand.hbm [shape: f32[8,256], index: 23, kind: output, shape index: {}]
  %s24 = sld [smem:[#allocation0]]
  $region261: #{_lambda_.1} parent=0
    _
  %s26 = ssub.s32 1, %s24
  %s27 = scalar_select 0, %s26, %s24
  %s29 = sshll.u32 %s0, 4
  %s30 = int_to_ptr.vmem [resolvable:$true] %s29
  %32 = dma.vmem_to_smem %s30, 16, [#allocation8], [#allocation7]
  %34 = dma.done [#allocation7], 16
  %35 = sfence
  $region1: #{_lambda_.1} parent=0
    #allocation9 [shape = 'u8[512]{0}', space=vmem, size = 0x400, scoped, tag = 'input window, operand 1, single buffered']
    #allocation10 [shape = 's32[2]{0}', space=sflag, size = 0x8, scoped, tag = 'scoped memory for _lambda_.1']
    #allocation11 [shape = 's32[2]{0}', space=sflag, size = 0x8, scoped, tag = 'scoped memory for _lambda_.1']
    #allocation12 [shape = 'u8[262144]{0}', space=vmem, size = 0x40000, scoped, tag = 'input window, operand 2, single buffered']
    #allocation13 [shape = 's32[1]{0}', space=sflag, size = 0x4, scoped, tag = 'scoped memory for _lambda_.1']
    #allocation14 [shape = 'u8[4096]{0}', space=vmem, size = 0x1000, scoped, tag = 'input window, operand 3, single buffered']
    #allocation15 [shape = 'u8[4096]{0}', space=vmem, size = 0x1000, scoped, tag = 'input window, operand 5, single buffered']
    #allocation16 [shape = 's32[1]{0}', space=sflag, size = 0x4, scoped, tag = 'scoped memory for _lambda_.1']
    #allocation17 [shape = 'u8[512]{0}', space=vmem, size = 0x400, scoped, tag = 'input window, operand 7, single buffered']
    #allocation18 [shape = 'u8[512]{0}', space=vmem, size = 0x400, scoped, tag = 'input window, operand 8, single buffered']
    #allocation19 [shape = 's32[1]{0}', space=sflag, size = 0x4, scoped, tag = 'scoped memory for _lambda_.1']
    #allocation20 [shape = 'u8[196608]{0}', space=vmem, size = 0x30000, scoped, tag = 'input window, operand 9']
    #allocation21 [shape = 'u8[3072]{0}', space=vmem, size = 0xc00, scoped, tag = 'input window, operand 10']
    #allocation22 [shape = 'u8[65536]{0}', space=vmem, size = 0x10000, scoped, tag = 'input window, operand 11']
    #allocation23 [shape = 'u8[1024]{0}', space=vmem, size = 0x400, scoped, tag = 'input window, operand 12']
    #allocation24 [shape = 'u8[1024]{0}', space=vmem, size = 0x400, scoped, tag = 'input window, operand 13']
    #allocation25 [shape = 'u8[1024]{0}', space=vmem, size = 0x400, scoped, tag = 'input window, operand 14']
    #allocation26 [shape = 'u8[131072]{0}', space=vmem, size = 0x20000, scoped, tag = 'input window, operand 15']
    #allocation27 [shape = 'u8[2048]{0}', space=vmem, size = 0x800, scoped, tag = 'input window, operand 16']
    #allocation28 [shape = 'u8[131072]{0}', space=vmem, size = 0x20000, scoped, tag = 'input window, operand 17']
    #allocation29 [shape = 'u8[1024]{0}', space=vmem, size = 0x400, scoped, tag = 'input window, operand 18']
    #allocation30 [shape = 'u8[1024]{0}', space=vmem, size = 0x400, scoped, tag = 'input window, operand 19']
    #allocation31 [shape = 'u8[1024]{0}', space=vmem, size = 0x400, scoped, tag = 'input window, operand 20']
    #allocation32 [shape = 'u8[8192]{0}', space=vmem, size = 0x2000, scoped, tag = 'input window, operand 22, single buffered']
    #allocation33 [shape = 'u8[8192]{0}', space=vmem, size = 0x2000, scoped, tag = 'output window, operand 0, single buffered']
    %36 = vsyncpa [#allocation10], 0
    %37 = vsyncpa [#allocation13], 0
    %38 = vsyncpa [#allocation16], 0
    %39 = vsyncpa [#allocation19], 0
    %40 = vsyncpa [#allocation11], 0
    loop: start=0, step=1, limit=4
    $region2: #{_lambda_.1} parent=1 // loop_pre_header
      _
    $region3: #{_lambda_.1} parent=1 // loop_header
      %s42 = sphi 0, %s46
      %p43 = scmp.ge.s32.totalorder %s42, 4
      %s50 = sphi 0, %s50
      %s52 = sphi 0, %s50
      %s53 = sphi 0, %s52
      %s67 = sphi 0, %s53
      %s71 = sphi 0, %s71
      %s73 = sphi 0, %s71
      %s74 = sphi 0, %s73
      %s88 = sphi 0, %s74
      %s92 = sphi 0, %s92
      %s94 = sphi 0, %s92
      %s95 = sphi 0, %s94
      %s109 = sphi 0, %s95
      %s113 = sphi 0, %s113
      %s115 = sphi 0, %s113
      %s116 = sphi 0, %s115
      %s130 = sphi 0, %s116
      %s134 = sphi 0, %s134
      %s136 = sphi 0, %s134
      %s137 = sphi 0, %s136
      %s151 = sphi 0, %s137
      %s155 = sphi 0, %s155
      %s157 = sphi 0, %s155
      %s158 = sphi 0, %s157
      %s172 = sphi 0, %s158
      %s176 = sphi 0, %s176
      %s178 = sphi 0, %s176
      %s179 = sphi 0, %s178
      %s193 = sphi 0, %s179
      %s199 = sphi 0, %s201
      %s202 = sphi 0, %s199
      %s203 = sphi 0, %s202
      %s219 = sphi 0, %s203
      %s225 = sphi 0, %s227
      %s228 = sphi 0, %s225
      %s229 = sphi 0, %s228
      %s245 = sphi 0, %s229
      %s251 = sphi 0, %s253
      %s254 = sphi 0, %s251
      %s255 = sphi 0, %s254
      %s271 = sphi 0, %s255
      %s277 = sphi 0, %s279
      %s280 = sphi 0, %s277
      %s281 = sphi 0, %s280
      %s297 = sphi 0, %s281
      %s303 = sphi 0, %s305
      %s306 = sphi 0, %s303
      %s307 = sphi 0, %s306
      %s323 = sphi 0, %s307
      %s329 = sphi 0, %s331
      %s332 = sphi 0, %s329
      %s333 = sphi 0, %s332
      %s349 = sphi 0, %s333
      %s355 = sphi 0, %s357
      %s358 = sphi 0, %s355
      %s359 = sphi 0, %s358
      %s375 = sphi 0, %s359
      %s381 = sphi 0, %s383
      %s384 = sphi 0, %s381
      %s385 = sphi 0, %s384
      %s401 = sphi 0, %s385
      %s407 = sphi 0, %s409
      %s410 = sphi 0, %s407
      %s411 = sphi 0, %s410
      %s427 = sphi 0, %s411
      %s433 = sphi 0, %s435
      %s436 = sphi 0, %s433
      %s437 = sphi 0, %s436
      %s453 = sphi 0, %s437
      %s459 = sphi 0, %s461
      %s462 = sphi 0, %s459
      %s463 = sphi 0, %s462
      %s479 = sphi 0, %s463
      %s485 = sphi 0, %s487
      %s488 = sphi 0, %s485
      %s489 = sphi 0, %s488
      %s505 = sphi 0, %s489
      %s509 = sphi 0, %s509
      %s511 = sphi 0, %s509
      %s512 = sphi 0, %s511
      %s526 = sphi 0, %s512
      %s530 = sphi 0, %s530
      %s532 = sphi 0, %s530
      %s533 = sphi 0, %s532
      %s547 = sphi 0, %s533
    $region4: #{_lambda_.1} parent=1 // loop_header_branch
      %45 = sbr.rel (%p43) target = $region8
    $region5: #{_lambda_.1} parent=1 // loop_body
      %s47 = ssub.s32 %s42, 1
      %s48 = ssub.s32 %s42, 2
      %s49 = sadd.s32 %s42, 1
      %s51 = sadd.s32 %s50, 1
      %p54 = scmp.eq.s32.totalorder %s42, 1
      %p55 = scmp.ne.s32.totalorder %s50, %s52
      %p56 = scmp.eq.s32.totalorder %s42, 0
      %p57 = por %p55, %p56
      %p58 = scmp.ne.s32.totalorder %s50, %s52
      %p59 = scmp.eq.s32.totalorder %s47, 1
      %p60 = por %p58, %p59
      %p61 = scmp.ne.s32.totalorder %s52, %s53
      %p62 = scmp.eq.s32.totalorder %s47, 0
      %p63 = por %p61, %p62
      %p64 = scmp.ne.s32.totalorder %s52, %s53
      %p65 = scmp.eq.s32.totalorder %s48, 1
      %p66 = por %p64, %p65
      %p68 = scmp.ne.s32.totalorder %s53, %s67
      %p69 = scmp.eq.s32.totalorder %s48, 0
      %p70 = por %p68, %p69
      %s72 = sadd.s32 %s71, 1
      %p75 = scmp.eq.s32.totalorder %s42, 1
      %p76 = scmp.ne.s32.totalorder %s71, %s73
      %p77 = scmp.eq.s32.totalorder %s42, 0
      %p78 = por %p76, %p77
      %p79 = scmp.ne.s32.totalorder %s71, %s73
      %p80 = scmp.eq.s32.totalorder %s47, 1
      %p81 = por %p79, %p80
      %p82 = scmp.ne.s32.totalorder %s73, %s74
      %p83 = scmp.eq.s32.totalorder %s47, 0
      %p84 = por %p82, %p83
      %p85 = scmp.ne.s32.totalorder %s73, %s74
      %p86 = scmp.eq.s32.totalorder %s48, 1
      %p87 = por %p85, %p86
      %p89 = scmp.ne.s32.totalorder %s74, %s88
      %p90 = scmp.eq.s32.totalorder %s48, 0
      %p91 = por %p89, %p90
      %s93 = sadd.s32 %s92, 1
      %p96 = scmp.eq.s32.totalorder %s42, 1
      %p97 = scmp.ne.s32.totalorder %s92, %s94
      %p98 = scmp.eq.s32.totalorder %s42, 0
      %p99 = por %p97, %p98
      %p100 = scmp.ne.s32.totalorder %s92, %s94
      %p101 = scmp.eq.s32.totalorder %s47, 1
      %p102 = por %p100, %p101
      %p103 = scmp.ne.s32.totalorder %s94, %s95
      %p104 = scmp.eq.s32.totalorder %s47, 0
      %p105 = por %p103, %p104
      %p106 = scmp.ne.s32.totalorder %s94, %s95
      %p107 = scmp.eq.s32.totalorder %s48, 1
      %p108 = por %p106, %p107
      %p110 = scmp.ne.s32.totalorder %s95, %s109
      %p111 = scmp.eq.s32.totalorder %s48, 0
      %p112 = por %p110, %p111
      %s114 = sadd.s32 %s113, 1
      %p117 = scmp.eq.s32.totalorder %s42, 1
      %p118 = scmp.ne.s32.totalorder %s113, %s115
      %p119 = scmp.eq.s32.totalorder %s42, 0
      %p120 = por %p118, %p119
      %p121 = scmp.ne.s32.totalorder %s113, %s115
      %p122 = scmp.eq.s32.totalorder %s47, 1
      %p123 = por %p121, %p122
      %p124 = scmp.ne.s32.totalorder %s115, %s116
      %p125 = scmp.eq.s32.totalorder %s47, 0
      %p126 = por %p124, %p125
      %p127 = scmp.ne.s32.totalorder %s115, %s116
      %p128 = scmp.eq.s32.totalorder %s48, 1
      %p129 = por %p127, %p128
      %p131 = scmp.ne.s32.totalorder %s116, %s130
      %p132 = scmp.eq.s32.totalorder %s48, 0
      %p133 = por %p131, %p132
      %s135 = sadd.s32 %s134, 1
      %p138 = scmp.eq.s32.totalorder %s42, 1
      %p139 = scmp.ne.s32.totalorder %s134, %s136
      %p140 = scmp.eq.s32.totalorder %s42, 0
      %p141 = por %p139, %p140
      %p142 = scmp.ne.s32.totalorder %s134, %s136
      %p143 = scmp.eq.s32.totalorder %s47, 1
      %p144 = por %p142, %p143
      %p145 = scmp.ne.s32.totalorder %s136, %s137
      %p146 = scmp.eq.s32.totalorder %s47, 0
      %p147 = por %p145, %p146
      %p148 = scmp.ne.s32.totalorder %s136, %s137
      %p149 = scmp.eq.s32.totalorder %s48, 1
      %p150 = por %p148, %p149
      %p152 = scmp.ne.s32.totalorder %s137, %s151
      %p153 = scmp.eq.s32.totalorder %s48, 0
      %p154 = por %p152, %p153
      %s156 = sadd.s32 %s155, 1
      %p159 = scmp.eq.s32.totalorder %s42, 1
      %p160 = scmp.ne.s32.totalorder %s155, %s157
      %p161 = scmp.eq.s32.totalorder %s42, 0
      %p162 = por %p160, %p161
      %p163 = scmp.ne.s32.totalorder %s155, %s157
      %p164 = scmp.eq.s32.totalorder %s47, 1
      %p165 = por %p163, %p164
      %p166 = scmp.ne.s32.totalorder %s157, %s158
      %p167 = scmp.eq.s32.totalorder %s47, 0
      %p168 = por %p166, %p167
      %p169 = scmp.ne.s32.totalorder %s157, %s158
      %p170 = scmp.eq.s32.totalorder %s48, 1
      %p171 = por %p169, %p170
      %p173 = scmp.ne.s32.totalorder %s158, %s172
      %p174 = scmp.eq.s32.totalorder %s48, 0
      %p175 = por %p173, %p174
      %s177 = sadd.s32 %s176, 1
      %p180 = scmp.eq.s32.totalorder %s42, 1
      %p181 = scmp.ne.s32.totalorder %s176, %s178
      %p182 = scmp.eq.s32.totalorder %s42, 0
      %p183 = por %p181, %p182
      %p184 = scmp.ne.s32.totalorder %s176, %s178
      %p185 = scmp.eq.s32.totalorder %s47, 1
      %p186 = por %p184, %p185
      %p187 = scmp.ne.s32.totalorder %s178, %s179
      %p188 = scmp.eq.s32.totalorder %s47, 0
      %p189 = por %p187, %p188
      %p190 = scmp.ne.s32.totalorder %s178, %s179
      %p191 = scmp.eq.s32.totalorder %s48, 1
      %p192 = por %p190, %p191
      %p194 = scmp.ne.s32.totalorder %s179, %s193
      %p195 = scmp.eq.s32.totalorder %s48, 0
      %p196 = por %p194, %p195
      %s197 = ssub.s32 %s42, %s49
      %p198 = scmp.eq.s32.totalorder %s197, 0
      %s200 = sadd.s32 %s199, 1
      %s201 = scalar_select %p198, %s199, %s200
      %p204 = pneg %p198
      %p205 = scmp.eq.s32.totalorder %s42, 1
      %p206 = por %p204, %p205
      %p207 = scmp.ne.s32.totalorder %s199, %s202
      %p208 = scmp.eq.s32.totalorder %s42, 0
      %p209 = por %p207, %p208
      %p210 = scmp.ne.s32.totalorder %s199, %s202
      %p211 = scmp.eq.s32.totalorder %s47, 1
      %p212 = por %p210, %p211
      %p213 = scmp.ne.s32.totalorder %s202, %s203
      %p214 = scmp.eq.s32.totalorder %s47, 0
      %p215 = por %p213, %p214
      %p216 = scmp.ne.s32.totalorder %s202, %s203
      %p217 = scmp.eq.s32.totalorder %s48, 1
      %p218 = por %p216, %p217
      %p220 = scmp.ne.s32.totalorder %s203, %s219
      %p221 = scmp.eq.s32.totalorder %s48, 0
      %p222 = por %p220, %p221
      %s223 = ssub.s32 %s42, %s49
      %p224 = scmp.eq.s32.totalorder %s223, 0
      %s226 = sadd.s32 %s225, 1
      %s227 = scalar_select %p224, %s225, %s226
      %p230 = pneg %p224
      %p231 = scmp.eq.s32.totalorder %s42, 1
      %p232 = por %p230, %p231
      %p233 = scmp.ne.s32.totalorder %s225, %s228
      %p234 = scmp.eq.s32.totalorder %s42, 0
      %p235 = por %p233, %p234
      %p236 = scmp.ne.s32.totalorder %s225, %s228
      %p237 = scmp.eq.s32.totalorder %s47, 1
      %p238 = por %p236, %p237
      %p239 = scmp.ne.s32.totalorder %s228, %s229
      %p240 = scmp.eq.s32.totalorder %s47, 0
      %p241 = por %p239, %p240
      %p242 = scmp.ne.s32.totalorder %s228, %s229
      %p243 = scmp.eq.s32.totalorder %s48, 1
      %p244 = por %p242, %p243
      %p246 = scmp.ne.s32.totalorder %s229, %s245
      %p247 = scmp.eq.s32.totalorder %s48, 0
      %p248 = por %p246, %p247
      %s249 = ssub.s32 %s42, %s49
      %p250 = scmp.eq.s32.totalorder %s249, 0
      %s252 = sadd.s32 %s251, 1
      %s253 = scalar_select %p250, %s251, %s252
      %p256 = pneg %p250
      %p257 = scmp.eq.s32.totalorder %s42, 1
      %p258 = por %p256, %p257
      %p259 = scmp.ne.s32.totalorder %s251, %s254
      %p260 = scmp.eq.s32.totalorder %s42, 0
      %p261 = por %p259, %p260
      %p262 = scmp.ne.s32.totalorder %s251, %s254
      %p263 = scmp.eq.s32.totalorder %s47, 1
      %p264 = por %p262, %p263
      %p265 = scmp.ne.s32.totalorder %s254, %s255
      %p266 = scmp.eq.s32.totalorder %s47, 0
      %p267 = por %p265, %p266
      %p268 = scmp.ne.s32.totalorder %s254, %s255
      %p269 = scmp.eq.s32.totalorder %s48, 1
      %p270 = por %p268, %p269
      %p272 = scmp.ne.s32.totalorder %s255, %s271
      %p273 = scmp.eq.s32.totalorder %s48, 0
      %p274 = por %p272, %p273
      %s275 = ssub.s32 %s42, %s49
      %p276 = scmp.eq.s32.totalorder %s275, 0
      %s278 = sadd.s32 %s277, 1
      %s279 = scalar_select %p276, %s277, %s278
      %p282 = pneg %p276
      %p283 = scmp.eq.s32.totalorder %s42, 1
      %p284 = por %p282, %p283
      %p285 = scmp.ne.s32.totalorder %s277, %s280
      %p286 = scmp.eq.s32.totalorder %s42, 0
      %p287 = por %p285, %p286
      %p288 = scmp.ne.s32.totalorder %s277, %s280
      %p289 = scmp.eq.s32.totalorder %s47, 1
      %p290 = por %p288, %p289
      %p291 = scmp.ne.s32.totalorder %s280, %s281
      %p292 = scmp.eq.s32.totalorder %s47, 0
      %p293 = por %p291, %p292
      %p294 = scmp.ne.s32.totalorder %s280, %s281
      %p295 = scmp.eq.s32.totalorder %s48, 1
      %p296 = por %p294, %p295
      %p298 = scmp.ne.s32.totalorder %s281, %s297
      %p299 = scmp.eq.s32.totalorder %s48, 0
      %p300 = por %p298, %p299
      %s301 = ssub.s32 %s42, %s49
      %p302 = scmp.eq.s32.totalorder %s301, 0
      %s304 = sadd.s32 %s303, 1
      %s305 = scalar_select %p302, %s303, %s304
      %p308 = pneg %p302
      %p309 = scmp.eq.s32.totalorder %s42, 1
      %p310 = por %p308, %p309
      %p311 = scmp.ne.s32.totalorder %s303, %s306
      %p312 = scmp.eq.s32.totalorder %s42, 0
      %p313 = por %p311, %p312
      %p314 = scmp.ne.s32.totalorder %s303, %s306
      %p315 = scmp.eq.s32.totalorder %s47, 1
      %p316 = por %p314, %p315
      %p317 = scmp.ne.s32.totalorder %s306, %s307
      %p318 = scmp.eq.s32.totalorder %s47, 0
      %p319 = por %p317, %p318
      %p320 = scmp.ne.s32.totalorder %s306, %s307
      %p321 = scmp.eq.s32.totalorder %s48, 1
      %p322 = por %p320, %p321
      %p324 = scmp.ne.s32.totalorder %s307, %s323
      %p325 = scmp.eq.s32.totalorder %s48, 0
      %p326 = por %p324, %p325
      %s327 = ssub.s32 %s42, %s49
      %p328 = scmp.eq.s32.totalorder %s327, 0
      %s330 = sadd.s32 %s329, 1
      %s331 = scalar_select %p328, %s329, %s330
      %p334 = pneg %p328
      %p335 = scmp.eq.s32.totalorder %s42, 1
      %p336 = por %p334, %p335
      %p337 = scmp.ne.s32.totalorder %s329, %s332
      %p338 = scmp.eq.s32.totalorder %s42, 0
      %p339 = por %p337, %p338
      %p340 = scmp.ne.s32.totalorder %s329, %s332
      %p341 = scmp.eq.s32.totalorder %s47, 1
      %p342 = por %p340, %p341
      %p343 = scmp.ne.s32.totalorder %s332, %s333
      %p344 = scmp.eq.s32.totalorder %s47, 0
      %p345 = por %p343, %p344
      %p346 = scmp.ne.s32.totalorder %s332, %s333
      %p347 = scmp.eq.s32.totalorder %s48, 1
      %p348 = por %p346, %p347
      %p350 = scmp.ne.s32.totalorder %s333, %s349
      %p351 = scmp.eq.s32.totalorder %s48, 0
      %p352 = por %p350, %p351
      %s353 = ssub.s32 %s42, %s49
      %p354 = scmp.eq.s32.totalorder %s353, 0
      %s356 = sadd.s32 %s355, 1
      %s357 = scalar_select %p354, %s355, %s356
      %p360 = pneg %p354
      %p361 = scmp.eq.s32.totalorder %s42, 1
      %p362 = por %p360, %p361
      %p363 = scmp.ne.s32.totalorder %s355, %s358
      %p364 = scmp.eq.s32.totalorder %s42, 0
      %p365 = por %p363, %p364
      %p366 = scmp.ne.s32.totalorder %s355, %s358
      %p367 = scmp.eq.s32.totalorder %s47, 1
      %p368 = por %p366, %p367
      %p369 = scmp.ne.s32.totalorder %s358, %s359
      %p370 = scmp.eq.s32.totalorder %s47, 0
      %p371 = por %p369, %p370
      %p372 = scmp.ne.s32.totalorder %s358, %s359
      %p373 = scmp.eq.s32.totalorder %s48, 1
      %p374 = por %p372, %p373
      %p376 = scmp.ne.s32.totalorder %s359, %s375
      %p377 = scmp.eq.s32.totalorder %s48, 0
      %p378 = por %p376, %p377
      %s379 = ssub.s32 %s42, %s49
      %p380 = scmp.eq.s32.totalorder %s379, 0
      %s382 = sadd.s32 %s381, 1
      %s383 = scalar_select %p380, %s381, %s382
      %p386 = pneg %p380
      %p387 = scmp.eq.s32.totalorder %s42, 1
      %p388 = por %p386, %p387
      %p389 = scmp.ne.s32.totalorder %s381, %s384
      %p390 = scmp.eq.s32.totalorder %s42, 0
      %p391 = por %p389, %p390
      %p392 = scmp.ne.s32.totalorder %s381, %s384
      %p393 = scmp.eq.s32.totalorder %s47, 1
      %p394 = por %p392, %p393
      %p395 = scmp.ne.s32.totalorder %s384, %s385
      %p396 = scmp.eq.s32.totalorder %s47, 0
      %p397 = por %p395, %p396
      %p398 = scmp.ne.s32.totalorder %s384, %s385
      %p399 = scmp.eq.s32.totalorder %s48, 1
      %p400 = por %p398, %p399
      %p402 = scmp.ne.s32.totalorder %s385, %s401
      %p403 = scmp.eq.s32.totalorder %s48, 0
      %p404 = por %p402, %p403
      %s405 = ssub.s32 %s42, %s49
      %p406 = scmp.eq.s32.totalorder %s405, 0
      %s408 = sadd.s32 %s407, 1
      %s409 = scalar_select %p406, %s407, %s408
      %p412 = pneg %p406
      %p413 = scmp.eq.s32.totalorder %s42, 1
      %p414 = por %p412, %p413
      %p415 = scmp.ne.s32.totalorder %s407, %s410
      %p416 = scmp.eq.s32.totalorder %s42, 0
      %p417 = por %p415, %p416
      %p418 = scmp.ne.s32.totalorder %s407, %s410
      %p419 = scmp.eq.s32.totalorder %s47, 1
      %p420 = por %p418, %p419
      %p421 = scmp.ne.s32.totalorder %s410, %s411
      %p422 = scmp.eq.s32.totalorder %s47, 0
      %p423 = por %p421, %p422
      %p424 = scmp.ne.s32.totalorder %s410, %s411
      %p425 = scmp.eq.s32.totalorder %s48, 1
      %p426 = por %p424, %p425
      %p428 = scmp.ne.s32.totalorder %s411, %s427
      %p429 = scmp.eq.s32.totalorder %s48, 0
      %p430 = por %p428, %p429
      %s431 = ssub.s32 %s42, %s49
      %p432 = scmp.eq.s32.totalorder %s431, 0
      %s434 = sadd.s32 %s433, 1
      %s435 = scalar_select %p432, %s433, %s434
      %p438 = pneg %p432
      %p439 = scmp.eq.s32.totalorder %s42, 1
      %p440 = por %p438, %p439
      %p441 = scmp.ne.s32.totalorder %s433, %s436
      %p442 = scmp.eq.s32.totalorder %s42, 0
      %p443 = por %p441, %p442
      %p444 = scmp.ne.s32.totalorder %s433, %s436
      %p445 = scmp.eq.s32.totalorder %s47, 1
      %p446 = por %p444, %p445
      %p447 = scmp.ne.s32.totalorder %s436, %s437
      %p448 = scmp.eq.s32.totalorder %s47, 0
      %p449 = por %p447, %p448
      %p450 = scmp.ne.s32.totalorder %s436, %s437
      %p451 = scmp.eq.s32.totalorder %s48, 1
      %p452 = por %p450, %p451
      %p454 = scmp.ne.s32.totalorder %s437, %s453
      %p455 = scmp.eq.s32.totalorder %s48, 0
      %p456 = por %p454, %p455
      %s457 = ssub.s32 %s42, %s49
      %p458 = scmp.eq.s32.totalorder %s457, 0
      %s460 = sadd.s32 %s459, 1
      %s461 = scalar_select %p458, %s459, %s460
      %p464 = pneg %p458
      %p465 = scmp.eq.s32.totalorder %s42, 1
      %p466 = por %p464, %p465
      %p467 = scmp.ne.s32.totalorder %s459, %s462
      %p468 = scmp.eq.s32.totalorder %s42, 0
      %p469 = por %p467, %p468
      %p470 = scmp.ne.s32.totalorder %s459, %s462
      %p471 = scmp.eq.s32.totalorder %s47, 1
      %p472 = por %p470, %p471
      %p473 = scmp.ne.s32.totalorder %s462, %s463
      %p474 = scmp.eq.s32.totalorder %s47, 0
      %p475 = por %p473, %p474
      %p476 = scmp.ne.s32.totalorder %s462, %s463
      %p477 = scmp.eq.s32.totalorder %s48, 1
      %p478 = por %p476, %p477
      %p480 = scmp.ne.s32.totalorder %s463, %s479
      %p481 = scmp.eq.s32.totalorder %s48, 0
      %p482 = por %p480, %p481
      %s483 = ssub.s32 %s42, %s49
      %p484 = scmp.eq.s32.totalorder %s483, 0
      %s486 = sadd.s32 %s485, 1
      %s487 = scalar_select %p484, %s485, %s486
      %p490 = pneg %p484
      %p491 = scmp.eq.s32.totalorder %s42, 1
      %p492 = por %p490, %p491
      %p493 = scmp.ne.s32.totalorder %s485, %s488
      %p494 = scmp.eq.s32.totalorder %s42, 0
      %p495 = por %p493, %p494
      %p496 = scmp.ne.s32.totalorder %s485, %s488
      %p497 = scmp.eq.s32.totalorder %s47, 1
      %p498 = por %p496, %p497
      %p499 = scmp.ne.s32.totalorder %s488, %s489
      %p500 = scmp.eq.s32.totalorder %s47, 0
      %p501 = por %p499, %p500
      %p502 = scmp.ne.s32.totalorder %s488, %s489
      %p503 = scmp.eq.s32.totalorder %s48, 1
      %p504 = por %p502, %p503
      %p506 = scmp.ne.s32.totalorder %s489, %s505
      %p507 = scmp.eq.s32.totalorder %s48, 0
      %p508 = por %p506, %p507
      %s510 = sadd.s32 %s509, 1
      %p513 = scmp.eq.s32.totalorder %s42, 1
      %p514 = scmp.ne.s32.totalorder %s509, %s511
      %p515 = scmp.eq.s32.totalorder %s42, 0
      %p516 = por %p514, %p515
      %p517 = scmp.ne.s32.totalorder %s509, %s511
      %p518 = scmp.eq.s32.totalorder %s47, 1
      %p519 = por %p517, %p518
      %p520 = scmp.ne.s32.totalorder %s511, %s512
      %p521 = scmp.eq.s32.totalorder %s47, 0
      %p522 = por %p520, %p521
      %p523 = scmp.ne.s32.totalorder %s511, %s512
      %p524 = scmp.eq.s32.totalorder %s48, 1
      %p525 = por %p523, %p524
      %p527 = scmp.ne.s32.totalorder %s512, %s526
      %p528 = scmp.eq.s32.totalorder %s48, 0
      %p529 = por %p527, %p528
      %s531 = sadd.s32 %s530, 1
      %p534 = scmp.eq.s32.totalorder %s42, 1
      %p535 = scmp.ne.s32.totalorder %s530, %s532
      %p536 = scmp.eq.s32.totalorder %s42, 0
      %p537 = por %p535, %p536
      %p538 = scmp.ne.s32.totalorder %s530, %s532
      %p539 = scmp.eq.s32.totalorder %s47, 1
      %p540 = por %p538, %p539
      %p541 = scmp.ne.s32.totalorder %s532, %s533
      %p542 = scmp.eq.s32.totalorder %s47, 0
      %p543 = por %p541, %p542
      %p544 = scmp.ne.s32.totalorder %s532, %s533
      %p545 = scmp.eq.s32.totalorder %s48, 1
      %p546 = por %p544, %p545
      %p548 = scmp.ne.s32.totalorder %s533, %s547
      %p549 = scmp.eq.s32.totalorder %s48, 0
      %p550 = por %p548, %p549
      %p551 = scmp.le.s32.totalorder 1, %s42
      %p552 = scmp.lt.s32.totalorder %s42, 3
      %p553 = pnand %p551, %p552
      %p554 = pneg %p553
      // Predicated region
      $region9: #{_lambda_.1} parent=5 // pred_check
        _
      $region10: #{_lambda_.1} parent=5 // pred_check_branch
        %556 = sbr.rel (%p553) target = $region12
      $region11: #{_lambda_.1} parent=5 // pred_region
        %s557 = ssub.s32 %s42, 1
        // Predicated region
        $region13: #{_lambda_.1} parent=11 // pred_check
          %p558 = pneg %p63
        $region14: #{_lambda_.1} parent=11 // pred_check_branch
          %560 = sbr.rel (%p558) target = $region16
        $region15: #{_lambda_.1} parent=11 // pred_region
          %562 = vsyncadd [#allocation10], 0
          %s564 = sshll.u32 %s1, 4
          %s565 = int_to_ptr.hbm [resolvable:$true] %s564
          %s566 = sshll.u32 [#allocation9], 4
          %s567 = int_to_ptr.vmem [resolvable:$true] %s566
          %569 = dma.hbm_to_vmem [thread:$0]  %s565, 16, %s567, [#allocation10]
        $region16: #{_lambda_.1} parent=11 // pred_fallthru
          _
        // Predicated region
        $region17: #{_lambda_.1} parent=11 // pred_check
          %p570 = pneg %p84
        $region18: #{_lambda_.1} parent=11 // pred_check_branch
          %572 = sbr.rel (%p570) target = $region20
        $region19: #{_lambda_.1} parent=11 // pred_region
          %574 = vsyncadd [#allocation13], 0
          %s575 = sshll.u32 %s2, 4
          %s576 = int_to_ptr.hbm [resolvable:$true] %s575
          %s577 = sshll.u32 [#allocation12], 4
          %s578 = int_to_ptr.vmem [resolvable:$true] %s577
          %583 = dma.hbm_to_vmem [thread:$0]  %s576, 8192, %s578, [#allocation13], 64, 64, 4
        $region20: #{_lambda_.1} parent=11 // pred_fallthru
          _
        // Predicated region
        $region21: #{_lambda_.1} parent=11 // pred_check
          %p584 = pneg %p105
        $region22: #{_lambda_.1} parent=11 // pred_check_branch
          %586 = sbr.rel (%p584) target = $region24
        $region23: #{_lambda_.1} parent=11 // pred_region
          %588 = vsyncadd [#allocation13], 0
          %s590 = sshll.u32 %s3, 4
          %s591 = int_to_ptr.hbm [resolvable:$true] %s590
          %s592 = sshll.u32 [#allocation14], 4
          %s593 = int_to_ptr.vmem [resolvable:$true] %s592
          %595 = dma.hbm_to_vmem [thread:$0]  %s591, 128, %s593, [#allocation13]
        $region24: #{_lambda_.1} parent=11 // pred_fallthru
          _
        // Predicated region
        $region25: #{_lambda_.1} parent=11 // pred_check
          %p596 = pneg %p126
        $region26: #{_lambda_.1} parent=11 // pred_check_branch
          %598 = sbr.rel (%p596) target = $region28
        $region27: #{_lambda_.1} parent=11 // pred_region
          %600 = vsyncadd [#allocation16], 0
          %s602 = sshll.u32 %s5, 4
          %s603 = int_to_ptr.hbm [resolvable:$true] %s602
          %s604 = sshll.u32 [#allocation15], 4
          %s605 = int_to_ptr.vmem [resolvable:$true] %s604
          %607 = dma.hbm_to_vmem [thread:$0]  %s603, 128, %s605, [#allocation16]
        $region28: #{_lambda_.1} parent=11 // pred_fallthru
          _
        // Predicated region
        $region29: #{_lambda_.1} parent=11 // pred_check
          %p608 = pneg %p147
        $region30: #{_lambda_.1} parent=11 // pred_check_branch
          %610 = sbr.rel (%p608) target = $region32
        $region31: #{_lambda_.1} parent=11 // pred_region
          _
        $region32: #{_lambda_.1} parent=11 // pred_fallthru
          _
        // Predicated region
        $region33: #{_lambda_.1} parent=11 // pred_check
          %p611 = pneg %p168
        $region34: #{_lambda_.1} parent=11 // pred_check_branch
          %613 = sbr.rel (%p611) target = $region36
        $region35: #{_lambda_.1} parent=11 // pred_region
          %615 = vsyncadd [#allocation16], 0
          %s617 = sshll.u32 %s7, 4
          %s618 = int_to_ptr.hbm [resolvable:$true] %s617
          %s619 = sshll.u32 [#allocation17], 4
          %s620 = int_to_ptr.vmem [resolvable:$true] %s619
          %622 = dma.hbm_to_vmem [thread:$0]  %s618, 16, %s620, [#allocation16]
        $region36: #{_lambda_.1} parent=11 // pred_fallthru
          _
        // Predicated region
        $region37: #{_lambda_.1} parent=11 // pred_check
          %p623 = pneg %p189
        $region38: #{_lambda_.1} parent=11 // pred_check_branch
          %625 = sbr.rel (%p623) target = $region40
        $region39: #{_lambda_.1} parent=11 // pred_region
          %627 = vsyncadd [#allocation19], 0
          %s629 = sshll.u32 %s8, 4
          %s630 = int_to_ptr.hbm [resolvable:$true] %s629
          %s631 = sshll.u32 [#allocation18], 4
          %s632 = int_to_ptr.vmem [resolvable:$true] %s631
          %634 = dma.hbm_to_vmem [thread:$0]  %s630, 16, %s632, [#allocation19]
        $region40: #{_lambda_.1} parent=11 // pred_fallthru
          _
        // Predicated region
        $region41: #{_lambda_.1} parent=11 // pred_check
          %p635 = pneg %p522
        $region42: #{_lambda_.1} parent=11 // pred_check_branch
          %637 = sbr.rel (%p635) target = $region44
        $region43: #{_lambda_.1} parent=11 // pred_region
          %639 = vsyncadd [#allocation13], 0
          %s641 = sshll.u32 %s22, 4
          %s642 = int_to_ptr.hbm [resolvable:$true] %s641
          %s643 = sshll.u32 [#allocation32], 4
          %s644 = int_to_ptr.vmem [resolvable:$true] %s643
          %646 = dma.hbm_to_vmem [thread:$0]  %s642, 256, %s644, [#allocation13]
        $region44: #{_lambda_.1} parent=11 // pred_fallthru
          _
      $region12: #{_lambda_.1} parent=5 // pred_fallthru
        _
      %p647 = scmp.lt.s32.totalorder %s42, 2
      // Predicated region
      $region45: #{_lambda_.1} parent=5 // pred_check
        %p648 = pneg %p647
      $region46: #{_lambda_.1} parent=5 // pred_check_branch
        %650 = sbr.rel (%p648) target = $region48
      $region47: #{_lambda_.1} parent=5 // pred_region
        // Predicated region
        $region49: #{_lambda_.1} parent=47 // pred_check
          %p651 = pneg %p209
        $region50: #{_lambda_.1} parent=47 // pred_check_branch
          %653 = sbr.rel (%p651) target = $region52
        $region51: #{_lambda_.1} parent=47 // pred_region
          %s654 = sand.u32 %s42, 1
          %s655 = scalar_lea.sflag [#allocation10], %s654
          %s656 = sand.u32 %s199, 1
          %s657 = smul.addr %s656, 192
          %s658 = scalar_lea.vmem [#allocation20], %s657
          %660 = vsyncadd %s655, 0
          %s661 = smul.addr %s42, 48
          %s662 = smul.addr %s661, 4
          %s663 = scalar_lea.hbm %s9, %s662
          %s664 = sshll.u32 %s663, 4
          %s665 = int_to_ptr.hbm [resolvable:$true] %s664
          %s666 = sshll.u32 %s658, 4
          %s667 = int_to_ptr.vmem [resolvable:$true] %s666
          %672 = dma.hbm_to_vmem [thread:$0]  %s665, 3072, %s667, %s655, 192, 192, 12
        $region52: #{_lambda_.1} parent=47 // pred_fallthru
          _
        // Predicated region
        $region53: #{_lambda_.1} parent=47 // pred_check
          %p673 = pneg %p235
        $region54: #{_lambda_.1} parent=47 // pred_check_branch
          %675 = sbr.rel (%p673) target = $region56
        $region55: #{_lambda_.1} parent=47 // pred_region
          %s676 = sand.u32 %s42, 1
          %s677 = scalar_lea.sflag [#allocation10], %s676
          %s678 = sand.u32 %s225, 1
          %s679 = smul.addr %s678, 3
          %s680 = scalar_lea.vmem [#allocation21], %s679
          %682 = vsyncadd %s677, 0
          %s683 = smul.addr %s42, 3
          %s684 = scalar_lea.hbm %s10, %s683
          %s686 = sshll.u32 %s684, 4
          %s687 = int_to_ptr.hbm [resolvable:$true] %s686
          %s688 = sshll.u32 %s680, 4
          %s689 = int_to_ptr.vmem [resolvable:$true] %s688
          %691 = dma.hbm_to_vmem [thread:$0]  %s687, 48, %s689, %s677
        $region56: #{_lambda_.1} parent=47 // pred_fallthru
          _
        // Predicated region
        $region57: #{_lambda_.1} parent=47 // pred_check
          %p692 = pneg %p261
        $region58: #{_lambda_.1} parent=47 // pred_check_branch
          %694 = sbr.rel (%p692) target = $region60
        $region59: #{_lambda_.1} parent=47 // pred_region
          %s695 = sand.u32 %s42, 1
          %s696 = scalar_lea.sflag [#allocation10], %s695
          %s697 = sand.u32 %s251, 1
          %s698 = smul.addr %s697, 64
          %s699 = scalar_lea.vmem [#allocation22], %s698
          %701 = vsyncadd %s696, 0
          %s702 = smul.addr %s42, 16
          %s703 = smul.addr %s702, 4
          %s704 = scalar_lea.hbm %s11, %s703
          %s705 = sshll.u32 %s704, 4
          %s706 = int_to_ptr.hbm [resolvable:$true] %s705
          %s707 = sshll.u32 %s699, 4
          %s708 = int_to_ptr.vmem [resolvable:$true] %s707
          %713 = dma.hbm_to_vmem [thread:$0]  %s706, 1024, %s708, %s696, 64, 64, 4
        $region60: #{_lambda_.1} parent=47 // pred_fallthru
          _
        // Predicated region
        $region61: #{_lambda_.1} parent=47 // pred_check
          %p714 = pneg %p287
        $region62: #{_lambda_.1} parent=47 // pred_check_branch
          %716 = sbr.rel (%p714) target = $region64
        $region63: #{_lambda_.1} parent=47 // pred_region
          %s717 = sand.u32 %s42, 1
          %s718 = scalar_lea.sflag [#allocation10], %s717
          %s719 = sand.u32 %s277, 1
          %s720 = scalar_lea.vmem [#allocation23], %s719
          %722 = vsyncadd %s718, 0
          %s723 = scalar_lea.hbm %s12, %s42
          %s725 = sshll.u32 %s723, 4
          %s726 = int_to_ptr.hbm [resolvable:$true] %s725
          %s727 = sshll.u32 %s720, 4
          %s728 = int_to_ptr.vmem [resolvable:$true] %s727
          %730 = dma.hbm_to_vmem [thread:$0]  %s726, 16, %s728, %s718
        $region64: #{_lambda_.1} parent=47 // pred_fallthru
          _
        // Predicated region
        $region65: #{_lambda_.1} parent=47 // pred_check
          %p731 = pneg %p313
        $region66: #{_lambda_.1} parent=47 // pred_check_branch
          %733 = sbr.rel (%p731) target = $region68
        $region67: #{_lambda_.1} parent=47 // pred_region
          %s734 = sand.u32 %s42, 1
          %s735 = scalar_lea.sflag [#allocation10], %s734
          %s736 = sand.u32 %s303, 1
          %s737 = scalar_lea.vmem [#allocation24], %s736
          %739 = vsyncadd %s735, 0
          %s740 = scalar_lea.hbm %s13, %s42
          %s742 = sshll.u32 %s740, 4
          %s743 = int_to_ptr.hbm [resolvable:$true] %s742
          %s744 = sshll.u32 %s737, 4
          %s745 = int_to_ptr.vmem [resolvable:$true] %s744
          %747 = dma.hbm_to_vmem [thread:$0]  %s743, 16, %s745, %s735
        $region68: #{_lambda_.1} parent=47 // pred_fallthru
          _
        // Predicated region
        $region69: #{_lambda_.1} parent=47 // pred_check
          %p748 = pneg %p339
        $region70: #{_lambda_.1} parent=47 // pred_check_branch
          %750 = sbr.rel (%p748) target = $region72
        $region71: #{_lambda_.1} parent=47 // pred_region
          %s751 = sand.u32 %s42, 1
          %s752 = scalar_lea.sflag [#allocation10], %s751
          %s753 = sand.u32 %s329, 1
          %s754 = scalar_lea.vmem [#allocation25], %s753
          %756 = vsyncadd %s752, 0
          %s757 = scalar_lea.hbm %s14, %s42
          %s759 = sshll.u32 %s757, 4
          %s760 = int_to_ptr.hbm [resolvable:$true] %s759
          %s761 = sshll.u32 %s754, 4
          %s762 = int_to_ptr.vmem [resolvable:$true] %s761
          %764 = dma.hbm_to_vmem [thread:$0]  %s760, 16, %s762, %s752
        $region72: #{_lambda_.1} parent=47 // pred_fallthru
          _
        // Predicated region
        $region73: #{_lambda_.1} parent=47 // pred_check
          %p765 = pneg %p365
        $region74: #{_lambda_.1} parent=47 // pred_check_branch
          %767 = sbr.rel (%p765) target = $region76
        $region75: #{_lambda_.1} parent=47 // pred_region
          %s768 = sand.u32 %s42, 1
          %s769 = scalar_lea.sflag [#allocation10], %s768
          %s770 = sand.u32 %s355, 1
          %s771 = smul.addr %s770, 128
          %s772 = scalar_lea.vmem [#allocation26], %s771
          %774 = vsyncadd %s769, 0
          %s775 = smul.addr %s42, 32
          %s776 = smul.addr %s775, 4
          %s777 = scalar_lea.hbm %s15, %s776
          %s778 = sshll.u32 %s777, 4
          %s779 = int_to_ptr.hbm [resolvable:$true] %s778
          %s780 = sshll.u32 %s772, 4
          %s781 = int_to_ptr.vmem [resolvable:$true] %s780
          %786 = dma.hbm_to_vmem [thread:$0]  %s779, 2048, %s781, %s769, 128, 128, 8
        $region76: #{_lambda_.1} parent=47 // pred_fallthru
          _
        // Predicated region
        $region77: #{_lambda_.1} parent=47 // pred_check
          %p787 = pneg %p391
        $region78: #{_lambda_.1} parent=47 // pred_check_branch
          %789 = sbr.rel (%p787) target = $region80
        $region79: #{_lambda_.1} parent=47 // pred_region
          %s790 = sand.u32 %s42, 1
          %s791 = scalar_lea.sflag [#allocation10], %s790
          %s792 = sand.u32 %s381, 1
          %s793 = smul.addr %s792, 2
          %s794 = scalar_lea.vmem [#allocation27], %s793
          %796 = vsyncadd %s791, 0
          %s797 = smul.addr %s42, 2
          %s798 = scalar_lea.hbm %s16, %s797
          %s800 = sshll.u32 %s798, 4
          %s801 = int_to_ptr.hbm [resolvable:$true] %s800
          %s802 = sshll.u32 %s794, 4
          %s803 = int_to_ptr.vmem [resolvable:$true] %s802
          %805 = dma.hbm_to_vmem [thread:$0]  %s801, 32, %s803, %s791
        $region80: #{_lambda_.1} parent=47 // pred_fallthru
          _
        // Predicated region
        $region81: #{_lambda_.1} parent=47 // pred_check
          %p806 = pneg %p417
        $region82: #{_lambda_.1} parent=47 // pred_check_branch
          %808 = sbr.rel (%p806) target = $region84
        $region83: #{_lambda_.1} parent=47 // pred_region
          %s809 = sand.u32 %s42, 1
          %s810 = scalar_lea.sflag [#allocation10], %s809
          %s811 = sand.u32 %s407, 1
          %s812 = smul.addr %s811, 128
          %s813 = scalar_lea.vmem [#allocation28], %s812
          %815 = vsyncadd %s810, 0
          %s816 = smul.addr %s42, 32
          %s817 = smul.addr %s816, 4
          %s818 = scalar_lea.hbm %s17, %s817
          %s819 = sshll.u32 %s818, 4
          %s820 = int_to_ptr.hbm [resolvable:$true] %s819
          %s821 = sshll.u32 %s813, 4
          %s822 = int_to_ptr.vmem [resolvable:$true] %s821
          %827 = dma.hbm_to_vmem [thread:$0]  %s820, 2048, %s822, %s810, 64, 64, 4
        $region84: #{_lambda_.1} parent=47 // pred_fallthru
          _
        // Predicated region
        $region85: #{_lambda_.1} parent=47 // pred_check
          %p828 = pneg %p443
        $region86: #{_lambda_.1} parent=47 // pred_check_branch
          %830 = sbr.rel (%p828) target = $region88
        $region87: #{_lambda_.1} parent=47 // pred_region
          %s831 = sand.u32 %s42, 1
          %s832 = scalar_lea.sflag [#allocation10], %s831
          %s833 = sand.u32 %s433, 1
          %s834 = scalar_lea.vmem [#allocation29], %s833
          %836 = vsyncadd %s832, 0
          %s837 = scalar_lea.hbm %s18, %s42
          %s839 = sshll.u32 %s837, 4
          %s840 = int_to_ptr.hbm [resolvable:$true] %s839
          %s841 = sshll.u32 %s834, 4
          %s842 = int_to_ptr.vmem [resolvable:$true] %s841
          %844 = dma.hbm_to_vmem [thread:$0]  %s840, 16, %s842, %s832
        $region88: #{_lambda_.1} parent=47 // pred_fallthru
          _
        // Predicated region
        $region89: #{_lambda_.1} parent=47 // pred_check
          %p845 = pneg %p469
        $region90: #{_lambda_.1} parent=47 // pred_check_branch
          %847 = sbr.rel (%p845) target = $region92
        $region91: #{_lambda_.1} parent=47 // pred_region
          %s848 = sand.u32 %s42, 1
          %s849 = scalar_lea.sflag [#allocation10], %s848
          %s850 = sand.u32 %s459, 1
          %s851 = scalar_lea.vmem [#allocation30], %s850
          %853 = vsyncadd %s849, 0
          %s854 = scalar_lea.hbm %s19, %s42
          %s856 = sshll.u32 %s854, 4
          %s857 = int_to_ptr.hbm [resolvable:$true] %s856
          %s858 = sshll.u32 %s851, 4
          %s859 = int_to_ptr.vmem [resolvable:$true] %s858
          %861 = dma.hbm_to_vmem [thread:$0]  %s857, 16, %s859, %s849
        $region92: #{_lambda_.1} parent=47 // pred_fallthru
          _
        // Predicated region
        $region93: #{_lambda_.1} parent=47 // pred_check
          %p862 = pneg %p495
        $region94: #{_lambda_.1} parent=47 // pred_check_branch
          %864 = sbr.rel (%p862) target = $region96
        $region95: #{_lambda_.1} parent=47 // pred_region
          %s865 = sand.u32 %s42, 1
          %s866 = scalar_lea.sflag [#allocation10], %s865
          %s867 = sand.u32 %s485, 1
          %s868 = scalar_lea.vmem [#allocation31], %s867
          %870 = vsyncadd %s866, 0
          %s871 = scalar_lea.hbm %s20, %s42
          %s873 = sshll.u32 %s871, 4
          %s874 = int_to_ptr.hbm [resolvable:$true] %s873
          %s875 = sshll.u32 %s868, 4
          %s876 = int_to_ptr.vmem [resolvable:$true] %s875
          %878 = dma.hbm_to_vmem [thread:$0]  %s874, 16, %s876, %s866
        $region96: #{_lambda_.1} parent=47 // pred_fallthru
          _
      $region48: #{_lambda_.1} parent=5 // pred_fallthru
        _
      %p879 = scmp.le.s32.totalorder 1, %s42
      %p880 = scmp.lt.s32.totalorder %s42, 3
      %p881 = pnand %p879, %p880
      %p882 = pneg %p881
      // Predicated region
      $region97: #{_lambda_.1} parent=5 // pred_check
        _
      $region98: #{_lambda_.1} parent=5 // pred_check_branch
        %884 = sbr.rel (%p881) target = $region100
      $region99: #{_lambda_.1} parent=5 // pred_region
        %s885 = ssub.s32 %s42, 1
        // Predicated region
        $region101: #{_lambda_.1} parent=99 // pred_check
          %p886 = pneg %p63
        $region102: #{_lambda_.1} parent=99 // pred_check_branch
          %888 = sbr.rel (%p886) target = $region104
        $region103: #{_lambda_.1} parent=99 // pred_region
          %890 = dma.done [#allocation10], 16
        $region104: #{_lambda_.1} parent=99 // pred_fallthru
          _
        // Predicated region
        $region105: #{_lambda_.1} parent=99 // pred_check
          %p891 = pneg %p84
        $region106: #{_lambda_.1} parent=99 // pred_check_branch
          %893 = sbr.rel (%p891) target = $region108
        $region107: #{_lambda_.1} parent=99 // pred_region
          %895 = dma.done [#allocation13], 8192
        $region108: #{_lambda_.1} parent=99 // pred_fallthru
          _
        // Predicated region
        $region109: #{_lambda_.1} parent=99 // pred_check
          %p896 = pneg %p105
        $region110: #{_lambda_.1} parent=99 // pred_check_branch
          %898 = sbr.rel (%p896) target = $region112
        $region111: #{_lambda_.1} parent=99 // pred_region
          %900 = dma.done [#allocation13], 128
        $region112: #{_lambda_.1} parent=99 // pred_fallthru
          _
        // Predicated region
        $region113: #{_lambda_.1} parent=99 // pred_check
          %p901 = pneg %p126
        $region114: #{_lambda_.1} parent=99 // pred_check_branch
          %903 = sbr.rel (%p901) target = $region116
        $region115: #{_lambda_.1} parent=99 // pred_region
          %905 = dma.done [#allocation16], 128
        $region116: #{_lambda_.1} parent=99 // pred_fallthru
          _
        // Predicated region
        $region117: #{_lambda_.1} parent=99 // pred_check
          %p906 = pneg %p168
        $region118: #{_lambda_.1} parent=99 // pred_check_branch
          %908 = sbr.rel (%p906) target = $region120
        $region119: #{_lambda_.1} parent=99 // pred_region
          %910 = dma.done [#allocation16], 16
        $region120: #{_lambda_.1} parent=99 // pred_fallthru
          _
        // Predicated region
        $region121: #{_lambda_.1} parent=99 // pred_check
          %p911 = pneg %p189
        $region122: #{_lambda_.1} parent=99 // pred_check_branch
          %913 = sbr.rel (%p911) target = $region124
        $region123: #{_lambda_.1} parent=99 // pred_region
          %915 = dma.done [#allocation19], 16
        $region124: #{_lambda_.1} parent=99 // pred_fallthru
          _
        %s916 = sand.u32 %s47, 1
        %s917 = scalar_lea.sflag [#allocation10], %s916
        %s918 = sand.u32 %s202, 1
        %s919 = smul.addr %s918, 192
        %s920 = scalar_lea.vmem [#allocation20], %s919
        // Predicated region
        $region125: #{_lambda_.1} parent=99 // pred_check
          %p921 = pneg %p215
        $region126: #{_lambda_.1} parent=99 // pred_check_branch
          %923 = sbr.rel (%p921) target = $region128
        $region127: #{_lambda_.1} parent=99 // pred_region
          %925 = dma.done %s917, 3072
        $region128: #{_lambda_.1} parent=99 // pred_fallthru
          _
        %s926 = sand.u32 %s47, 1
        %s927 = scalar_lea.sflag [#allocation10], %s926
        %s928 = sand.u32 %s228, 1
        %s929 = smul.addr %s928, 3
        %s930 = scalar_lea.vmem [#allocation21], %s929
        // Predicated region
        $region129: #{_lambda_.1} parent=99 // pred_check
          %p931 = pneg %p241
        $region130: #{_lambda_.1} parent=99 // pred_check_branch
          %933 = sbr.rel (%p931) target = $region132
        $region131: #{_lambda_.1} parent=99 // pred_region
          %935 = dma.done %s927, 48
        $region132: #{_lambda_.1} parent=99 // pred_fallthru
          _
        %s936 = sand.u32 %s47, 1
        %s937 = scalar_lea.sflag [#allocation10], %s936
        %s938 = sand.u32 %s254, 1
        %s939 = smul.addr %s938, 64
        %s940 = scalar_lea.vmem [#allocation22], %s939
        // Predicated region
        $region133: #{_lambda_.1} parent=99 // pred_check
          %p941 = pneg %p267
        $region134: #{_lambda_.1} parent=99 // pred_check_branch
          %943 = sbr.rel (%p941) target = $region136
        $region135: #{_lambda_.1} parent=99 // pred_region
          %945 = dma.done %s937, 1024
        $region136: #{_lambda_.1} parent=99 // pred_fallthru
          _
        %s946 = sand.u32 %s47, 1
        %s947 = scalar_lea.sflag [#allocation10], %s946
        %s948 = sand.u32 %s280, 1
        %s949 = scalar_lea.vmem [#allocation23], %s948
        // Predicated region
        $region137: #{_lambda_.1} parent=99 // pred_check
          %p950 = pneg %p293
        $region138: #{_lambda_.1} parent=99 // pred_check_branch
          %952 = sbr.rel (%p950) target = $region140
        $region139: #{_lambda_.1} parent=99 // pred_region
          %954 = dma.done %s947, 16
        $region140: #{_lambda_.1} parent=99 // pred_fallthru
          _
        %s955 = sand.u32 %s47, 1
        %s956 = scalar_lea.sflag [#allocation10], %s955
        %s957 = sand.u32 %s306, 1
        %s958 = scalar_lea.vmem [#allocation24], %s957
        // Predicated region
        $region141: #{_lambda_.1} parent=99 // pred_check
          %p959 = pneg %p319
        $region142: #{_lambda_.1} parent=99 // pred_check_branch
          %961 = sbr.rel (%p959) target = $region144
        $region143: #{_lambda_.1} parent=99 // pred_region
          %963 = dma.done %s956, 16
        $region144: #{_lambda_.1} parent=99 // pred_fallthru
          _
        %s964 = sand.u32 %s47, 1
        %s965 = scalar_lea.sflag [#allocation10], %s964
        %s966 = sand.u32 %s332, 1
        %s967 = scalar_lea.vmem [#allocation25], %s966
        // Predicated region
        $region145: #{_lambda_.1} parent=99 // pred_check
          %p968 = pneg %p345
        $region146: #{_lambda_.1} parent=99 // pred_check_branch
          %970 = sbr.rel (%p968) target = $region148
        $region147: #{_lambda_.1} parent=99 // pred_region
          %972 = dma.done %s965, 16
        $region148: #{_lambda_.1} parent=99 // pred_fallthru
          _
        %s973 = sand.u32 %s47, 1
        %s974 = scalar_lea.sflag [#allocation10], %s973
        %s975 = sand.u32 %s358, 1
        %s976 = smul.addr %s975, 128
        %s977 = scalar_lea.vmem [#allocation26], %s976
        // Predicated region
        $region149: #{_lambda_.1} parent=99 // pred_check
          %p978 = pneg %p371
        $region150: #{_lambda_.1} parent=99 // pred_check_branch
          %980 = sbr.rel (%p978) target = $region152
        $region151: #{_lambda_.1} parent=99 // pred_region
          %982 = dma.done %s974, 2048
        $region152: #{_lambda_.1} parent=99 // pred_fallthru
          _
        %s983 = sand.u32 %s47, 1
        %s984 = scalar_lea.sflag [#allocation10], %s983
        %s985 = sand.u32 %s384, 1
        %s986 = smul.addr %s985, 2
        %s987 = scalar_lea.vmem [#allocation27], %s986
        // Predicated region
        $region153: #{_lambda_.1} parent=99 // pred_check
          %p988 = pneg %p397
        $region154: #{_lambda_.1} parent=99 // pred_check_branch
          %990 = sbr.rel (%p988) target = $region156
        $region155: #{_lambda_.1} parent=99 // pred_region
          %992 = dma.done %s984, 32
        $region156: #{_lambda_.1} parent=99 // pred_fallthru
          _
        %s993 = sand.u32 %s47, 1
        %s994 = scalar_lea.sflag [#allocation10], %s993
        %s995 = sand.u32 %s410, 1
        %s996 = smul.addr %s995, 128
        %s997 = scalar_lea.vmem [#allocation28], %s996
        // Predicated region
        $region157: #{_lambda_.1} parent=99 // pred_check
          %p998 = pneg %p423
        $region158: #{_lambda_.1} parent=99 // pred_check_branch
          %1000 = sbr.rel (%p998) target = $region160
        $region159: #{_lambda_.1} parent=99 // pred_region
          %1002 = dma.done %s994, 2048
        $region160: #{_lambda_.1} parent=99 // pred_fallthru
          _
        %s1003 = sand.u32 %s47, 1
        %s1004 = scalar_lea.sflag [#allocation10], %s1003
        %s1005 = sand.u32 %s436, 1
        %s1006 = scalar_lea.vmem [#allocation29], %s1005
        // Predicated region
        $region161: #{_lambda_.1} parent=99 // pred_check
          %p1007 = pneg %p449
        $region162: #{_lambda_.1} parent=99 // pred_check_branch
          %1009 = sbr.rel (%p1007) target = $region164
        $region163: #{_lambda_.1} parent=99 // pred_region
          %1011 = dma.done %s1004, 16
        $region164: #{_lambda_.1} parent=99 // pred_fallthru
          _
        %s1012 = sand.u32 %s47, 1
        %s1013 = scalar_lea.sflag [#allocation10], %s1012
        %s1014 = sand.u32 %s462, 1
        %s1015 = scalar_lea.vmem [#allocation30], %s1014
        // Predicated region
        $region165: #{_lambda_.1} parent=99 // pred_check
          %p1016 = pneg %p475
        $region166: #{_lambda_.1} parent=99 // pred_check_branch
          %1018 = sbr.rel (%p1016) target = $region168
        $region167: #{_lambda_.1} parent=99 // pred_region
          %1020 = dma.done %s1013, 16
        $region168: #{_lambda_.1} parent=99 // pred_fallthru
          _
        %s1021 = sand.u32 %s47, 1
        %s1022 = scalar_lea.sflag [#allocation10], %s1021
        %s1023 = sand.u32 %s488, 1
        %s1024 = scalar_lea.vmem [#allocation31], %s1023
        // Predicated region
        $region169: #{_lambda_.1} parent=99 // pred_check
          %p1025 = pneg %p501
        $region170: #{_lambda_.1} parent=99 // pred_check_branch
          %1027 = sbr.rel (%p1025) target = $region172
        $region171: #{_lambda_.1} parent=99 // pred_region
          %1029 = dma.done %s1022, 16
        $region172: #{_lambda_.1} parent=99 // pred_fallthru
          _
        // Predicated region
        $region173: #{_lambda_.1} parent=99 // pred_check
          %p1030 = pneg %p522
        $region174: #{_lambda_.1} parent=99 // pred_check_branch
          %1032 = sbr.rel (%p1030) target = $region176
        $region175: #{_lambda_.1} parent=99 // pred_region
          %1034 = dma.done [#allocation13], 256
        $region176: #{_lambda_.1} parent=99 // pred_fallthru
          _
        %p1035 = pneg %p63
        %p1036 = pneg %p60
        %p1037 = pneg %p84
        %p1038 = pneg %p81
        %p1039 = pneg %p105
        %p1040 = pneg %p102
        %p1041 = pneg %p126
        %p1042 = pneg %p123
        %p1043 = pneg %p147
        %p1044 = pneg %p144
        %p1045 = pneg %p168
        %p1046 = pneg %p165
        %p1047 = pneg %p189
        %p1048 = pneg %p186
        %s1049 = sand.u32 %s47, 1
        %s1050 = scalar_lea.sflag [#allocation10], %s1049
        %s1051 = sand.u32 %s202, 1
        %s1052 = smul.addr %s1051, 192
        %s1053 = scalar_lea.vmem [#allocation20], %s1052
        %p1054 = pneg %p215
        %p1055 = pneg %p212
        %s1056 = sand.u32 %s47, 1
        %s1057 = scalar_lea.sflag [#allocation10], %s1056
        %s1058 = sand.u32 %s228, 1
        %s1059 = smul.addr %s1058, 3
        %s1060 = scalar_lea.vmem [#allocation21], %s1059
        %p1061 = pneg %p241
        %p1062 = pneg %p238
        %s1063 = sand.u32 %s47, 1
        %s1064 = scalar_lea.sflag [#allocation10], %s1063
        %s1065 = sand.u32 %s254, 1
        %s1066 = smul.addr %s1065, 64
        %s1067 = scalar_lea.vmem [#allocation22], %s1066
        %p1068 = pneg %p267
        %p1069 = pneg %p264
        %s1070 = sand.u32 %s47, 1
        %s1071 = scalar_lea.sflag [#allocation10], %s1070
        %s1072 = sand.u32 %s280, 1
        %s1073 = scalar_lea.vmem [#allocation23], %s1072
        %p1074 = pneg %p293
        %p1075 = pneg %p290
        %s1076 = sand.u32 %s47, 1
        %s1077 = scalar_lea.sflag [#allocation10], %s1076
        %s1078 = sand.u32 %s306, 1
        %s1079 = scalar_lea.vmem [#allocation24], %s1078
        %p1080 = pneg %p319
        %p1081 = pneg %p316
        %s1082 = sand.u32 %s47, 1
        %s1083 = scalar_lea.sflag [#allocation10], %s1082
        %s1084 = sand.u32 %s332, 1
        %s1085 = scalar_lea.vmem [#allocation25], %s1084
        %p1086 = pneg %p345
        %p1087 = pneg %p342
        %s1088 = sand.u32 %s47, 1
        %s1089 = scalar_lea.sflag [#allocation10], %s1088
        %s1090 = sand.u32 %s358, 1
        %s1091 = smul.addr %s1090, 128
        %s1092 = scalar_lea.vmem [#allocation26], %s1091
        %p1093 = pneg %p371
        %p1094 = pneg %p368
        %s1095 = sand.u32 %s47, 1
        %s1096 = scalar_lea.sflag [#allocation10], %s1095
        %s1097 = sand.u32 %s384, 1
        %s1098 = smul.addr %s1097, 2
        %s1099 = scalar_lea.vmem [#allocation27], %s1098
        %p1100 = pneg %p397
        %p1101 = pneg %p394
        %s1102 = sand.u32 %s47, 1
        %s1103 = scalar_lea.sflag [#allocation10], %s1102
        %s1104 = sand.u32 %s410, 1
        %s1105 = smul.addr %s1104, 128
        %s1106 = scalar_lea.vmem [#allocation28], %s1105
        %p1107 = pneg %p423
        %p1108 = pneg %p420
        %s1109 = sand.u32 %s47, 1
        %s1110 = scalar_lea.sflag [#allocation10], %s1109
        %s1111 = sand.u32 %s436, 1
        %s1112 = scalar_lea.vmem [#allocation29], %s1111
        %p1113 = pneg %p449
        %p1114 = pneg %p446
        %s1115 = sand.u32 %s47, 1
        %s1116 = scalar_lea.sflag [#allocation10], %s1115
        %s1117 = sand.u32 %s462, 1
        %s1118 = scalar_lea.vmem [#allocation30], %s1117
        %p1119 = pneg %p475
        %p1120 = pneg %p472
        %s1121 = sand.u32 %s47, 1
        %s1122 = scalar_lea.sflag [#allocation10], %s1121
        %s1123 = sand.u32 %s488, 1
        %s1124 = scalar_lea.vmem [#allocation31], %s1123
        %p1125 = pneg %p501
        %p1126 = pneg %p498
        %p1127 = pneg %p522
        %p1128 = pneg %p519
        %p1129 = pneg %p543
        %p1130 = pneg %p540
        %p1131 = scmp.eq.s32.totalorder %s47, 0
        // Predicated region
        $region177: #{_lambda_.1} parent=99 // pred_check
          %p1132 = pneg %p1131
        $region178: #{_lambda_.1} parent=99 // pred_check_branch
          %1134 = sbr.rel (%p1132) target = $region180
        $region179: #{_lambda_.1} parent=99 // pred_region
          %s1135 = sld [smem:[#allocation8]]
          %s1136 = scalar_lea.hbm %s4, %s1135
          // Predicated region
          $region181: #{_lambda_.1} parent=179 // pred_check
            _
          $region182: #{_lambda_.1} parent=179 // pred_check_branch
            %1138 = sbr.rel target = $region184
          $region183: #{_lambda_.1} parent=179 // pred_region
            %1139 = sst [smem:[#allocation36]] [#allocation35]
            %1140 = sst [smem:[#allocation37]] [#allocation34]
          $region184: #{_lambda_.1} parent=179 // pred_fallthru
            _
          %1142 = shalt.err (0)
          %s1144 = sshll.u32 %s1136, 4
          %s1145 = int_to_ptr.hbm [resolvable:$true] %s1144
          %s1146 = sshll.u32 [#allocation3], 4
          %s1147 = int_to_ptr.vmem [resolvable:$true] %s1146
          %1149 = dma.hbm_to_vmem [thread:$0]  %s1145, 16, %s1147, [#allocation4]
          %s1150 = sld [smem:[#allocation8 + $0x1]]
          %s1151 = scalar_lea.hbm %s4, %s1150
          %s1152 = scalar_lea.vmem [#allocation3], 1
          %s1153 = scalar_lea.sflag [#allocation4], 1
          // Predicated region
          $region185: #{_lambda_.1} parent=179 // pred_check
            _
          $region186: #{_lambda_.1} parent=179 // pred_check_branch
            %1155 = sbr.rel target = $region188
          $region187: #{_lambda_.1} parent=179 // pred_region
            %1156 = sst [smem:[#allocation36]] [#allocation39]
            %1157 = sst [smem:[#allocation37]] [#allocation38]
          $region188: #{_lambda_.1} parent=179 // pred_fallthru
            _
          %1159 = shalt.err (0)
          %s1161 = sshll.u32 %s1151, 4
          %s1162 = int_to_ptr.hbm [resolvable:$true] %s1161
          %s1163 = sshll.u32 %s1152, 4
          %s1164 = int_to_ptr.vmem [resolvable:$true] %s1163
          %1166 = dma.hbm_to_vmem [thread:$0]  %s1162, 16, %s1164, %s1153
          %s1167 = sld [smem:[#allocation8 + $0x2]]
          %s1168 = scalar_lea.hbm %s4, %s1167
          %s1169 = scalar_lea.vmem [#allocation3], 2
          %s1170 = scalar_lea.sflag [#allocation4], 2
          // Predicated region
          $region189: #{_lambda_.1} parent=179 // pred_check
            _
          $region190: #{_lambda_.1} parent=179 // pred_check_branch
            %1172 = sbr.rel target = $region192
          $region191: #{_lambda_.1} parent=179 // pred_region
            %1173 = sst [smem:[#allocation36]] [#allocation41]
            %1174 = sst [smem:[#allocation37]] [#allocation40]
          $region192: #{_lambda_.1} parent=179 // pred_fallthru
            _
          %1176 = shalt.err (0)
          %s1178 = sshll.u32 %s1168, 4
          %s1179 = int_to_ptr.hbm [resolvable:$true] %s1178
          %s1180 = sshll.u32 %s1169, 4
          %s1181 = int_to_ptr.vmem [resolvable:$true] %s1180
          %1183 = dma.hbm_to_vmem [thread:$0]  %s1179, 16, %s1181, %s1170
          %s1184 = sld [smem:[#allocation8 + $0x3]]
          %s1185 = scalar_lea.hbm %s4, %s1184
          %s1186 = scalar_lea.vmem [#allocation3], 3
          %s1187 = scalar_lea.sflag [#allocation4], 3
          // Predicated region
          $region193: #{_lambda_.1} parent=179 // pred_check
            _
          $region194: #{_lambda_.1} parent=179 // pred_check_branch
            %1189 = sbr.rel target = $region196
          $region195: #{_lambda_.1} parent=179 // pred_region
            %1190 = sst [smem:[#allocation36]] [#allocation43]
            %1191 = sst [smem:[#allocation37]] [#allocation42]
          $region196: #{_lambda_.1} parent=179 // pred_fallthru
            _
          %1193 = shalt.err (0)
          %s1195 = sshll.u32 %s1185, 4
          %s1196 = int_to_ptr.hbm [resolvable:$true] %s1195
          %s1197 = sshll.u32 %s1186, 4
          %s1198 = int_to_ptr.vmem [resolvable:$true] %s1197
          %1200 = dma.hbm_to_vmem [thread:$0]  %s1196, 16, %s1198, %s1187
          %s1201 = sld [smem:[#allocation8 + $0x4]]
          %s1202 = scalar_lea.hbm %s4, %s1201
          %s1203 = scalar_lea.vmem [#allocation3], 4
          %s1204 = scalar_lea.sflag [#allocation4], 4
          // Predicated region
          $region197: #{_lambda_.1} parent=179 // pred_check
            _
          $region198: #{_lambda_.1} parent=179 // pred_check_branch
            %1206 = sbr.rel target = $region200
          $region199: #{_lambda_.1} parent=179 // pred_region
            %1207 = sst [smem:[#allocation36]] [#allocation45]
            %1208 = sst [smem:[#allocation37]] [#allocation44]
          $region200: #{_lambda_.1} parent=179 // pred_fallthru
            _
          %1210 = shalt.err (0)
          %s1212 = sshll.u32 %s1202, 4
          %s1213 = int_to_ptr.hbm [resolvable:$true] %s1212
          %s1214 = sshll.u32 %s1203, 4
          %s1215 = int_to_ptr.vmem [resolvable:$true] %s1214
          %1217 = dma.hbm_to_vmem [thread:$0]  %s1213, 16, %s1215, %s1204
          %s1218 = sld [smem:[#allocation8 + $0x5]]
          %s1219 = scalar_lea.hbm %s4, %s1218
          %s1220 = scalar_lea.vmem [#allocation3], 5
          %s1221 = scalar_lea.sflag [#allocation4], 5
          // Predicated region
          $region201: #{_lambda_.1} parent=179 // pred_check
            _
          $region202: #{_lambda_.1} parent=179 // pred_check_branch
            %1223 = sbr.rel target = $region204
          $region203: #{_lambda_.1} parent=179 // pred_region
            %1224 = sst [smem:[#allocation36]] [#allocation47]
            %1225 = sst [smem:[#allocation37]] [#allocation46]
          $region204: #{_lambda_.1} parent=179 // pred_fallthru
            _
          %1227 = shalt.err (0)
          %s1229 = sshll.u32 %s1219, 4
          %s1230 = int_to_ptr.hbm [resolvable:$true] %s1229
          %s1231 = sshll.u32 %s1220, 4
          %s1232 = int_to_ptr.vmem [resolvable:$true] %s1231
          %1234 = dma.hbm_to_vmem [thread:$0]  %s1230, 16, %s1232, %s1221
          %s1235 = sld [smem:[#allocation8 + $0x6]]
          %s1236 = scalar_lea.hbm %s4, %s1235
          %s1237 = scalar_lea.vmem [#allocation3], 6
          %s1238 = scalar_lea.sflag [#allocation4], 6
          // Predicated region
          $region205: #{_lambda_.1} parent=179 // pred_check
            _
          $region206: #{_lambda_.1} parent=179 // pred_check_branch
            %1240 = sbr.rel target = $region208
          $region207: #{_lambda_.1} parent=179 // pred_region
            %1241 = sst [smem:[#allocation36]] [#allocation49]
            %1242 = sst [smem:[#allocation37]] [#allocation48]
          $region208: #{_lambda_.1} parent=179 // pred_fallthru
            _
          %1244 = shalt.err (0)
          %s1246 = sshll.u32 %s1236, 4
          %s1247 = int_to_ptr.hbm [resolvable:$true] %s1246
          %s1248 = sshll.u32 %s1237, 4
          %s1249 = int_to_ptr.vmem [resolvable:$true] %s1248
          %1251 = dma.hbm_to_vmem [thread:$0]  %s1247, 16, %s1249, %s1238
          %s1252 = sld [smem:[#allocation8 + $0x7]]
          %s1253 = scalar_lea.hbm %s4, %s1252
          %s1254 = scalar_lea.vmem [#allocation3], 7
          %s1255 = scalar_lea.sflag [#allocation4], 7
          // Predicated region
          $region209: #{_lambda_.1} parent=179 // pred_check
            _
          $region210: #{_lambda_.1} parent=179 // pred_check_branch
            %1257 = sbr.rel target = $region212
          $region211: #{_lambda_.1} parent=179 // pred_region
            %1258 = sst [smem:[#allocation36]] [#allocation51]
            %1259 = sst [smem:[#allocation37]] [#allocation50]
          $region212: #{_lambda_.1} parent=179 // pred_fallthru
            _
          %1261 = shalt.err (0)
          %s1263 = sshll.u32 %s1253, 4
          %s1264 = int_to_ptr.hbm [resolvable:$true] %s1263
          %s1265 = sshll.u32 %s1254, 4
          %s1266 = int_to_ptr.vmem [resolvable:$true] %s1265
          %1268 = dma.hbm_to_vmem [thread:$0]  %s1264, 16, %s1266, %s1255
          // Predicated region
          $region213: #{_lambda_.1} parent=179 // pred_check
            _
          $region214: #{_lambda_.1} parent=179 // pred_check_branch
            %1270 = sbr.rel target = $region216
          $region215: #{_lambda_.1} parent=179 // pred_region
            %1271 = sst [smem:[#allocation36]] [#allocation53]
            %1272 = sst [smem:[#allocation37]] [#allocation52]
          $region216: #{_lambda_.1} parent=179 // pred_fallthru
            _
          %1274 = shalt.err (0)
          %s1276 = sshll.u32 %s21, 4
          %s1277 = int_to_ptr.hbm [resolvable:$true] %s1276
          %s1278 = sshll.u32 [#allocation5], 4
          %s1279 = int_to_ptr.vmem [resolvable:$true] %s1278
          %1281 = dma.hbm_to_vmem [thread:$0]  %s1277, 2048, %s1279, [#allocation6]
          %v1282 = vld [vmem:[#allocation9] sm:$0x1]
          %v1283 = vpack.c.bf16 %v1282, %v1282
          %v1284 = vld [vmem:[#allocation12] sm:$0xf]
          %v1285 = vld [vmem:[#allocation12 + $0x4] sm:$0xf]
          %v1286 = vld [vmem:[#allocation12 + $0x8] sm:$0xf]
          %v1287 = vld [vmem:[#allocation12 + $0xc] sm:$0xf]
          %v1288 = vld [vmem:[#allocation12 + $0x10] sm:$0xf]
          %v1289 = vld [vmem:[#allocation12 + $0x14] sm:$0xf]
          %v1290 = vld [vmem:[#allocation12 + $0x18] sm:$0xf]
          %v1291 = vld [vmem:[#allocation12 + $0x1c] sm:$0xf]
          %v1292 = vld [vmem:[#allocation12 + $0x20] sm:$0xf]
          %v1293 = vld [vmem:[#allocation12 + $0x24] sm:$0xf]
          %v1294 = vld [vmem:[#allocation12 + $0x28] sm:$0xf]
          %v1295 = vld [vmem:[#allocation12 + $0x2c] sm:$0xf]
          %v1296 = vld [vmem:[#allocation12 + $0x30] sm:$0xf]
          %v1297 = vld [vmem:[#allocation12 + $0x34] sm:$0xf]
          %v1298 = vld [vmem:[#allocation12 + $0x38] sm:$0xf]
          %v1299 = vld [vmem:[#allocation12 + $0x3c] sm:$0xf]
          %v1300 = vld [vmem:[#allocation12 + $0x40] sm:$0xf]
          %v1301 = vld [vmem:[#allocation12 + $0x44] sm:$0xf]
          %v1302 = vld [vmem:[#allocation12 + $0x48] sm:$0xf]
          %v1303 = vld [vmem:[#allocation12 + $0x4c] sm:$0xf]
          %v1304 = vld [vmem:[#allocation12 + $0x50] sm:$0xf]
          %v1305 = vld [vmem:[#allocation12 + $0x54] sm:$0xf]
          %v1306 = vld [vmem:[#allocation12 + $0x58] sm:$0xf]
          %v1307 = vld [vmem:[#allocation12 + $0x5c] sm:$0xf]
          %v1308 = vld [vmem:[#allocation12 + $0x60] sm:$0xf]
          %v1309 = vld [vmem:[#allocation12 + $0x64] sm:$0xf]
          %v1310 = vld [vmem:[#allocation12 + $0x68] sm:$0xf]
          %v1311 = vld [vmem:[#allocation12 + $0x6c] sm:$0xf]
          %v1312 = vld [vmem:[#allocation12 + $0x70] sm:$0xf]
          %v1313 = vld [vmem:[#allocation12 + $0x74] sm:$0xf]
          %v1314 = vld [vmem:[#allocation12 + $0x78] sm:$0xf]
          %v1315 = vld [vmem:[#allocation12 + $0x7c] sm:$0xf]
          %v1316 = vld [vmem:[#allocation12 + $0x80] sm:$0xf]
          %v1317 = vld [vmem:[#allocation12 + $0x84] sm:$0xf]
          %v1318 = vld [vmem:[#allocation12 + $0x88] sm:$0xf]
          %v1319 = vld [vmem:[#allocation12 + $0x8c] sm:$0xf]
          %v1320 = vld [vmem:[#allocation12 + $0x90] sm:$0xf]
          %v1321 = vld [vmem:[#allocation12 + $0x94] sm:$0xf]
          %v1322 = vld [vmem:[#allocation12 + $0x98] sm:$0xf]
          %v1323 = vld [vmem:[#allocation12 + $0x9c] sm:$0xf]
          %v1324 = vld [vmem:[#allocation12 + $0xa0] sm:$0xf]
          %v1325 = vld [vmem:[#allocation12 + $0xa4] sm:$0xf]
          %v1326 = vld [vmem:[#allocation12 + $0xa8] sm:$0xf]
          %v1327 = vld [vmem:[#allocation12 + $0xac] sm:$0xf]
          %v1328 = vld [vmem:[#allocation12 + $0xb0] sm:$0xf]
          %v1329 = vld [vmem:[#allocation12 + $0xb4] sm:$0xf]
          %v1330 = vld [vmem:[#allocation12 + $0xb8] sm:$0xf]
          %v1331 = vld [vmem:[#allocation12 + $0xbc] sm:$0xf]
          %v1332 = vld [vmem:[#allocation12 + $0xc0] sm:$0xf]
          %v1333 = vld [vmem:[#allocation12 + $0xc4] sm:$0xf]
          %v1334 = vld [vmem:[#allocation12 + $0xc8] sm:$0xf]
          %v1335 = vld [vmem:[#allocation12 + $0xcc] sm:$0xf]
          %v1336 = vld [vmem:[#allocation12 + $0xd0] sm:$0xf]
          %v1337 = vld [vmem:[#allocation12 + $0xd4] sm:$0xf]
          %v1338 = vld [vmem:[#allocation12 + $0xd8] sm:$0xf]
          %v1339 = vld [vmem:[#allocation12 + $0xdc] sm:$0xf]
          %v1340 = vld [vmem:[#allocation12 + $0xe0] sm:$0xf]
          %v1341 = vld [vmem:[#allocation12 + $0xe4] sm:$0xf]
          %v1342 = vld [vmem:[#allocation12 + $0xe8] sm:$0xf]
          %v1343 = vld [vmem:[#allocation12 + $0xec] sm:$0xf]
          %v1344 = vld [vmem:[#allocation12 + $0xf0] sm:$0xf]
          %v1345 = vld [vmem:[#allocation12 + $0xf4] sm:$0xf]
          %v1346 = vld [vmem:[#allocation12 + $0xf8] sm:$0xf]
          %v1347 = vld [vmem:[#allocation12 + $0xfc] sm:$0xf]
          %v1348 = vld [vmem:[#allocation12 + $0x100] sm:$0xf]
          %v1349 = vld [vmem:[#allocation12 + $0x104] sm:$0xf]
          %v1350 = vld [vmem:[#allocation12 + $0x108] sm:$0xf]
          %v1351 = vld [vmem:[#allocation12 + $0x10c] sm:$0xf]
          %v1352 = vld [vmem:[#allocation12 + $0x110] sm:$0xf]
          %v1353 = vld [vmem:[#allocation12 + $0x114] sm:$0xf]
          %v1354 = vld [vmem:[#allocation12 + $0x118] sm:$0xf]
          %v1355 = vld [vmem:[#allocation12 + $0x11c] sm:$0xf]
          %v1356 = vld [vmem:[#allocation12 + $0x120] sm:$0xf]
          %v1357 = vld [vmem:[#allocation12 + $0x124] sm:$0xf]
          %v1358 = vld [vmem:[#allocation12 + $0x128] sm:$0xf]
          %v1359 = vld [vmem:[#allocation12 + $0x12c] sm:$0xf]
          %v1360 = vld [vmem:[#allocation12 + $0x130] sm:$0xf]
          %v1361 = vld [vmem:[#allocation12 + $0x134] sm:$0xf]
          %v1362 = vld [vmem:[#allocation12 + $0x138] sm:$0xf]
          %v1363 = vld [vmem:[#allocation12 + $0x13c] sm:$0xf]
          %v1364 = vld [vmem:[#allocation12 + $0x140] sm:$0xf]
          %v1365 = vld [vmem:[#allocation12 + $0x144] sm:$0xf]
          %v1366 = vld [vmem:[#allocation12 + $0x148] sm:$0xf]
          %v1367 = vld [vmem:[#allocation12 + $0x14c] sm:$0xf]
          %v1368 = vld [vmem:[#allocation12 + $0x150] sm:$0xf]
          %v1369 = vld [vmem:[#allocation12 + $0x154] sm:$0xf]
          %v1370 = vld [vmem:[#allocation12 + $0x158] sm:$0xf]
          %v1371 = vld [vmem:[#allocation12 + $0x15c] sm:$0xf]
          %v1372 = vld [vmem:[#allocation12 + $0x160] sm:$0xf]
          %v1373 = vld [vmem:[#allocation12 + $0x164] sm:$0xf]
          %v1374 = vld [vmem:[#allocation12 + $0x168] sm:$0xf]
          %v1375 = vld [vmem:[#allocation12 + $0x16c] sm:$0xf]
          %v1376 = vld [vmem:[#allocation12 + $0x170] sm:$0xf]
          %v1377 = vld [vmem:[#allocation12 + $0x174] sm:$0xf]
          %v1378 = vld [vmem:[#allocation12 + $0x178] sm:$0xf]
          %v1379 = vld [vmem:[#allocation12 + $0x17c] sm:$0xf]
          %v1380 = vld [vmem:[#allocation12 + $0x180] sm:$0xf]
          %v1381 = vld [vmem:[#allocation12 + $0x184] sm:$0xf]
          %v1382 = vld [vmem:[#allocation12 + $0x188] sm:$0xf]
          %v1383 = vld [vmem:[#allocation12 + $0x18c] sm:$0xf]
          %v1384 = vld [vmem:[#allocation12 + $0x190] sm:$0xf]
          %v1385 = vld [vmem:[#allocation12 + $0x194] sm:$0xf]
          %v1386 = vld [vmem:[#allocation12 + $0x198] sm:$0xf]
          %v1387 = vld [vmem:[#allocation12 + $0x19c] sm:$0xf]
          %v1388 = vld [vmem:[#allocation12 + $0x1a0] sm:$0xf]
          %v1389 = vld [vmem:[#allocation12 + $0x1a4] sm:$0xf]
          %v1390 = vld [vmem:[#allocation12 + $0x1a8] sm:$0xf]
          %v1391 = vld [vmem:[#allocation12 + $0x1ac] sm:$0xf]
          %v1392 = vld [vmem:[#allocation12 + $0x1b0] sm:$0xf]
          %v1393 = vld [vmem:[#allocation12 + $0x1b4] sm:$0xf]
          %v1394 = vld [vmem:[#allocation12 + $0x1b8] sm:$0xf]
          %v1395 = vld [vmem:[#allocation12 + $0x1bc] sm:$0xf]
          %v1396 = vld [vmem:[#allocation12 + $0x1c0] sm:$0xf]
          %v1397 = vld [vmem:[#allocation12 + $0x1c4] sm:$0xf]
          %v1398 = vld [vmem:[#allocation12 + $0x1c8] sm:$0xf]
          %v1399 = vld [vmem:[#allocation12 + $0x1cc] sm:$0xf]
          %v1400 = vld [vmem:[#allocation12 + $0x1d0] sm:$0xf]
          %v1401 = vld [vmem:[#allocation12 + $0x1d4] sm:$0xf]
          %v1402 = vld [vmem:[#allocation12 + $0x1d8] sm:$0xf]
          %v1403 = vld [vmem:[#allocation12 + $0x1dc] sm:$0xf]
          %v1404 = vld [vmem:[#allocation12 + $0x1e0] sm:$0xf]
          %v1405 = vld [vmem:[#allocation12 + $0x1e4] sm:$0xf]
          %v1406 = vld [vmem:[#allocation12 + $0x1e8] sm:$0xf]
          %v1407 = vld [vmem:[#allocation12 + $0x1ec] sm:$0xf]
          %v1408 = vld [vmem:[#allocation12 + $0x1f0] sm:$0xf]
          %v1409 = vld [vmem:[#allocation12 + $0x1f4] sm:$0xf]
          %v1410 = vld [vmem:[#allocation12 + $0x1f8] sm:$0xf]
          %v1411 = vld [vmem:[#allocation12 + $0x1fc] sm:$0xf]
          %v1428 = vunpack.c.l.b16 %v1284
          %v1429 = vunpack.c.l.b16 %v1285
          %v1430 = vunpack.c.l.b16 %v1286
          %v1431 = vunpack.c.l.b16 %v1287
          %v1432 = vunpack.c.l.b16 %v1288
          %v1433 = vunpack.c.l.b16 %v1289
          %v1434 = vunpack.c.l.b16 %v1290
          %v1435 = vunpack.c.l.b16 %v1291
          %v1436 = vunpack.c.l.b16 %v1292
          %v1437 = vunpack.c.l.b16 %v1293
          %v1438 = vunpack.c.l.b16 %v1294
          %v1439 = vunpack.c.l.b16 %v1295
          %v1440 = vunpack.c.l.b16 %v1296
          %v1441 = vunpack.c.l.b16 %v1297
          %v1442 = vunpack.c.l.b16 %v1298
          %v1443 = vunpack.c.l.b16 %v1299
          %v1444 = vpack.c.b16 %v1429, %v1428
          %v1445 = vpack.c.b16 %v1431, %v1430
          %v1446 = vpack.c.b16 %v1433, %v1432
          %v1447 = vpack.c.b16 %v1435, %v1434
          %v1448 = vpack.c.b16 %v1437, %v1436
          %v1449 = vpack.c.b16 %v1439, %v1438
          %v1450 = vpack.c.b16 %v1441, %v1440
          %v1451 = vpack.c.b16 %v1443, %v1442
          %1460 = vmatpush.bf16.msra.mxu0 %v1451
          %1461 = vmatpush.bf16.msra.mxu0 %v1450
          %1462 = vmatpush.bf16.msra.mxu0 %v1449
          %1463 = vmatpush.bf16.msra.mxu0 %v1448
          %1464 = vmatpush.bf16.msra.mxu0 %v1447
          %1465 = vmatpush.bf16.msra.mxu0 %v1446
          %1466 = vmatpush.bf16.msra.mxu0 %v1445
          %1467 = vmatpush.bf16.msra.mxu0 %v1444
          %1468 = vmatmul.bf16.gmra.mxu0 %v1283
          %v1469 = vpop.f32.mrf.mxu0
          %v1470 = vadd.f32 0.0, %v1469
          %v1471 = vpop.f32.mrf.mxu0
          %1472 = vdwg.mxu0
          %v1489 = vunpack.c.l.b16 %v1300
          %v1490 = vunpack.c.l.b16 %v1301
          %v1491 = vunpack.c.l.b16 %v1302
          %v1492 = vunpack.c.l.b16 %v1303
          %v1493 = vunpack.c.l.b16 %v1304
          %v1494 = vunpack.c.l.b16 %v1305
          %v1495 = vunpack.c.l.b16 %v1306
          %v1496 = vunpack.c.l.b16 %v1307
          %v1497 = vunpack.c.l.b16 %v1308
          %v1498 = vunpack.c.l.b16 %v1309
          %v1499 = vunpack.c.l.b16 %v1310
          %v1500 = vunpack.c.l.b16 %v1311
          %v1501 = vunpack.c.l.b16 %v1312
          %v1502 = vunpack.c.l.b16 %v1313
          %v1503 = vunpack.c.l.b16 %v1314
          %v1504 = vunpack.c.l.b16 %v1315
          %v1505 = vpack.c.b16 %v1490, %v1489
          %v1506 = vpack.c.b16 %v1492, %v1491
          %v1507 = vpack.c.b16 %v1494, %v1493
          %v1508 = vpack.c.b16 %v1496, %v1495
          %v1509 = vpack.c.b16 %v1498, %v1497
          %v1510 = vpack.c.b16 %v1500, %v1499
          %v1511 = vpack.c.b16 %v1502, %v1501
          %v1512 = vpack.c.b16 %v1504, %v1503
          %1521 = vmatpush.bf16.msra.mxu0 %v1512
          %1522 = vmatpush.bf16.msra.mxu0 %v1511
          %1523 = vmatpush.bf16.msra.mxu0 %v1510
          %1524 = vmatpush.bf16.msra.mxu0 %v1509
          %1525 = vmatpush.bf16.msra.mxu0 %v1508
          %1526 = vmatpush.bf16.msra.mxu0 %v1507
          %1527 = vmatpush.bf16.msra.mxu0 %v1506
          %1528 = vmatpush.bf16.msra.mxu0 %v1505
          %1529 = vmatmul.bf16.gmra.mxu0 %v1283
          %v1530 = vpop.f32.mrf.mxu0
          %v1531 = vadd.f32 0.0, %v1530
          %v1532 = vpop.f32.mrf.mxu0
          %1533 = vdwg.mxu0
          %v1550 = vunpack.c.l.b16 %v1316
          %v1551 = vunpack.c.l.b16 %v1317
          %v1552 = vunpack.c.l.b16 %v1318
          %v1553 = vunpack.c.l.b16 %v1319
          %v1554 = vunpack.c.l.b16 %v1320
          %v1555 = vunpack.c.l.b16 %v1321
          %v1556 = vunpack.c.l.b16 %v1322
          %v1557 = vunpack.c.l.b16 %v1323
          %v1558 = vunpack.c.l.b16 %v1324
          %v1559 = vunpack.c.l.b16 %v1325
          %v1560 = vunpack.c.l.b16 %v1326
          %v1561 = vunpack.c.l.b16 %v1327
          %v1562 = vunpack.c.l.b16 %v1328
          %v1563 = vunpack.c.l.b16 %v1329
          %v1564 = vunpack.c.l.b16 %v1330
          %v1565 = vunpack.c.l.b16 %v1331
          %v1566 = vpack.c.b16 %v1551, %v1550
          %v1567 = vpack.c.b16 %v1553, %v1552
          %v1568 = vpack.c.b16 %v1555, %v1554
          %v1569 = vpack.c.b16 %v1557, %v1556
          %v1570 = vpack.c.b16 %v1559, %v1558
          %v1571 = vpack.c.b16 %v1561, %v1560
          %v1572 = vpack.c.b16 %v1563, %v1562
          %v1573 = vpack.c.b16 %v1565, %v1564
          %1582 = vmatpush.bf16.msra.mxu0 %v1573
          %1583 = vmatpush.bf16.msra.mxu0 %v1572
          %1584 = vmatpush.bf16.msra.mxu0 %v1571
          %1585 = vmatpush.bf16.msra.mxu0 %v1570
          %1586 = vmatpush.bf16.msra.mxu0 %v1569
          %1587 = vmatpush.bf16.msra.mxu0 %v1568
          %1588 = vmatpush.bf16.msra.mxu0 %v1567
          %1589 = vmatpush.bf16.msra.mxu0 %v1566
          %1590 = vmatmul.bf16.gmra.mxu0 %v1283
          %v1591 = vpop.f32.mrf.mxu0
          %v1592 = vadd.f32 0.0, %v1591
          %v1593 = vpop.f32.mrf.mxu0
          %1594 = vdwg.mxu0
          %v1611 = vunpack.c.l.b16 %v1332
          %v1612 = vunpack.c.l.b16 %v1333
          %v1613 = vunpack.c.l.b16 %v1334
          %v1614 = vunpack.c.l.b16 %v1335
          %v1615 = vunpack.c.l.b16 %v1336
          %v1616 = vunpack.c.l.b16 %v1337
          %v1617 = vunpack.c.l.b16 %v1338
          %v1618 = vunpack.c.l.b16 %v1339
          %v1619 = vunpack.c.l.b16 %v1340
          %v1620 = vunpack.c.l.b16 %v1341
          %v1621 = vunpack.c.l.b16 %v1342
          %v1622 = vunpack.c.l.b16 %v1343
          %v1623 = vunpack.c.l.b16 %v1344
          %v1624 = vunpack.c.l.b16 %v1345
          %v1625 = vunpack.c.l.b16 %v1346
          %v1626 = vunpack.c.l.b16 %v1347
          %v1627 = vpack.c.b16 %v1612, %v1611
          %v1628 = vpack.c.b16 %v1614, %v1613
          %v1629 = vpack.c.b16 %v1616, %v1615
          %v1630 = vpack.c.b16 %v1618, %v1617
          %v1631 = vpack.c.b16 %v1620, %v1619
          %v1632 = vpack.c.b16 %v1622, %v1621
          %v1633 = vpack.c.b16 %v1624, %v1623
          %v1634 = vpack.c.b16 %v1626, %v1625
          %1643 = vmatpush.bf16.msra.mxu0 %v1634
          %1644 = vmatpush.bf16.msra.mxu0 %v1633
          %1645 = vmatpush.bf16.msra.mxu0 %v1632
          %1646 = vmatpush.bf16.msra.mxu0 %v1631
          %1647 = vmatpush.bf16.msra.mxu0 %v1630
          %1648 = vmatpush.bf16.msra.mxu0 %v1629
          %1649 = vmatpush.bf16.msra.mxu0 %v1628
          %1650 = vmatpush.bf16.msra.mxu0 %v1627
          %1651 = vmatmul.bf16.gmra.mxu0 %v1283
          %v1652 = vpop.f32.mrf.mxu0
          %v1653 = vadd.f32 0.0, %v1652
          %v1654 = vpop.f32.mrf.mxu0
          %1655 = vdwg.mxu0
          %v1672 = vunpack.c.l.b16 %v1348
          %v1673 = vunpack.c.l.b16 %v1349
          %v1674 = vunpack.c.l.b16 %v1350
          %v1675 = vunpack.c.l.b16 %v1351
          %v1676 = vunpack.c.l.b16 %v1352
          %v1677 = vunpack.c.l.b16 %v1353
          %v1678 = vunpack.c.l.b16 %v1354
          %v1679 = vunpack.c.l.b16 %v1355
          %v1680 = vunpack.c.l.b16 %v1356
          %v1681 = vunpack.c.l.b16 %v1357
          %v1682 = vunpack.c.l.b16 %v1358
          %v1683 = vunpack.c.l.b16 %v1359
          %v1684 = vunpack.c.l.b16 %v1360
          %v1685 = vunpack.c.l.b16 %v1361
          %v1686 = vunpack.c.l.b16 %v1362
          %v1687 = vunpack.c.l.b16 %v1363
          %v1688 = vpack.c.b16 %v1673, %v1672
          %v1689 = vpack.c.b16 %v1675, %v1674
          %v1690 = vpack.c.b16 %v1677, %v1676
          %v1691 = vpack.c.b16 %v1679, %v1678
          %v1692 = vpack.c.b16 %v1681, %v1680
          %v1693 = vpack.c.b16 %v1683, %v1682
          %v1694 = vpack.c.b16 %v1685, %v1684
          %v1695 = vpack.c.b16 %v1687, %v1686
          %1704 = vmatpush.bf16.msra.mxu0 %v1695
          %1705 = vmatpush.bf16.msra.mxu0 %v1694
          %1706 = vmatpush.bf16.msra.mxu0 %v1693
          %1707 = vmatpush.bf16.msra.mxu0 %v1692
          %1708 = vmatpush.bf16.msra.mxu0 %v1691
          %1709 = vmatpush.bf16.msra.mxu0 %v1690
          %1710 = vmatpush.bf16.msra.mxu0 %v1689
          %1711 = vmatpush.bf16.msra.mxu0 %v1688
          %1712 = vmatmul.bf16.gmra.mxu0 %v1283
          %v1713 = vpop.f32.mrf.mxu0
          %v1714 = vadd.f32 0.0, %v1713
          %v1715 = vpop.f32.mrf.mxu0
          %1716 = vdwg.mxu0
          %v1733 = vunpack.c.l.b16 %v1364
          %v1734 = vunpack.c.l.b16 %v1365
          %v1735 = vunpack.c.l.b16 %v1366
          %v1736 = vunpack.c.l.b16 %v1367
          %v1737 = vunpack.c.l.b16 %v1368
          %v1738 = vunpack.c.l.b16 %v1369
          %v1739 = vunpack.c.l.b16 %v1370
          %v1740 = vunpack.c.l.b16 %v1371
          %v1741 = vunpack.c.l.b16 %v1372
          %v1742 = vunpack.c.l.b16 %v1373
          %v1743 = vunpack.c.l.b16 %v1374
          %v1744 = vunpack.c.l.b16 %v1375
          %v1745 = vunpack.c.l.b16 %v1376
          %v1746 = vunpack.c.l.b16 %v1377
          %v1747 = vunpack.c.l.b16 %v1378
          %v1748 = vunpack.c.l.b16 %v1379
          %v1749 = vpack.c.b16 %v1734, %v1733
          %v1750 = vpack.c.b16 %v1736, %v1735
          %v1751 = vpack.c.b16 %v1738, %v1737
          %v1752 = vpack.c.b16 %v1740, %v1739
          %v1753 = vpack.c.b16 %v1742, %v1741
          %v1754 = vpack.c.b16 %v1744, %v1743
          %v1755 = vpack.c.b16 %v1746, %v1745
          %v1756 = vpack.c.b16 %v1748, %v1747
          %1765 = vmatpush.bf16.msra.mxu0 %v1756
          %1766 = vmatpush.bf16.msra.mxu0 %v1755
          %1767 = vmatpush.bf16.msra.mxu0 %v1754
          %1768 = vmatpush.bf16.msra.mxu0 %v1753
          %1769 = vmatpush.bf16.msra.mxu0 %v1752
          %1770 = vmatpush.bf16.msra.mxu0 %v1751
          %1771 = vmatpush.bf16.msra.mxu0 %v1750
          %1772 = vmatpush.bf16.msra.mxu0 %v1749
          %1773 = vmatmul.bf16.gmra.mxu0 %v1283
          %v1774 = vpop.f32.mrf.mxu0
          %v1775 = vadd.f32 0.0, %v1774
          %v1776 = vpop.f32.mrf.mxu0
          %1777 = vdwg.mxu0
          %v1794 = vunpack.c.l.b16 %v1380
          %v1795 = vunpack.c.l.b16 %v1381
          %v1796 = vunpack.c.l.b16 %v1382
          %v1797 = vunpack.c.l.b16 %v1383
          %v1798 = vunpack.c.l.b16 %v1384
          %v1799 = vunpack.c.l.b16 %v1385
          %v1800 = vunpack.c.l.b16 %v1386
          %v1801 = vunpack.c.l.b16 %v1387
          %v1802 = vunpack.c.l.b16 %v1388
          %v1803 = vunpack.c.l.b16 %v1389
          %v1804 = vunpack.c.l.b16 %v1390
          %v1805 = vunpack.c.l.b16 %v1391
          %v1806 = vunpack.c.l.b16 %v1392
          %v1807 = vunpack.c.l.b16 %v1393
          %v1808 = vunpack.c.l.b16 %v1394
          %v1809 = vunpack.c.l.b16 %v1395
          %v1810 = vpack.c.b16 %v1795, %v1794
          %v1811 = vpack.c.b16 %v1797, %v1796
          %v1812 = vpack.c.b16 %v1799, %v1798
          %v1813 = vpack.c.b16 %v1801, %v1800
          %v1814 = vpack.c.b16 %v1803, %v1802
          %v1815 = vpack.c.b16 %v1805, %v1804
          %v1816 = vpack.c.b16 %v1807, %v1806
          %v1817 = vpack.c.b16 %v1809, %v1808
          %1826 = vmatpush.bf16.msra.mxu0 %v1817
          %1827 = vmatpush.bf16.msra.mxu0 %v1816
          %1828 = vmatpush.bf16.msra.mxu0 %v1815
          %1829 = vmatpush.bf16.msra.mxu0 %v1814
          %1830 = vmatpush.bf16.msra.mxu0 %v1813
          %1831 = vmatpush.bf16.msra.mxu0 %v1812
          %1832 = vmatpush.bf16.msra.mxu0 %v1811
          %1833 = vmatpush.bf16.msra.mxu0 %v1810
          %1834 = vmatmul.bf16.gmra.mxu0 %v1283
          %v1835 = vpop.f32.mrf.mxu0
          %v1836 = vadd.f32 0.0, %v1835
          %v1837 = vpop.f32.mrf.mxu0
          %1838 = vdwg.mxu0
          %v1855 = vunpack.c.l.b16 %v1396
          %v1856 = vunpack.c.l.b16 %v1397
          %v1857 = vunpack.c.l.b16 %v1398
          %v1858 = vunpack.c.l.b16 %v1399
          %v1859 = vunpack.c.l.b16 %v1400
          %v1860 = vunpack.c.l.b16 %v1401
          %v1861 = vunpack.c.l.b16 %v1402
          %v1862 = vunpack.c.l.b16 %v1403
          %v1863 = vunpack.c.l.b16 %v1404
          %v1864 = vunpack.c.l.b16 %v1405
          %v1865 = vunpack.c.l.b16 %v1406
          %v1866 = vunpack.c.l.b16 %v1407
          %v1867 = vunpack.c.l.b16 %v1408
          %v1868 = vunpack.c.l.b16 %v1409
          %v1869 = vunpack.c.l.b16 %v1410
          %v1870 = vunpack.c.l.b16 %v1411
          %v1871 = vpack.c.b16 %v1856, %v1855
          %v1872 = vpack.c.b16 %v1858, %v1857
          %v1873 = vpack.c.b16 %v1860, %v1859
          %v1874 = vpack.c.b16 %v1862, %v1861
          %v1875 = vpack.c.b16 %v1864, %v1863
          %v1876 = vpack.c.b16 %v1866, %v1865
          %v1877 = vpack.c.b16 %v1868, %v1867
          %v1878 = vpack.c.b16 %v1870, %v1869
          %1887 = vmatpush.bf16.msra.mxu0 %v1878
          %1888 = vmatpush.bf16.msra.mxu0 %v1877
          %1889 = vmatpush.bf16.msra.mxu0 %v1876
          %1890 = vmatpush.bf16.msra.mxu0 %v1875
          %1891 = vmatpush.bf16.msra.mxu0 %v1874
          %1892 = vmatpush.bf16.msra.mxu0 %v1873
          %1893 = vmatpush.bf16.msra.mxu0 %v1872
          %1894 = vmatpush.bf16.msra.mxu0 %v1871
          %1895 = vmatmul.bf16.gmra.mxu0 %v1283
          %v1896 = vpop.f32.mrf.mxu0
          %v1897 = vadd.f32 0.0, %v1896
          %v1898 = vpop.f32.mrf.mxu0
          %1899 = vdwg.mxu0
          %v1900 = vld [vmem:[#allocation14] sm:$0xff]
          %v1902 = vrot.slane %v1900, 1
          %v1903 = vrot.slane %v1900, 2
          %v1904 = vrot.slane %v1900, 3
          %v1905 = vrot.slane %v1900, 4
          %v1906 = vrot.slane %v1900, 5
          %v1907 = vrot.slane %v1900, 6
          %v1908 = vrot.slane %v1900, 7
          %v1917 = vadd.f32 %v1470, %v1900
          %v1918 = vadd.f32 %v1531, %v1902
          %v1919 = vadd.f32 %v1592, %v1903
          %v1920 = vadd.f32 %v1653, %v1904
          %v1921 = vadd.f32 %v1714, %v1905
          %v1922 = vadd.f32 %v1775, %v1906
          %v1923 = vadd.f32 %v1836, %v1907
          %v1924 = vadd.f32 %v1897, %v1908
          %s1925 = sld [smem:[#allocation8]]
          %s1926 = smul.u32 1, 1
          %s1927 = sshll.u32 %s1926, 4
          %1928 = dma.done [#allocation4], %s1927
          %s1929 = sld [smem:[#allocation8 + $0x1]]
          %s1930 = sshll.u32 %s1926, 4
          %1931 = dma.done %s1153, %s1930
          %s1932 = sld [smem:[#allocation8 + $0x2]]
          %s1933 = sshll.u32 %s1926, 4
          %1934 = dma.done %s1170, %s1933
          %s1935 = sld [smem:[#allocation8 + $0x3]]
          %s1936 = sshll.u32 %s1926, 4
          %1937 = dma.done %s1187, %s1936
          %s1938 = sld [smem:[#allocation8 + $0x4]]
          %s1939 = sshll.u32 %s1926, 4
          %1940 = dma.done %s1204, %s1939
          %s1941 = sld [smem:[#allocation8 + $0x5]]
          %s1942 = sshll.u32 %s1926, 4
          %1943 = dma.done %s1221, %s1942
          %s1944 = sld [smem:[#allocation8 + $0x6]]
          %s1945 = sshll.u32 %s1926, 4
          %1946 = dma.done %s1238, %s1945
          %s1947 = sld [smem:[#allocation8 + $0x7]]
          %s1948 = sshll.u32 %s1926, 4
          %1949 = dma.done %s1255, %s1948
          %v1950 = vld [vmem:[#allocation3] sm:$0xff]
          %v1951 = vmul.f32 %v1950, %v1950
          %1952 = vadd.xlane.f32.xlu0 %v1951
          %v1953 = vpop.xlane.xlu0 %1952
          %v1954 = vrcp.pop 128.0
          %v1955 = vmul.f32 128.0, %v1954
          %v1956 = vsub.f32 1.0, %v1955
          %v1957 = vmul.f32 %v1954, %v1956
          %v1958 = vadd.f32 %v1954, %v1957
          %vm1959 = vweird.f32 %v1954
          %v1960 = vsel %vm1959, %v1954, %v1958
          %v1961 = vmul.f32 %v1953, %v1960
          %v1962 = vadd.f32 %v1961, 1e-05
          %v1963 = vrsqrt.pop %v1962
          %v1964 = vmul.f32 %v1963, %v1962
          %v1965 = vmul.f32 %v1964, %v1963
          %v1966 = vmul.f32 0.5, %v1965
          %v1967 = vsub.f32 1.5, %v1966
          %v1968 = vmul.f32 %v1963, %v1967
          %vm1969 = vweird.f32 %v1962
          %vm1970 = vweird.f32 %v1963
          %vm1971 = vmor %vm1969, %vm1970
          %v1972 = vsel %vm1971, %v1963, %v1968
          %v1973 = vmul.f32 %v1950, %v1972
          %v1974 = vld [vmem:[#allocation15] sm:$0xff]
          %v1975 = vmul.f32 %v1973, %v1974
          %v1976 = vld [vmem:[%s6] sm:$0xff]
          %1978 = vset.pattern.permute.xlu0 0
          %1979 = vperm.xlu0 %1978, %v1976
          %v1980 = vpop.permute.xlu0 %1979
          %v1982 = vmul.f32 %v1975, %v1980
          %v1984 = vrot.slane %v1982, 1
          %v1985 = vrot.slane %v1982, 2
          %v1986 = vrot.slane %v1982, 3
          %v1987 = vrot.slane %v1982, 4
          %v1988 = vrot.slane %v1982, 5
          %v1989 = vrot.slane %v1982, 6
          %v1990 = vrot.slane %v1982, 7
          %v1999 = vadd.f32 %v1917, %v1982
          %v2000 = vadd.f32 %v1918, %v1984
          %v2001 = vadd.f32 %v1919, %v1985
          %v2002 = vadd.f32 %v1920, %v1986
          %v2003 = vadd.f32 %v1921, %v1987
          %v2004 = vadd.f32 %v1922, %v1988
          %v2005 = vadd.f32 %v1923, %v1989
          %v2006 = vadd.f32 %v1924, %v1990
          %v2007 = vld [vmem:[#allocation17] sm:$0x1]
          %v2008 = vld [vmem:[#allocation18] sm:$0x1]
          %v2017 = vrot.slane %v2000, 7
          %vm2018 = vcmask 1041409
          %v2019 = vsel %vm2018, %v2017, %v1999
          %v2020 = vrot.slane %v2001, 6
          %vm2021 = vcmask 1042434
          %v2022 = vsel %vm2021, %v2020, %v2019
          %v2023 = vrot.slane %v2002, 5
          %vm2024 = vcmask 1043459
          %v2025 = vsel %vm2024, %v2023, %v2022
          %v2026 = vrot.slane %v2003, 4
          %vm2027 = vcmask 1044484
          %v2028 = vsel %vm2027, %v2026, %v2025
          %v2029 = vrot.slane %v2004, 3
          %vm2030 = vcmask 1045509
          %v2031 = vsel %vm2030, %v2029, %v2028
          %v2032 = vrot.slane %v2005, 2
          %vm2033 = vcmask 1046534
          %v2034 = vsel %vm2033, %v2032, %v2031
          %v2035 = vrot.slane %v2006, 1
          %vm2036 = vcmask 1047559
          %v2037 = vsel %vm2036, %v2035, %v2034
          %2039 = vadd.xlane.f32.xlu0 %v2037
          %v2040 = vpop.xlane.xlu0 %2039
          %v2041 = vmul.f32 %v2040, %v1960
          %v2043 = vrot.slane %v2041, 1
          %v2044 = vrot.slane %v2041, 2
          %v2045 = vrot.slane %v2041, 3
          %v2046 = vrot.slane %v2041, 4
          %v2047 = vrot.slane %v2041, 5
          %v2048 = vrot.slane %v2041, 6
          %v2049 = vrot.slane %v2041, 7
          %v2058 = vsub.f32 %v1999, %v2041
          %v2059 = vsub.f32 %v2000, %v2043
          %v2060 = vsub.f32 %v2001, %v2044
          %v2061 = vsub.f32 %v2002, %v2045
          %v2062 = vsub.f32 %v2003, %v2046
          %v2063 = vsub.f32 %v2004, %v2047
          %v2064 = vsub.f32 %v2005, %v2048
          %v2065 = vsub.f32 %v2006, %v2049
          %v2066 = vmul.f32 %v2058, %v2058
          %v2067 = vmul.f32 %v2059, %v2059
          %v2068 = vmul.f32 %v2060, %v2060
          %v2069 = vmul.f32 %v2061, %v2061
          %v2070 = vmul.f32 %v2062, %v2062
          %v2071 = vmul.f32 %v2063, %v2063
          %v2072 = vmul.f32 %v2064, %v2064
          %v2073 = vmul.f32 %v2065, %v2065
          %v2082 = vrot.slane %v2067, 7
          %v2083 = vsel %vm2018, %v2082, %v2066
          %v2084 = vrot.slane %v2068, 6
          %v2085 = vsel %vm2021, %v2084, %v2083
          %v2086 = vrot.slane %v2069, 5
          %v2087 = vsel %vm2024, %v2086, %v2085
          %v2088 = vrot.slane %v2070, 4
          %v2089 = vsel %vm2027, %v2088, %v2087
          %v2090 = vrot.slane %v2071, 3
          %v2091 = vsel %vm2030, %v2090, %v2089
          %v2092 = vrot.slane %v2072, 2
          %v2093 = vsel %vm2033, %v2092, %v2091
          %v2094 = vrot.slane %v2073, 1
          %v2095 = vsel %vm2036, %v2094, %v2093
          %2097 = vadd.xlane.f32.xlu0 %v2095
          %v2098 = vpop.xlane.xlu0 %2097
          %v2099 = vmul.f32 %v2098, %v1960
          %v2100 = vadd.f32 %v2099, 1e-12
          %v2101 = vrsqrt.pop %v2100
          %v2102 = vmul.f32 %v2101, %v2100
          %v2103 = vmul.f32 %v2102, %v2101
          %v2104 = vmul.f32 0.5, %v2103
          %v2105 = vsub.f32 1.5, %v2104
          %v2106 = vmul.f32 %v2101, %v2105
          %vm2107 = vweird.f32 %v2100
          %vm2108 = vweird.f32 %v2101
          %vm2109 = vmor %vm2107, %vm2108
          %v2110 = vsel %vm2109, %v2101, %v2106
          %v2112 = vrot.slane %v2110, 1
          %v2113 = vrot.slane %v2110, 2
          %v2114 = vrot.slane %v2110, 3
          %v2115 = vrot.slane %v2110, 4
          %v2116 = vrot.slane %v2110, 5
          %v2117 = vrot.slane %v2110, 6
          %v2118 = vrot.slane %v2110, 7
          %v2127 = vmul.f32 %v2058, %v2110
          %v2128 = vmul.f32 %v2059, %v2112
          %v2129 = vmul.f32 %v2060, %v2113
          %v2130 = vmul.f32 %v2061, %v2114
          %v2131 = vmul.f32 %v2062, %v2115
          %v2132 = vmul.f32 %v2063, %v2116
          %v2133 = vmul.f32 %v2064, %v2117
          %v2134 = vmul.f32 %v2065, %v2118
          %v2136 = vperm.slane %v2007, 0
          %v2138 = vmul.f32 %v2127, %v2136
          %v2139 = vmul.f32 %v2128, %v2136
          %v2140 = vmul.f32 %v2129, %v2136
          %v2141 = vmul.f32 %v2130, %v2136
          %v2142 = vmul.f32 %v2131, %v2136
          %v2143 = vmul.f32 %v2132, %v2136
          %v2144 = vmul.f32 %v2133, %v2136
          %v2145 = vmul.f32 %v2134, %v2136
          %v2147 = vperm.slane %v2008, 0
          %v2149 = vadd.f32 %v2138, %v2147
          %v2150 = vadd.f32 %v2139, %v2147
          %v2151 = vadd.f32 %v2140, %v2147
          %v2152 = vadd.f32 %v2141, %v2147
          %v2153 = vadd.f32 %v2142, %v2147
          %v2154 = vadd.f32 %v2143, %v2147
          %v2155 = vadd.f32 %v2144, %v2147
          %v2156 = vadd.f32 %v2145, %v2147
          %v2165 = vrot.slane %v2150, 7
          %v2166 = vsel %vm2018, %v2165, %v2149
          %v2167 = vrot.slane %v2151, 6
          %v2168 = vsel %vm2021, %v2167, %v2166
          %v2169 = vrot.slane %v2152, 5
          %v2170 = vsel %vm2024, %v2169, %v2168
          %v2171 = vrot.slane %v2153, 4
          %v2172 = vsel %vm2027, %v2171, %v2170
          %v2173 = vrot.slane %v2154, 3
          %v2174 = vsel %vm2030, %v2173, %v2172
          %v2175 = vrot.slane %v2155, 2
          %v2176 = vsel %vm2033, %v2175, %v2174
          %v2177 = vrot.slane %v2156, 1
          %v2178 = vsel %vm2036, %v2177, %v2176
          %2180 = vst [vmem:[#allocation2] sm:$0xff] %v2178
        $region180: #{_lambda_.1} parent=99 // pred_fallthru
          _
        %v2181 = vld [vmem:[#allocation2] sm:$0xff]
        %v2182 = vpack.c.bf16 %v2181, %v2181
        %v2183 = vld [vmem:[%s920] sm:$0xff]
        %v2184 = vld [vmem:[%s920 + $0x8] sm:$0xf]
        %v2185 = vld [vmem:[%s920 + $0xc] sm:$0xff]
        %v2186 = vld [vmem:[%s920 + $0x14] sm:$0xf]
        %v2187 = vld [vmem:[%s920 + $0x18] sm:$0xff]
        %v2188 = vld [vmem:[%s920 + $0x20] sm:$0xf]
        %v2189 = vld [vmem:[%s920 + $0x24] sm:$0xff]
        %v2190 = vld [vmem:[%s920 + $0x2c] sm:$0xf]
        %v2191 = vld [vmem:[%s920 + $0x30] sm:$0xff]
        %v2192 = vld [vmem:[%s920 + $0x38] sm:$0xf]
        %v2193 = vld [vmem:[%s920 + $0x3c] sm:$0xff]
        %v2194 = vld [vmem:[%s920 + $0x44] sm:$0xf]
        %v2195 = vld [vmem:[%s920 + $0x48] sm:$0xff]
        %v2196 = vld [vmem:[%s920 + $0x50] sm:$0xf]
        %v2197 = vld [vmem:[%s920 + $0x54] sm:$0xff]
        %v2198 = vld [vmem:[%s920 + $0x5c] sm:$0xf]
        %v2199 = vld [vmem:[%s920 + $0x60] sm:$0xff]
        %v2200 = vld [vmem:[%s920 + $0x68] sm:$0xf]
        %v2201 = vld [vmem:[%s920 + $0x6c] sm:$0xff]
        %v2202 = vld [vmem:[%s920 + $0x74] sm:$0xf]
        %v2203 = vld [vmem:[%s920 + $0x78] sm:$0xff]
        %v2204 = vld [vmem:[%s920 + $0x80] sm:$0xf]
        %v2205 = vld [vmem:[%s920 + $0x84] sm:$0xff]
        %v2206 = vld [vmem:[%s920 + $0x8c] sm:$0xf]
        %v2207 = vld [vmem:[%s920 + $0x90] sm:$0xff]
        %v2208 = vld [vmem:[%s920 + $0x98] sm:$0xf]
        %v2209 = vld [vmem:[%s920 + $0x9c] sm:$0xff]
        %v2210 = vld [vmem:[%s920 + $0xa4] sm:$0xf]
        %v2211 = vld [vmem:[%s920 + $0xa8] sm:$0xff]
        %v2212 = vld [vmem:[%s920 + $0xb0] sm:$0xf]
        %v2213 = vld [vmem:[%s920 + $0xb4] sm:$0xff]
        %v2214 = vld [vmem:[%s920 + $0xbc] sm:$0xf]
        %v2215 = vld [vmem:[%s930] sm:$0x7]
        %v2217 = vperm.slane %v2215, 0
        %v2218 = vperm.slane %v2215, 1
        %v2219 = vperm.slane %v2215, 2
        %v2255 = vunpack.c.l.b16 %v2183
        %v2256 = vunpack.c.h.b16 %v2183
        %v2257 = vunpack.c.l.b16 %v2184
        %v2258 = vunpack.c.l.b16 %v2185
        %v2259 = vunpack.c.h.b16 %v2185
        %v2260 = vunpack.c.l.b16 %v2186
        %v2261 = vunpack.c.l.b16 %v2187
        %v2262 = vunpack.c.h.b16 %v2187
        %v2263 = vunpack.c.l.b16 %v2188
        %v2264 = vunpack.c.l.b16 %v2189
        %v2265 = vunpack.c.h.b16 %v2189
        %v2266 = vunpack.c.l.b16 %v2190
        %v2267 = vunpack.c.l.b16 %v2191
        %v2268 = vunpack.c.h.b16 %v2191
        %v2269 = vunpack.c.l.b16 %v2192
        %v2270 = vunpack.c.l.b16 %v2193
        %v2271 = vunpack.c.h.b16 %v2193
        %v2272 = vunpack.c.l.b16 %v2194
        %v2273 = vunpack.c.l.b16 %v2195
        %v2274 = vunpack.c.h.b16 %v2195
        %v2275 = vunpack.c.l.b16 %v2196
        %v2276 = vunpack.c.l.b16 %v2197
        %v2277 = vunpack.c.h.b16 %v2197
        %v2278 = vunpack.c.l.b16 %v2198
        %v2279 = vunpack.c.l.b16 %v2199
        %v2280 = vunpack.c.h.b16 %v2199
        %v2281 = vunpack.c.l.b16 %v2200
        %v2282 = vunpack.c.l.b16 %v2201
        %v2283 = vunpack.c.h.b16 %v2201
        %v2284 = vunpack.c.l.b16 %v2202
        %v2285 = vunpack.c.l.b16 %v2203
        %v2286 = vunpack.c.h.b16 %v2203
        %v2287 = vunpack.c.l.b16 %v2204
        %v2288 = vunpack.c.l.b16 %v2205
        %v2289 = vunpack.c.h.b16 %v2205
        %v2290 = vunpack.c.l.b16 %v2206
        %v2291 = vunpack.c.l.b16 %v2207
        %v2292 = vunpack.c.h.b16 %v2207
        %v2293 = vunpack.c.l.b16 %v2208
        %v2294 = vunpack.c.l.b16 %v2209
        %v2295 = vunpack.c.h.b16 %v2209
        %v2296 = vunpack.c.l.b16 %v2210
        %v2297 = vunpack.c.l.b16 %v2211
        %v2298 = vunpack.c.h.b16 %v2211
        %v2299 = vunpack.c.l.b16 %v2212
        %v2300 = vunpack.c.l.b16 %v2213
        %v2301 = vunpack.c.h.b16 %v2213
        %v2302 = vunpack.c.l.b16 %v2214
        %v2303 = vpack.c.b16 %v2258, %v2255
        %v2304 = vpack.c.b16 %v2259, %v2256
        %v2305 = vpack.c.b16 %v2260, %v2257
        %v2306 = vpack.c.b16 %v2264, %v2261
        %v2307 = vpack.c.b16 %v2265, %v2262
        %v2308 = vpack.c.b16 %v2266, %v2263
        %v2309 = vpack.c.b16 %v2270, %v2267
        %v2310 = vpack.c.b16 %v2271, %v2268
        %v2311 = vpack.c.b16 %v2272, %v2269
        %v2312 = vpack.c.b16 %v2276, %v2273
        %v2313 = vpack.c.b16 %v2277, %v2274
        %v2314 = vpack.c.b16 %v2278, %v2275
        %v2315 = vpack.c.b16 %v2282, %v2279
        %v2316 = vpack.c.b16 %v2283, %v2280
        %v2317 = vpack.c.b16 %v2284, %v2281
        %v2318 = vpack.c.b16 %v2288, %v2285
        %v2319 = vpack.c.b16 %v2289, %v2286
        %v2320 = vpack.c.b16 %v2290, %v2287
        %v2321 = vpack.c.b16 %v2294, %v2291
        %v2322 = vpack.c.b16 %v2295, %v2292
        %v2323 = vpack.c.b16 %v2296, %v2293
        %v2324 = vpack.c.b16 %v2300, %v2297
        %v2325 = vpack.c.b16 %v2301, %v2298
        %v2326 = vpack.c.b16 %v2302, %v2299
        %2351 = vmatpush.bf16.msra.mxu0 %v2324
        %2352 = vmatpush.bf16.msra.mxu0 %v2321
        %2353 = vmatpush.bf16.msra.mxu0 %v2318
        %2354 = vmatpush.bf16.msra.mxu0 %v2315
        %2355 = vmatpush.bf16.msra.mxu0 %v2312
        %2356 = vmatpush.bf16.msra.mxu0 %v2309
        %2357 = vmatpush.bf16.msra.mxu0 %v2306
        %2358 = vmatpush.bf16.msra.mxu0 %v2303
        %2359 = vmatmul.bf16.gmra.mxu0 %v2182
        %v2360 = vpop.f32.mrf.mxu0
        %v2361 = vadd.f32 %v2217, %v2360
        %v2362 = vpop.f32.mrf.mxu0
        %2363 = vdwg.mxu0
        %2364 = vmatpush.bf16.msra.mxu0 %v2325
        %2365 = vmatpush.bf16.msra.mxu0 %v2322
        %2366 = vmatpush.bf16.msra.mxu0 %v2319
        %2367 = vmatpush.bf16.msra.mxu0 %v2316
        %2368 = vmatpush.bf16.msra.mxu0 %v2313
        %2369 = vmatpush.bf16.msra.mxu0 %v2310
        %2370 = vmatpush.bf16.msra.mxu0 %v2307
        %2371 = vmatpush.bf16.msra.mxu0 %v2304
        %2372 = vmatmul.bf16.gmra.mxu0 %v2182
        %v2373 = vpop.f32.mrf.mxu0
        %v2374 = vadd.f32 %v2218, %v2373
        %v2375 = vpop.f32.mrf.mxu0
        %2376 = vdwg.mxu0
        %2377 = vmatpush.bf16.msra.mxu0 %v2326
        %2378 = vmatpush.bf16.msra.mxu0 %v2323
        %2379 = vmatpush.bf16.msra.mxu0 %v2320
        %2380 = vmatpush.bf16.msra.mxu0 %v2317
        %2381 = vmatpush.bf16.msra.mxu0 %v2314
        %2382 = vmatpush.bf16.msra.mxu0 %v2311
        %2383 = vmatpush.bf16.msra.mxu0 %v2308
        %2384 = vmatpush.bf16.msra.mxu0 %v2305
        %2385 = vmatmul.bf16.gmra.mxu0 %v2182
        %v2386 = vpop.f32.mrf.mxu0
        %v2387 = vadd.f32 %v2219, %v2386
        %v2388 = vpop.f32.mrf.mxu0
        %2389 = vdwg.mxu0
        %v2390 = vlaneseq
        %v2391 = vshrl.u32 %v2390, 7
        %v2392 = vlaneseq
        %v2393 = vand.u32 %v2392, 127
        %vm2394 = vcmp.le.s32.totalorder %v2393, %v2391
        %vm2395 = vcmask 261120
        %v2397 = vsel %vm2395, %v2361, 0
        %v2400 = vsel %vm2395, %v2374, 0
        %2402 = vmatpush.xpose.msra.mxu0 0.0
        %2403 = vmatpush.xpose.msra.mxu0 0.0
        %2404 = vmatpush.xpose.msra.mxu0 0.0
        %2405 = vmatpush.xpose.msra.mxu0 0.0
        %2406 = vmatpush.xpose.msra.mxu0 0.0
        %2407 = vmatpush.xpose.msra.mxu0 0.0
        %2408 = vmatpush.xpose.msra.mxu0 0.0
        %2409 = vmatpush.xpose.msra.mxu0 0.0
        %2410 = vmatpush.xpose.msra.mxu0 0.0
        %2411 = vmatpush.xpose.msra.mxu0 0.0
        %2412 = vmatpush.xpose.msra.mxu0 0.0
        %2413 = vmatpush.xpose.msra.mxu0 0.0
        %2414 = vmatpush.xpose.msra.mxu0 0.0
        %2415 = vmatpush.xpose.msra.mxu0 0.0
        %2416 = vmatpush.xpose.msra.mxu0 0.0
        %2417 = vmatpush.xpose.msra.mxu0 %v2400
        %2418 = vmatmul.f32.gmra.mxu0 %v2397
        %v2419 = vpop.f32.mrf.mxu0
        %v2420 = vadd.f32 0.0, %v2419
        %2421 = vdwg.mxu0
        %2422 = vrot.lane.b32.xlu0 %v2361, 96
        %v2423 = vpop.permute.xlu0 %2422
        %2424 = vrot.lane.b32.xlu0 %v2374, 96
        %v2425 = vpop.permute.xlu0 %2424
        %v2426 = vsel %vm2395, %v2423, 0
        %v2428 = vsel %vm2395, %v2425, 0
        %2430 = vmatpush.xpose.msra.mxu0 0.0
        %2431 = vmatpush.xpose.msra.mxu0 0.0
        %2432 = vmatpush.xpose.msra.mxu0 0.0
        %2433 = vmatpush.xpose.msra.mxu0 0.0
        %2434 = vmatpush.xpose.msra.mxu0 0.0
        %2435 = vmatpush.xpose.msra.mxu0 0.0
        %2436 = vmatpush.xpose.msra.mxu0 0.0
        %2437 = vmatpush.xpose.msra.mxu0 0.0
        %2438 = vmatpush.xpose.msra.mxu0 0.0
        %2439 = vmatpush.xpose.msra.mxu0 0.0
        %2440 = vmatpush.xpose.msra.mxu0 0.0
        %2441 = vmatpush.xpose.msra.mxu0 0.0
        %2442 = vmatpush.xpose.msra.mxu0 0.0
        %2443 = vmatpush.xpose.msra.mxu0 0.0
        %2444 = vmatpush.xpose.msra.mxu0 0.0
        %2445 = vmatpush.xpose.msra.mxu0 %v2428
        %2446 = vmatmul.f32.gmra.mxu0 %v2426
        %v2447 = vpop.f32.mrf.mxu0
        %v2448 = vadd.f32 0.0, %v2447
        %2449 = vdwg.mxu0
        %2450 = vrot.lane.b32.xlu0 %v2361, 64
        %v2451 = vpop.permute.xlu0 %2450
        %2452 = vrot.lane.b32.xlu0 %v2374, 64
        %v2453 = vpop.permute.xlu0 %2452
        %v2454 = vsel %vm2395, %v2451, 0
        %v2456 = vsel %vm2395, %v2453, 0
        %2458 = vmatpush.xpose.msra.mxu0 0.0
        %2459 = vmatpush.xpose.msra.mxu0 0.0
        %2460 = vmatpush.xpose.msra.mxu0 0.0
        %2461 = vmatpush.xpose.msra.mxu0 0.0
        %2462 = vmatpush.xpose.msra.mxu0 0.0
        %2463 = vmatpush.xpose.msra.mxu0 0.0
        %2464 = vmatpush.xpose.msra.mxu0 0.0
        %2465 = vmatpush.xpose.msra.mxu0 0.0
        %2466 = vmatpush.xpose.msra.mxu0 0.0
        %2467 = vmatpush.xpose.msra.mxu0 0.0
        %2468 = vmatpush.xpose.msra.mxu0 0.0
        %2469 = vmatpush.xpose.msra.mxu0 0.0
        %2470 = vmatpush.xpose.msra.mxu0 0.0
        %2471 = vmatpush.xpose.msra.mxu0 0.0
        %2472 = vmatpush.xpose.msra.mxu0 0.0
        %2473 = vmatpush.xpose.msra.mxu0 %v2456
        %2474 = vmatmul.f32.gmra.mxu0 %v2454
        %v2475 = vpop.f32.mrf.mxu0
        %v2476 = vadd.f32 0.0, %v2475
        %2477 = vdwg.mxu0
        %2478 = vrot.lane.b32.xlu0 %v2361, 32
        %v2479 = vpop.permute.xlu0 %2478
        %2480 = vrot.lane.b32.xlu0 %v2374, 32
        %v2481 = vpop.permute.xlu0 %2480
        %v2482 = vsel %vm2395, %v2479, 0
        %v2484 = vsel %vm2395, %v2481, 0
        %2486 = vmatpush.xpose.msra.mxu0 0.0
        %2487 = vmatpush.xpose.msra.mxu0 0.0
        %2488 = vmatpush.xpose.msra.mxu0 0.0
        %2489 = vmatpush.xpose.msra.mxu0 0.0
        %2490 = vmatpush.xpose.msra.mxu0 0.0
        %2491 = vmatpush.xpose.msra.mxu0 0.0
        %2492 = vmatpush.xpose.msra.mxu0 0.0
        %2493 = vmatpush.xpose.msra.mxu0 0.0
        %2494 = vmatpush.xpose.msra.mxu0 0.0
        %2495 = vmatpush.xpose.msra.mxu0 0.0
        %2496 = vmatpush.xpose.msra.mxu0 0.0
        %2497 = vmatpush.xpose.msra.mxu0 0.0
        %2498 = vmatpush.xpose.msra.mxu0 0.0
        %2499 = vmatpush.xpose.msra.mxu0 0.0
        %2500 = vmatpush.xpose.msra.mxu0 0.0
        %2501 = vmatpush.xpose.msra.mxu0 %v2484
        %2502 = vmatmul.f32.gmra.mxu0 %v2482
        %v2503 = vpop.f32.mrf.mxu0
        %v2504 = vadd.f32 0.0, %v2503
        %2505 = vdwg.mxu0
        %v2506 = vsel %vm2394, 1, 0
        %vm2507 = vcmp.eq.s32.totalorder %v2506, 1
        %v2508 = vsel %vm2507, %v2420, -3.4028235e+38
        %v2509 = vsel %vm2507, %v2448, -3.4028235e+38
        %v2510 = vsel %vm2507, %v2476, -3.4028235e+38
        %v2511 = vsel %vm2507, %v2504, -3.4028235e+38
        %vm2512 = vcmask 64512
        %v2513 = vsel %vm2512, %v2508, -inf
        %2514 = vmax.xlane.f32.xlu0 %v2513
        %v2515 = vpop.xlane.xlu0 %2514
        %v2516 = vsel %vm2512, %v2509, -inf
        %2517 = vmax.xlane.f32.xlu0 %v2516
        %v2518 = vpop.xlane.xlu0 %2517
        %v2519 = vsel %vm2512, %v2510, -inf
        %2520 = vmax.xlane.f32.xlu0 %v2519
        %v2521 = vpop.xlane.xlu0 %2520
        %v2522 = vsel %vm2512, %v2511, -inf
        %2523 = vmax.xlane.f32.xlu0 %v2522
        %v2524 = vpop.xlane.xlu0 %2523
        %v2525 = vsub.f32 %v2508, %v2515
        %v2526 = vsub.f32 %v2509, %v2518
        %v2527 = vsub.f32 %v2510, %v2521
        %v2528 = vsub.f32 %v2511, %v2524
        %v2529 = vmul.f32 %v2525, 1.442695
        %v2530 = vpow.pop %v2529
        %v2531 = vmul.f32 %v2526, 1.442695
        %v2532 = vpow.pop %v2531
        %v2533 = vmul.f32 %v2527, 1.442695
        %v2534 = vpow.pop %v2533
        %v2535 = vmul.f32 %v2528, 1.442695
        %v2536 = vpow.pop %v2535
        %v2537 = vsel %vm2512, %v2530, 0.0
        %2538 = vadd.xlane.f32.xlu0 %v2537
        %v2539 = vpop.xlane.xlu0 %2538
        %v2540 = vsel %vm2512, %v2532, 0.0
        %2541 = vadd.xlane.f32.xlu0 %v2540
        %v2542 = vpop.xlane.xlu0 %2541
        %v2543 = vsel %vm2512, %v2534, 0.0
        %2544 = vadd.xlane.f32.xlu0 %v2543
        %v2545 = vpop.xlane.xlu0 %2544
        %v2546 = vsel %vm2512, %v2536, 0.0
        %2547 = vadd.xlane.f32.xlu0 %v2546
        %v2548 = vpop.xlane.xlu0 %2547
        %v2549 = vrcp.pop %v2539
        %v2550 = vrcp.pop %v2542
        %v2551 = vrcp.pop %v2545
        %v2552 = vrcp.pop %v2548
        %v2553 = vmul.f32 %v2530, %v2549
        %v2554 = vmul.f32 %v2532, %v2550
        %v2555 = vmul.f32 %v2534, %v2551
        %v2556 = vmul.f32 %v2536, %v2552
        %v2558 = vsel %vm2512, %v2553, 0
        %2560 = vmatpush.msra.mxu0 0.0
        %2561 = vmatpush.msra.mxu0 0.0
        %2562 = vmatpush.msra.mxu0 0.0
        %2563 = vmatpush.msra.mxu0 0.0
        %2564 = vmatpush.msra.mxu0 0.0
        %2565 = vmatpush.msra.mxu0 0.0
        %2566 = vmatpush.msra.mxu0 0.0
        %2567 = vmatpush.msra.mxu0 0.0
        %2568 = vmatpush.msra.mxu0 0.0
        %2569 = vmatpush.msra.mxu0 0.0
        %2570 = vmatpush.msra.mxu0 0.0
        %2571 = vmatpush.msra.mxu0 0.0
        %2572 = vmatpush.msra.mxu0 0.0
        %2573 = vmatpush.msra.mxu0 0.0
        %2574 = vmatpush.msra.mxu0 0.0
        %2575 = vmatpush.msra.mxu0 %v2387
        %2576 = vmatmul.f32.gmra.mxu0 %v2558
        %v2577 = vpop.f32.mrf.mxu0
        %v2578 = vadd.f32 0.0, %v2577
        %2579 = vdwg.mxu0
        %2581 = vrot.lane.b32.xlu0 %v2387, 96
        %v2582 = vpop.permute.xlu0 %2581
        %v2585 = vsel %vm2512, %v2554, 0
        %2587 = vmatpush.msra.mxu0 0.0
        %2588 = vmatpush.msra.mxu0 0.0
        %2589 = vmatpush.msra.mxu0 0.0
        %2590 = vmatpush.msra.mxu0 0.0
        %2591 = vmatpush.msra.mxu0 0.0
        %2592 = vmatpush.msra.mxu0 0.0
        %2593 = vmatpush.msra.mxu0 0.0
        %2594 = vmatpush.msra.mxu0 0.0
        %2595 = vmatpush.msra.mxu0 0.0
        %2596 = vmatpush.msra.mxu0 0.0
        %2597 = vmatpush.msra.mxu0 0.0
        %2598 = vmatpush.msra.mxu0 0.0
        %2599 = vmatpush.msra.mxu0 0.0
        %2600 = vmatpush.msra.mxu0 0.0
        %2601 = vmatpush.msra.mxu0 0.0
        %2602 = vmatpush.msra.mxu0 %v2582
        %2603 = vmatmul.f32.gmra.mxu0 %v2585
        %v2604 = vpop.f32.mrf.mxu0
        %v2605 = vadd.f32 0.0, %v2604
        %2606 = vdwg.mxu0
        %2607 = vrot.lane.b32.xlu0 %v2387, 64
        %v2608 = vpop.permute.xlu0 %2607
        %v2611 = vsel %vm2512, %v2555, 0
        %2613 = vmatpush.msra.mxu0 0.0
        %2614 = vmatpush.msra.mxu0 0.0
        %2615 = vmatpush.msra.mxu0 0.0
        %2616 = vmatpush.msra.mxu0 0.0
        %2617 = vmatpush.msra.mxu0 0.0
        %2618 = vmatpush.msra.mxu0 0.0
        %2619 = vmatpush.msra.mxu0 0.0
        %2620 = vmatpush.msra.mxu0 0.0
        %2621 = vmatpush.msra.mxu0 0.0
        %2622 = vmatpush.msra.mxu0 0.0
        %2623 = vmatpush.msra.mxu0 0.0
        %2624 = vmatpush.msra.mxu0 0.0
        %2625 = vmatpush.msra.mxu0 0.0
        %2626 = vmatpush.msra.mxu0 0.0
        %2627 = vmatpush.msra.mxu0 0.0
        %2628 = vmatpush.msra.mxu0 %v2608
        %2629 = vmatmul.f32.gmra.mxu0 %v2611
        %v2630 = vpop.f32.mrf.mxu0
        %v2631 = vadd.f32 0.0, %v2630
        %2632 = vdwg.mxu0
        %2633 = vrot.lane.b32.xlu0 %v2387, 32
        %v2634 = vpop.permute.xlu0 %2633
        %v2637 = vsel %vm2512, %v2556, 0
        %2639 = vmatpush.msra.mxu0 0.0
        %2640 = vmatpush.msra.mxu0 0.0
        %2641 = vmatpush.msra.mxu0 0.0
        %2642 = vmatpush.msra.mxu0 0.0
        %2643 = vmatpush.msra.mxu0 0.0
        %2644 = vmatpush.msra.mxu0 0.0
        %2645 = vmatpush.msra.mxu0 0.0
        %2646 = vmatpush.msra.mxu0 0.0
        %2647 = vmatpush.msra.mxu0 0.0
        %2648 = vmatpush.msra.mxu0 0.0
        %2649 = vmatpush.msra.mxu0 0.0
        %2650 = vmatpush.msra.mxu0 0.0
        %2651 = vmatpush.msra.mxu0 0.0
        %2652 = vmatpush.msra.mxu0 0.0
        %2653 = vmatpush.msra.mxu0 0.0
        %2654 = vmatpush.msra.mxu0 %v2634
        %2655 = vmatmul.f32.gmra.mxu0 %v2637
        %v2656 = vpop.f32.mrf.mxu0
        %v2657 = vadd.f32 0.0, %v2656
        %2658 = vdwg.mxu0
        %2660 = vrot.lane.b32.xlu0 %v2605, 32
        %v2661 = vpop.permute.xlu0 %2660
        %2664 = vrot.lane.b32.xlu0 %v2631, 64
        %v2665 = vpop.permute.xlu0 %2664
        %2668 = vrot.lane.b32.xlu0 %v2657, 96
        %v2669 = vpop.permute.xlu0 %2668
        %v2671 = vsel %vm2395, %v2578, %v2661
        %vm2672 = vcmask 523264
        %v2673 = vsel %vm2672, %v2671, %v2665
        %vm2674 = vcmask 785408
        %v2675 = vsel %vm2674, %v2673, %v2669
        %v2676 = vpack.c.bf16 %v2675, %v2675
        %v2677 = vld [vmem:[%s940] sm:$0xf]
        %v2678 = vld [vmem:[%s940 + $0x4] sm:$0xf]
        %v2679 = vld [vmem:[%s940 + $0x8] sm:$0xf]
        %v2680 = vld [vmem:[%s940 + $0xc] sm:$0xf]
        %v2681 = vld [vmem:[%s940 + $0x10] sm:$0xf]
        %v2682 = vld [vmem:[%s940 + $0x14] sm:$0xf]
        %v2683 = vld [vmem:[%s940 + $0x18] sm:$0xf]
        %v2684 = vld [vmem:[%s940 + $0x1c] sm:$0xf]
        %v2685 = vld [vmem:[%s940 + $0x20] sm:$0xf]
        %v2686 = vld [vmem:[%s940 + $0x24] sm:$0xf]
        %v2687 = vld [vmem:[%s940 + $0x28] sm:$0xf]
        %v2688 = vld [vmem:[%s940 + $0x2c] sm:$0xf]
        %v2689 = vld [vmem:[%s940 + $0x30] sm:$0xf]
        %v2690 = vld [vmem:[%s940 + $0x34] sm:$0xf]
        %v2691 = vld [vmem:[%s940 + $0x38] sm:$0xf]
        %v2692 = vld [vmem:[%s940 + $0x3c] sm:$0xf]
        %v2693 = vld [vmem:[%s949] sm:$0x1]
        %v2695 = vperm.slane %v2693, 0
        %v2713 = vunpack.c.l.b16 %v2677
        %v2714 = vunpack.c.l.b16 %v2678
        %v2715 = vunpack.c.l.b16 %v2679
        %v2716 = vunpack.c.l.b16 %v2680
        %v2717 = vunpack.c.l.b16 %v2681
        %v2718 = vunpack.c.l.b16 %v2682
        %v2719 = vunpack.c.l.b16 %v2683
        %v2720 = vunpack.c.l.b16 %v2684
        %v2721 = vunpack.c.l.b16 %v2685
        %v2722 = vunpack.c.l.b16 %v2686
        %v2723 = vunpack.c.l.b16 %v2687
        %v2724 = vunpack.c.l.b16 %v2688
        %v2725 = vunpack.c.l.b16 %v2689
        %v2726 = vunpack.c.l.b16 %v2690
        %v2727 = vunpack.c.l.b16 %v2691
        %v2728 = vunpack.c.l.b16 %v2692
        %v2729 = vpack.c.b16 %v2714, %v2713
        %v2730 = vpack.c.b16 %v2716, %v2715
        %v2731 = vpack.c.b16 %v2718, %v2717
        %v2732 = vpack.c.b16 %v2720, %v2719
        %v2733 = vpack.c.b16 %v2722, %v2721
        %v2734 = vpack.c.b16 %v2724, %v2723
        %v2735 = vpack.c.b16 %v2726, %v2725
        %v2736 = vpack.c.b16 %v2728, %v2727
        %2745 = vmatpush.bf16.msra.mxu0 %v2736
        %2746 = vmatpush.bf16.msra.mxu0 %v2735
        %2747 = vmatpush.bf16.msra.mxu0 %v2734
        %2748 = vmatpush.bf16.msra.mxu0 %v2733
        %2749 = vmatpush.bf16.msra.mxu0 %v2732
        %2750 = vmatpush.bf16.msra.mxu0 %v2731
        %2751 = vmatpush.bf16.msra.mxu0 %v2730
        %2752 = vmatpush.bf16.msra.mxu0 %v2729
        %2753 = vmatmul.bf16.gmra.mxu0 %v2676
        %v2754 = vpop.f32.mrf.mxu0
        %v2755 = vadd.f32 %v2695, %v2754
        %v2756 = vpop.f32.mrf.mxu0
        %2757 = vdwg.mxu0
        %v2758 = vadd.f32 %v2181, %v2755
        %v2759 = vld [vmem:[%s958] sm:$0x1]
        %v2760 = vld [vmem:[%s967] sm:$0x1]
        %2761 = vadd.xlane.f32.xlu0 %v2758
        %v2762 = vpop.xlane.xlu0 %2761
        %v2763 = vrcp.pop 128.0
        %v2764 = vmul.f32 128.0, %v2763
        %v2765 = vsub.f32 1.0, %v2764
        %v2766 = vmul.f32 %v2763, %v2765
        %v2767 = vadd.f32 %v2763, %v2766
        %vm2768 = vweird.f32 %v2763
        %v2769 = vsel %vm2768, %v2763, %v2767
        %v2770 = vmul.f32 %v2762, %v2769
        %v2771 = vsub.f32 %v2758, %v2770
        %v2772 = vmul.f32 %v2771, %v2771
        %2773 = vadd.xlane.f32.xlu0 %v2772
        %v2774 = vpop.xlane.xlu0 %2773
        %v2775 = vmul.f32 %v2774, %v2769
        %v2776 = vadd.f32 %v2775, 1e-12
        %v2777 = vrsqrt.pop %v2776
        %v2778 = vmul.f32 %v2777, %v2776
        %v2779 = vmul.f32 %v2778, %v2777
        %v2780 = vmul.f32 0.5, %v2779
        %v2781 = vsub.f32 1.5, %v2780
        %v2782 = vmul.f32 %v2777, %v2781
        %vm2783 = vweird.f32 %v2776
        %vm2784 = vweird.f32 %v2777
        %vm2785 = vmor %vm2783, %vm2784
        %v2786 = vsel %vm2785, %v2777, %v2782
        %v2787 = vmul.f32 %v2771, %v2786
        %v2789 = vperm.slane %v2759, 0
        %v2791 = vmul.f32 %v2787, %v2789
        %v2793 = vperm.slane %v2760, 0
        %v2795 = vadd.f32 %v2791, %v2793
        %v2796 = vpack.c.bf16 %v2795, %v2795
        %v2797 = vld [vmem:[%s977] sm:$0xff]
        %v2798 = vld [vmem:[%s977 + $0x8] sm:$0xff]
        %v2799 = vld [vmem:[%s977 + $0x10] sm:$0xff]
        %v2800 = vld [vmem:[%s977 + $0x18] sm:$0xff]
        %v2801 = vld [vmem:[%s977 + $0x20] sm:$0xff]
        %v2802 = vld [vmem:[%s977 + $0x28] sm:$0xff]
        %v2803 = vld [vmem:[%s977 + $0x30] sm:$0xff]
        %v2804 = vld [vmem:[%s977 + $0x38] sm:$0xff]
        %v2805 = vld [vmem:[%s977 + $0x40] sm:$0xff]
        %v2806 = vld [vmem:[%s977 + $0x48] sm:$0xff]
        %v2807 = vld [vmem:[%s977 + $0x50] sm:$0xff]
        %v2808 = vld [vmem:[%s977 + $0x58] sm:$0xff]
        %v2809 = vld [vmem:[%s977 + $0x60] sm:$0xff]
        %v2810 = vld [vmem:[%s977 + $0x68] sm:$0xff]
        %v2811 = vld [vmem:[%s977 + $0x70] sm:$0xff]
        %v2812 = vld [vmem:[%s977 + $0x78] sm:$0xff]
        %v2813 = vld [vmem:[%s987] sm:$0x3]
        %v2815 = vperm.slane %v2813, 0
        %v2816 = vperm.slane %v2813, 1
        %v2835 = vunpack.c.l.b16 %v2797
        %v2836 = vunpack.c.h.b16 %v2797
        %v2837 = vunpack.c.l.b16 %v2798
        %v2838 = vunpack.c.h.b16 %v2798
        %v2839 = vunpack.c.l.b16 %v2799
        %v2840 = vunpack.c.h.b16 %v2799
        %v2841 = vunpack.c.l.b16 %v2800
        %v2842 = vunpack.c.h.b16 %v2800
        %v2843 = vunpack.c.l.b16 %v2801
        %v2844 = vunpack.c.h.b16 %v2801
        %v2845 = vunpack.c.l.b16 %v2802
        %v2846 = vunpack.c.h.b16 %v2802
        %v2847 = vunpack.c.l.b16 %v2803
        %v2848 = vunpack.c.h.b16 %v2803
        %v2849 = vunpack.c.l.b16 %v2804
        %v2850 = vunpack.c.h.b16 %v2804
        %v2851 = vunpack.c.l.b16 %v2805
        %v2852 = vunpack.c.h.b16 %v2805
        %v2853 = vunpack.c.l.b16 %v2806
        %v2854 = vunpack.c.h.b16 %v2806
        %v2855 = vunpack.c.l.b16 %v2807
        %v2856 = vunpack.c.h.b16 %v2807
        %v2857 = vunpack.c.l.b16 %v2808
        %v2858 = vunpack.c.h.b16 %v2808
        %v2859 = vunpack.c.l.b16 %v2809
        %v2860 = vunpack.c.h.b16 %v2809
        %v2861 = vunpack.c.l.b16 %v2810
        %v2862 = vunpack.c.h.b16 %v2810
        %v2863 = vunpack.c.l.b16 %v2811
        %v2864 = vunpack.c.h.b16 %v2811
        %v2865 = vunpack.c.l.b16 %v2812
        %v2866 = vunpack.c.h.b16 %v2812
        %v2867 = vpack.c.b16 %v2837, %v2835
        %v2868 = vpack.c.b16 %v2838, %v2836
        %v2869 = vpack.c.b16 %v2841, %v2839
        %v2870 = vpack.c.b16 %v2842, %v2840
        %v2871 = vpack.c.b16 %v2845, %v2843
        %v2872 = vpack.c.b16 %v2846, %v2844
        %v2873 = vpack.c.b16 %v2849, %v2847
        %v2874 = vpack.c.b16 %v2850, %v2848
        %v2875 = vpack.c.b16 %v2853, %v2851
        %v2876 = vpack.c.b16 %v2854, %v2852
        %v2877 = vpack.c.b16 %v2857, %v2855
        %v2878 = vpack.c.b16 %v2858, %v2856
        %v2879 = vpack.c.b16 %v2861, %v2859
        %v2880 = vpack.c.b16 %v2862, %v2860
        %v2881 = vpack.c.b16 %v2865, %v2863
        %v2882 = vpack.c.b16 %v2866, %v2864
        %2899 = vmatpush.bf16.msra.mxu0 %v2881
        %2900 = vmatpush.bf16.msra.mxu0 %v2879
        %2901 = vmatpush.bf16.msra.mxu0 %v2877
        %2902 = vmatpush.bf16.msra.mxu0 %v2875
        %2903 = vmatpush.bf16.msra.mxu0 %v2873
        %2904 = vmatpush.bf16.msra.mxu0 %v2871
        %2905 = vmatpush.bf16.msra.mxu0 %v2869
        %2906 = vmatpush.bf16.msra.mxu0 %v2867
        %2907 = vmatmul.bf16.gmra.mxu0 %v2796
        %v2908 = vpop.f32.mrf.mxu0
        %v2909 = vadd.f32 %v2815, %v2908
        %v2910 = vpop.f32.mrf.mxu0
        %2911 = vdwg.mxu0
        %2912 = vmatpush.bf16.msra.mxu0 %v2882
        %2913 = vmatpush.bf16.msra.mxu0 %v2880
        %2914 = vmatpush.bf16.msra.mxu0 %v2878
        %2915 = vmatpush.bf16.msra.mxu0 %v2876
        %2916 = vmatpush.bf16.msra.mxu0 %v2874
        %2917 = vmatpush.bf16.msra.mxu0 %v2872
        %2918 = vmatpush.bf16.msra.mxu0 %v2870
        %2919 = vmatpush.bf16.msra.mxu0 %v2868
        %2920 = vmatmul.bf16.gmra.mxu0 %v2796
        %v2921 = vpop.f32.mrf.mxu0
        %v2922 = vadd.f32 %v2816, %v2921
        %v2923 = vpop.f32.mrf.mxu0
        %2924 = vdwg.mxu0
        %v2925 = vmul.f32 %v2909, %v2909
        %v2926 = vmul.f32 %v2922, %v2922
        %v2927 = vmul.f32 %v2909, %v2925
        %v2928 = vmul.f32 %v2922, %v2926
        %v2929 = vmul.f32 %v2927, 0.044715
        %v2930 = vmul.f32 %v2928, 0.044715
        %v2931 = vadd.f32 %v2909, %v2929
        %v2932 = vadd.f32 %v2922, %v2930
        %v2933 = vmul.f32 %v2931, 0.7978846
        %v2934 = vmul.f32 %v2932, 0.7978846
        %v2935 = vtanh.pop %v2933
        %v2936 = vtanh.pop %v2934
        %v2937 = vadd.f32 %v2935, 1.0
        %v2938 = vadd.f32 %v2936, 1.0
        %v2939 = vmul.f32 %v2937, 0.5
        %v2940 = vmul.f32 %v2938, 0.5
        %v2941 = vmul.f32 %v2909, %v2939
        %v2942 = vmul.f32 %v2922, %v2940
        %v2943 = vpack.c.bf16 %v2941, %v2941
        %v2944 = vpack.c.bf16 %v2942, %v2942
        %v2945 = vld [vmem:[%s997] sm:$0xf]
        %v2946 = vld [vmem:[%s997 + $0x4] sm:$0xf]
        %v2947 = vld [vmem:[%s997 + $0x8] sm:$0xf]
        %v2948 = vld [vmem:[%s997 + $0xc] sm:$0xf]
        %v2949 = vld [vmem:[%s997 + $0x10] sm:$0xf]
        %v2950 = vld [vmem:[%s997 + $0x14] sm:$0xf]
        %v2951 = vld [vmem:[%s997 + $0x18] sm:$0xf]
        %v2952 = vld [vmem:[%s997 + $0x1c] sm:$0xf]
        %v2953 = vld [vmem:[%s997 + $0x20] sm:$0xf]
        %v2954 = vld [vmem:[%s997 + $0x24] sm:$0xf]
        %v2955 = vld [vmem:[%s997 + $0x28] sm:$0xf]
        %v2956 = vld [vmem:[%s997 + $0x2c] sm:$0xf]
        %v2957 = vld [vmem:[%s997 + $0x30] sm:$0xf]
        %v2958 = vld [vmem:[%s997 + $0x34] sm:$0xf]
        %v2959 = vld [vmem:[%s997 + $0x38] sm:$0xf]
        %v2960 = vld [vmem:[%s997 + $0x3c] sm:$0xf]
        %v2961 = vld [vmem:[%s997 + $0x40] sm:$0xf]
        %v2962 = vld [vmem:[%s997 + $0x44] sm:$0xf]
        %v2963 = vld [vmem:[%s997 + $0x48] sm:$0xf]
        %v2964 = vld [vmem:[%s997 + $0x4c] sm:$0xf]
        %v2965 = vld [vmem:[%s997 + $0x50] sm:$0xf]
        %v2966 = vld [vmem:[%s997 + $0x54] sm:$0xf]
        %v2967 = vld [vmem:[%s997 + $0x58] sm:$0xf]
        %v2968 = vld [vmem:[%s997 + $0x5c] sm:$0xf]
        %v2969 = vld [vmem:[%s997 + $0x60] sm:$0xf]
        %v2970 = vld [vmem:[%s997 + $0x64] sm:$0xf]
        %v2971 = vld [vmem:[%s997 + $0x68] sm:$0xf]
        %v2972 = vld [vmem:[%s997 + $0x6c] sm:$0xf]
        %v2973 = vld [vmem:[%s997 + $0x70] sm:$0xf]
        %v2974 = vld [vmem:[%s997 + $0x74] sm:$0xf]
        %v2975 = vld [vmem:[%s997 + $0x78] sm:$0xf]
        %v2976 = vld [vmem:[%s997 + $0x7c] sm:$0xf]
        %v2977 = vld [vmem:[%s1006] sm:$0x1]
        %v2979 = vperm.slane %v2977, 0
        %v3013 = vunpack.c.l.b16 %v2945
        %v3014 = vunpack.c.l.b16 %v2946
        %v3015 = vunpack.c.l.b16 %v2947
        %v3016 = vunpack.c.l.b16 %v2948
        %v3017 = vunpack.c.l.b16 %v2949
        %v3018 = vunpack.c.l.b16 %v2950
        %v3019 = vunpack.c.l.b16 %v2951
        %v3020 = vunpack.c.l.b16 %v2952
        %v3021 = vunpack.c.l.b16 %v2953
        %v3022 = vunpack.c.l.b16 %v2954
        %v3023 = vunpack.c.l.b16 %v2955
        %v3024 = vunpack.c.l.b16 %v2956
        %v3025 = vunpack.c.l.b16 %v2957
        %v3026 = vunpack.c.l.b16 %v2958
        %v3027 = vunpack.c.l.b16 %v2959
        %v3028 = vunpack.c.l.b16 %v2960
        %v3029 = vunpack.c.l.b16 %v2961
        %v3030 = vunpack.c.l.b16 %v2962
        %v3031 = vunpack.c.l.b16 %v2963
        %v3032 = vunpack.c.l.b16 %v2964
        %v3033 = vunpack.c.l.b16 %v2965
        %v3034 = vunpack.c.l.b16 %v2966
        %v3035 = vunpack.c.l.b16 %v2967
        %v3036 = vunpack.c.l.b16 %v2968
        %v3037 = vunpack.c.l.b16 %v2969
        %v3038 = vunpack.c.l.b16 %v2970
        %v3039 = vunpack.c.l.b16 %v2971
        %v3040 = vunpack.c.l.b16 %v2972
        %v3041 = vunpack.c.l.b16 %v2973
        %v3042 = vunpack.c.l.b16 %v2974
        %v3043 = vunpack.c.l.b16 %v2975
        %v3044 = vunpack.c.l.b16 %v2976
        %v3045 = vpack.c.b16 %v3014, %v3013
        %v3046 = vpack.c.b16 %v3016, %v3015
        %v3047 = vpack.c.b16 %v3018, %v3017
        %v3048 = vpack.c.b16 %v3020, %v3019
        %v3049 = vpack.c.b16 %v3022, %v3021
        %v3050 = vpack.c.b16 %v3024, %v3023
        %v3051 = vpack.c.b16 %v3026, %v3025
        %v3052 = vpack.c.b16 %v3028, %v3027
        %v3053 = vpack.c.b16 %v3030, %v3029
        %v3054 = vpack.c.b16 %v3032, %v3031
        %v3055 = vpack.c.b16 %v3034, %v3033
        %v3056 = vpack.c.b16 %v3036, %v3035
        %v3057 = vpack.c.b16 %v3038, %v3037
        %v3058 = vpack.c.b16 %v3040, %v3039
        %v3059 = vpack.c.b16 %v3042, %v3041
        %v3060 = vpack.c.b16 %v3044, %v3043
        %3077 = vmatpush.bf16.msra.mxu0 %v3052
        %3078 = vmatpush.bf16.msra.mxu0 %v3051
        %3079 = vmatpush.bf16.msra.mxu0 %v3050
        %3080 = vmatpush.bf16.msra.mxu0 %v3049
        %3081 = vmatpush.bf16.msra.mxu0 %v3048
        %3082 = vmatpush.bf16.msra.mxu0 %v3047
        %3083 = vmatpush.bf16.msra.mxu0 %v3046
        %3084 = vmatpush.bf16.msra.mxu0 %v3045
        %3085 = vmatmul.bf16.gmra.mxu0 %v2943
        %v3086 = vpop.f32.mrf.mxu0
        %v3087 = vadd.f32 %v2979, %v3086
        %v3088 = vpop.f32.mrf.mxu0
        %3089 = vdwg.mxu0
        %3090 = vmatpush.bf16.msra.mxu0 %v3060
        %3091 = vmatpush.bf16.msra.mxu0 %v3059
        %3092 = vmatpush.bf16.msra.mxu0 %v3058
        %3093 = vmatpush.bf16.msra.mxu0 %v3057
        %3094 = vmatpush.bf16.msra.mxu0 %v3056
        %3095 = vmatpush.bf16.msra.mxu0 %v3055
        %3096 = vmatpush.bf16.msra.mxu0 %v3054
        %3097 = vmatpush.bf16.msra.mxu0 %v3053
        %3098 = vmatmul.bf16.gmra.mxu0 %v2944
        %v3099 = vpop.f32.mrf.mxu0
        %v3100 = vadd.f32 %v3087, %v3099
        %v3101 = vpop.f32.mrf.mxu0
        %3102 = vdwg.mxu0
        %v3103 = vadd.f32 %v2795, %v3100
        %v3104 = vld [vmem:[%s1015] sm:$0x1]
        %v3105 = vld [vmem:[%s1024] sm:$0x1]
        %3106 = vadd.xlane.f32.xlu0 %v3103
        %v3107 = vpop.xlane.xlu0 %3106
        %v3108 = vmul.f32 %v3107, %v2769
        %v3109 = vsub.f32 %v3103, %v3108
        %v3110 = vmul.f32 %v3109, %v3109
        %3111 = vadd.xlane.f32.xlu0 %v3110
        %v3112 = vpop.xlane.xlu0 %3111
        %v3113 = vmul.f32 %v3112, %v2769
        %v3114 = vadd.f32 %v3113, 1e-12
        %v3115 = vrsqrt.pop %v3114
        %v3116 = vmul.f32 %v3115, %v3114
        %v3117 = vmul.f32 %v3116, %v3115
        %v3118 = vmul.f32 0.5, %v3117
        %v3119 = vsub.f32 1.5, %v3118
        %v3120 = vmul.f32 %v3115, %v3119
        %vm3121 = vweird.f32 %v3114
        %vm3122 = vweird.f32 %v3115
        %vm3123 = vmor %vm3121, %vm3122
        %v3124 = vsel %vm3123, %v3115, %v3120
        %v3125 = vmul.f32 %v3109, %v3124
        %v3127 = vperm.slane %v3104, 0
        %v3129 = vmul.f32 %v3125, %v3127
        %v3131 = vperm.slane %v3105, 0
        %v3133 = vadd.f32 %v3129, %v3131
        %3134 = vst [vmem:[#allocation2] sm:$0xff] %v3133
        %p3135 = scmp.eq.s32.totalorder %s47, 1
        // Predicated region
        $region217: #{_lambda_.1} parent=99 // pred_check
          %p3136 = pneg %p3135
        $region218: #{_lambda_.1} parent=99 // pred_check_branch
          %3138 = sbr.rel (%p3136) target = $region220
        $region219: #{_lambda_.1} parent=99 // pred_region
          %v3139 = vpack.c.bf16 %v3133, %v3133
          %s3140 = smul.u32 4, 16
          %s3141 = smul.u32 %s3140, 2
          %s3142 = sshll.u32 %s3141, 4
          %3143 = dma.done [#allocation6], %s3142
          %s3144 = scalar_lea.hbm %s21, 128
          %s3145 = scalar_lea.vmem [#allocation5], 128
          %s3146 = scalar_lea.sflag [#allocation6], 1
          // Predicated region
          $region221: #{_lambda_.1} parent=219 // pred_check
            _
          $region222: #{_lambda_.1} parent=219 // pred_check_branch
            %3148 = sbr.rel target = $region224
          $region223: #{_lambda_.1} parent=219 // pred_region
            %3149 = sst [smem:[#allocation36]] [#allocation55]
            %3150 = sst [smem:[#allocation37]] [#allocation54]
          $region224: #{_lambda_.1} parent=219 // pred_fallthru
            _
          %3152 = shalt.err (0)
          %s3154 = sshll.u32 %s3144, 4
          %s3155 = int_to_ptr.hbm [resolvable:$true] %s3154
          %s3156 = sshll.u32 %s3145, 4
          %s3157 = int_to_ptr.vmem [resolvable:$true] %s3156
          %3159 = dma.hbm_to_vmem [thread:$0]  %s3155, 2048, %s3157, %s3146
          %v3160 = vld [vmem:[#allocation5] sm:$0xff]
          %v3161 = vld [vmem:[#allocation5 + $0x8] sm:$0xff]
          %v3162 = vld [vmem:[#allocation5 + $0x10] sm:$0xff]
          %v3163 = vld [vmem:[#allocation5 + $0x18] sm:$0xff]
          %v3164 = vld [vmem:[#allocation5 + $0x20] sm:$0xff]
          %v3165 = vld [vmem:[#allocation5 + $0x28] sm:$0xff]
          %v3166 = vld [vmem:[#allocation5 + $0x30] sm:$0xff]
          %v3167 = vld [vmem:[#allocation5 + $0x38] sm:$0xff]
          %v3168 = vld [vmem:[#allocation5 + $0x40] sm:$0xff]
          %v3169 = vld [vmem:[#allocation5 + $0x48] sm:$0xff]
          %v3170 = vld [vmem:[#allocation5 + $0x50] sm:$0xff]
          %v3171 = vld [vmem:[#allocation5 + $0x58] sm:$0xff]
          %v3172 = vld [vmem:[#allocation5 + $0x60] sm:$0xff]
          %v3173 = vld [vmem:[#allocation5 + $0x68] sm:$0xff]
          %v3174 = vld [vmem:[#allocation5 + $0x70] sm:$0xff]
          %v3175 = vld [vmem:[#allocation5 + $0x78] sm:$0xff]
          %v3192 = vunpack.c.l.b16 %v3160
          %v3193 = vunpack.c.h.b16 %v3160
          %v3194 = vunpack.c.l.b16 %v3161
          %v3195 = vunpack.c.h.b16 %v3161
          %v3196 = vunpack.c.l.b16 %v3162
          %v3197 = vunpack.c.h.b16 %v3162
          %v3198 = vunpack.c.l.b16 %v3163
          %v3199 = vunpack.c.h.b16 %v3163
          %v3200 = vunpack.c.l.b16 %v3164
          %v3201 = vunpack.c.h.b16 %v3164
          %v3202 = vunpack.c.l.b16 %v3165
          %v3203 = vunpack.c.h.b16 %v3165
          %v3204 = vunpack.c.l.b16 %v3166
          %v3205 = vunpack.c.h.b16 %v3166
          %v3206 = vunpack.c.l.b16 %v3167
          %v3207 = vunpack.c.h.b16 %v3167
          %v3208 = vunpack.c.l.b16 %v3168
          %v3209 = vunpack.c.h.b16 %v3168
          %v3210 = vunpack.c.l.b16 %v3169
          %v3211 = vunpack.c.h.b16 %v3169
          %v3212 = vunpack.c.l.b16 %v3170
          %v3213 = vunpack.c.h.b16 %v3170
          %v3214 = vunpack.c.l.b16 %v3171
          %v3215 = vunpack.c.h.b16 %v3171
          %v3216 = vunpack.c.l.b16 %v3172
          %v3217 = vunpack.c.h.b16 %v3172
          %v3218 = vunpack.c.l.b16 %v3173
          %v3219 = vunpack.c.h.b16 %v3173
          %v3220 = vunpack.c.l.b16 %v3174
          %v3221 = vunpack.c.h.b16 %v3174
          %v3222 = vunpack.c.l.b16 %v3175
          %v3223 = vunpack.c.h.b16 %v3175
          %v3224 = vpack.c.b16 %v3194, %v3192
          %v3225 = vpack.c.b16 %v3195, %v3193
          %v3226 = vpack.c.b16 %v3198, %v3196
          %v3227 = vpack.c.b16 %v3199, %v3197
          %v3228 = vpack.c.b16 %v3202, %v3200
          %v3229 = vpack.c.b16 %v3203, %v3201
          %v3230 = vpack.c.b16 %v3206, %v3204
          %v3231 = vpack.c.b16 %v3207, %v3205
          %v3232 = vpack.c.b16 %v3210, %v3208
          %v3233 = vpack.c.b16 %v3211, %v3209
          %v3234 = vpack.c.b16 %v3214, %v3212
          %v3235 = vpack.c.b16 %v3215, %v3213
          %v3236 = vpack.c.b16 %v3218, %v3216
          %v3237 = vpack.c.b16 %v3219, %v3217
          %v3238 = vpack.c.b16 %v3222, %v3220
          %v3239 = vpack.c.b16 %v3223, %v3221
          %3256 = vmatpush.bf16.msra.mxu0 %v3238
          %3257 = vmatpush.bf16.msra.mxu0 %v3236
          %3258 = vmatpush.bf16.msra.mxu0 %v3234
          %3259 = vmatpush.bf16.msra.mxu0 %v3232
          %3260 = vmatpush.bf16.msra.mxu0 %v3230
          %3261 = vmatpush.bf16.msra.mxu0 %v3228
          %3262 = vmatpush.bf16.msra.mxu0 %v3226
          %3263 = vmatpush.bf16.msra.mxu0 %v3224
          %3264 = vmatmul.bf16.gmra.mxu0 %v3139
          %v3265 = vpop.f32.mrf.mxu0
          %v3266 = vadd.f32 0.0, %v3265
          %v3267 = vpop.f32.mrf.mxu0
          %3268 = vdwg.mxu0
          %3269 = vmatpush.bf16.msra.mxu0 %v3239
          %3270 = vmatpush.bf16.msra.mxu0 %v3237
          %3271 = vmatpush.bf16.msra.mxu0 %v3235
          %3272 = vmatpush.bf16.msra.mxu0 %v3233
          %3273 = vmatpush.bf16.msra.mxu0 %v3231
          %3274 = vmatpush.bf16.msra.mxu0 %v3229
          %3275 = vmatpush.bf16.msra.mxu0 %v3227
          %3276 = vmatpush.bf16.msra.mxu0 %v3225
          %3277 = vmatmul.bf16.gmra.mxu0 %v3139
          %v3278 = vpop.f32.mrf.mxu0
          %v3279 = vadd.f32 0.0, %v3278
          %v3280 = vpop.f32.mrf.mxu0
          %3281 = vdwg.mxu0
          %s3282 = sshll.u32 %s3141, 4
          %3283 = dma.done %s3146, %s3282
          %s3284 = scalar_lea.hbm %s21, 256
          // Predicated region
          $region225: #{_lambda_.1} parent=219 // pred_check
            _
          $region226: #{_lambda_.1} parent=219 // pred_check_branch
            %3286 = sbr.rel target = $region228
          $region227: #{_lambda_.1} parent=219 // pred_region
            %3287 = sst [smem:[#allocation36]] [#allocation57]
            %3288 = sst [smem:[#allocation37]] [#allocation56]
          $region228: #{_lambda_.1} parent=219 // pred_fallthru
            _
          %3290 = shalt.err (0)
          %s3292 = sshll.u32 %s3284, 4
          %s3293 = int_to_ptr.hbm [resolvable:$true] %s3292
          %s3294 = sshll.u32 [#allocation5], 4
          %s3295 = int_to_ptr.vmem [resolvable:$true] %s3294
          %3297 = dma.hbm_to_vmem [thread:$0]  %s3293, 2048, %s3295, [#allocation6]
          %v3298 = vld [vmem:[%s3145] sm:$0xff]
          %v3299 = vld [vmem:[%s3145 + $0x8] sm:$0xff]
          %v3300 = vld [vmem:[%s3145 + $0x10] sm:$0xff]
          %v3301 = vld [vmem:[%s3145 + $0x18] sm:$0xff]
          %v3302 = vld [vmem:[%s3145 + $0x20] sm:$0xff]
          %v3303 = vld [vmem:[%s3145 + $0x28] sm:$0xff]
          %v3304 = vld [vmem:[%s3145 + $0x30] sm:$0xff]
          %v3305 = vld [vmem:[%s3145 + $0x38] sm:$0xff]
          %v3306 = vld [vmem:[%s3145 + $0x40] sm:$0xff]
          %v3307 = vld [vmem:[%s3145 + $0x48] sm:$0xff]
          %v3308 = vld [vmem:[%s3145 + $0x50] sm:$0xff]
          %v3309 = vld [vmem:[%s3145 + $0x58] sm:$0xff]
          %v3310 = vld [vmem:[%s3145 + $0x60] sm:$0xff]
          %v3311 = vld [vmem:[%s3145 + $0x68] sm:$0xff]
          %v3312 = vld [vmem:[%s3145 + $0x70] sm:$0xff]
          %v3313 = vld [vmem:[%s3145 + $0x78] sm:$0xff]
          %v3315 = vunpack.c.l.b16 %v3139
          %v3316 = vpack.c.b16 %v3315, %v3315
          %v3318 = vshrl.u32 %v3316, 16
          %v3337 = vunpack.c.l.b16 %v3298
          %v3338 = vunpack.c.h.b16 %v3298
          %v3339 = vunpack.c.l.b16 %v3299
          %v3340 = vunpack.c.h.b16 %v3299
          %v3341 = vunpack.c.l.b16 %v3300
          %v3342 = vunpack.c.h.b16 %v3300
          %v3343 = vunpack.c.l.b16 %v3301
          %v3344 = vunpack.c.h.b16 %v3301
          %v3345 = vunpack.c.l.b16 %v3302
          %v3346 = vunpack.c.h.b16 %v3302
          %v3347 = vunpack.c.l.b16 %v3303
          %v3348 = vunpack.c.h.b16 %v3303
          %v3349 = vunpack.c.l.b16 %v3304
          %v3350 = vunpack.c.h.b16 %v3304
          %v3351 = vunpack.c.l.b16 %v3305
          %v3352 = vunpack.c.h.b16 %v3305
          %v3353 = vunpack.c.l.b16 %v3306
          %v3354 = vunpack.c.h.b16 %v3306
          %v3355 = vunpack.c.l.b16 %v3307
          %v3356 = vunpack.c.h.b16 %v3307
          %v3357 = vunpack.c.l.b16 %v3308
          %v3358 = vunpack.c.h.b16 %v3308
          %v3359 = vunpack.c.l.b16 %v3309
          %v3360 = vunpack.c.h.b16 %v3309
          %v3361 = vunpack.c.l.b16 %v3310
          %v3362 = vunpack.c.h.b16 %v3310
          %v3363 = vunpack.c.l.b16 %v3311
          %v3364 = vunpack.c.h.b16 %v3311
          %v3365 = vunpack.c.l.b16 %v3312
          %v3366 = vunpack.c.h.b16 %v3312
          %v3367 = vunpack.c.l.b16 %v3313
          %v3368 = vunpack.c.h.b16 %v3313
          %v3369 = vpack.c.b16 %v3339, %v3337
          %v3370 = vpack.c.b16 %v3340, %v3338
          %v3371 = vpack.c.b16 %v3343, %v3341
          %v3372 = vpack.c.b16 %v3344, %v3342
          %v3373 = vpack.c.b16 %v3347, %v3345
          %v3374 = vpack.c.b16 %v3348, %v3346
          %v3375 = vpack.c.b16 %v3351, %v3349
          %v3376 = vpack.c.b16 %v3352, %v3350
          %v3377 = vpack.c.b16 %v3355, %v3353
          %v3378 = vpack.c.b16 %v3356, %v3354
          %v3379 = vpack.c.b16 %v3359, %v3357
          %v3380 = vpack.c.b16 %v3360, %v3358
          %v3381 = vpack.c.b16 %v3363, %v3361
          %v3382 = vpack.c.b16 %v3364, %v3362
          %v3383 = vpack.c.b16 %v3367, %v3365
          %v3384 = vpack.c.b16 %v3368, %v3366
          %3401 = vmatpush.bf16.msra.mxu0 %v3383
          %3402 = vmatpush.bf16.msra.mxu0 %v3381
          %3403 = vmatpush.bf16.msra.mxu0 %v3379
          %3404 = vmatpush.bf16.msra.mxu0 %v3377
          %3405 = vmatpush.bf16.msra.mxu0 %v3375
          %3406 = vmatpush.bf16.msra.mxu0 %v3373
          %3407 = vmatpush.bf16.msra.mxu0 %v3371
          %3408 = vmatpush.bf16.msra.mxu0 %v3369
          %3409 = vmatmul.bf16.gmra.mxu0 %v3318
          %v3410 = vpop.f32.mrf.mxu0
          %v3411 = vadd.f32 0.0, %v3410
          %v3412 = vpop.f32.mrf.mxu0
          %3413 = vdwg.mxu0
          %3414 = vmatpush.bf16.msra.mxu0 %v3384
          %3415 = vmatpush.bf16.msra.mxu0 %v3382
          %3416 = vmatpush.bf16.msra.mxu0 %v3380
          %3417 = vmatpush.bf16.msra.mxu0 %v3378
          %3418 = vmatpush.bf16.msra.mxu0 %v3376
          %3419 = vmatpush.bf16.msra.mxu0 %v3374
          %3420 = vmatpush.bf16.msra.mxu0 %v3372
          %3421 = vmatpush.bf16.msra.mxu0 %v3370
          %3422 = vmatmul.bf16.gmra.mxu0 %v3318
          %v3423 = vpop.f32.mrf.mxu0
          %v3424 = vadd.f32 0.0, %v3423
          %v3425 = vpop.f32.mrf.mxu0
          %3426 = vdwg.mxu0
          %s3427 = sshll.u32 %s3141, 4
          %3428 = dma.done [#allocation6], %s3427
          %s3429 = scalar_lea.hbm %s21, 384
          // Predicated region
          $region229: #{_lambda_.1} parent=219 // pred_check
            _
          $region230: #{_lambda_.1} parent=219 // pred_check_branch
            %3431 = sbr.rel target = $region232
          $region231: #{_lambda_.1} parent=219 // pred_region
            %3432 = sst [smem:[#allocation36]] [#allocation59]
            %3433 = sst [smem:[#allocation37]] [#allocation58]
          $region232: #{_lambda_.1} parent=219 // pred_fallthru
            _
          %3435 = shalt.err (0)
          %s3437 = sshll.u32 %s3429, 4
          %s3438 = int_to_ptr.hbm [resolvable:$true] %s3437
          %s3439 = sshll.u32 %s3145, 4
          %s3440 = int_to_ptr.vmem [resolvable:$true] %s3439
          %3442 = dma.hbm_to_vmem [thread:$0]  %s3438, 2048, %s3440, %s3146
          %v3443 = vld [vmem:[#allocation5] sm:$0xff]
          %v3444 = vld [vmem:[#allocation5 + $0x8] sm:$0xff]
          %v3445 = vld [vmem:[#allocation5 + $0x10] sm:$0xff]
          %v3446 = vld [vmem:[#allocation5 + $0x18] sm:$0xff]
          %v3447 = vld [vmem:[#allocation5 + $0x20] sm:$0xff]
          %v3448 = vld [vmem:[#allocation5 + $0x28] sm:$0xff]
          %v3449 = vld [vmem:[#allocation5 + $0x30] sm:$0xff]
          %v3450 = vld [vmem:[#allocation5 + $0x38] sm:$0xff]
          %v3451 = vld [vmem:[#allocation5 + $0x40] sm:$0xff]
          %v3452 = vld [vmem:[#allocation5 + $0x48] sm:$0xff]
          %v3453 = vld [vmem:[#allocation5 + $0x50] sm:$0xff]
          %v3454 = vld [vmem:[#allocation5 + $0x58] sm:$0xff]
          %v3455 = vld [vmem:[#allocation5 + $0x60] sm:$0xff]
          %v3456 = vld [vmem:[#allocation5 + $0x68] sm:$0xff]
          %v3457 = vld [vmem:[#allocation5 + $0x70] sm:$0xff]
          %v3458 = vld [vmem:[#allocation5 + $0x78] sm:$0xff]
          %v3459 = vrot.slane %v3316, 1
          %v3477 = vunpack.c.l.b16 %v3443
          %v3478 = vunpack.c.h.b16 %v3443
          %v3479 = vunpack.c.l.b16 %v3444
          %v3480 = vunpack.c.h.b16 %v3444
          %v3481 = vunpack.c.l.b16 %v3445
          %v3482 = vunpack.c.h.b16 %v3445
          %v3483 = vunpack.c.l.b16 %v3446
          %v3484 = vunpack.c.h.b16 %v3446
          %v3485 = vunpack.c.l.b16 %v3447
          %v3486 = vunpack.c.h.b16 %v3447
          %v3487 = vunpack.c.l.b16 %v3448
          %v3488 = vunpack.c.h.b16 %v3448
          %v3489 = vunpack.c.l.b16 %v3449
          %v3490 = vunpack.c.h.b16 %v3449
          %v3491 = vunpack.c.l.b16 %v3450
          %v3492 = vunpack.c.h.b16 %v3450
          %v3493 = vunpack.c.l.b16 %v3451
          %v3494 = vunpack.c.h.b16 %v3451
          %v3495 = vunpack.c.l.b16 %v3452
          %v3496 = vunpack.c.h.b16 %v3452
          %v3497 = vunpack.c.l.b16 %v3453
          %v3498 = vunpack.c.h.b16 %v3453
          %v3499 = vunpack.c.l.b16 %v3454
          %v3500 = vunpack.c.h.b16 %v3454
          %v3501 = vunpack.c.l.b16 %v3455
          %v3502 = vunpack.c.h.b16 %v3455
          %v3503 = vunpack.c.l.b16 %v3456
          %v3504 = vunpack.c.h.b16 %v3456
          %v3505 = vunpack.c.l.b16 %v3457
          %v3506 = vunpack.c.h.b16 %v3457
          %v3507 = vunpack.c.l.b16 %v3458
          %v3508 = vunpack.c.h.b16 %v3458
          %v3509 = vpack.c.b16 %v3479, %v3477
          %v3510 = vpack.c.b16 %v3480, %v3478
          %v3511 = vpack.c.b16 %v3483, %v3481
          %v3512 = vpack.c.b16 %v3484, %v3482
          %v3513 = vpack.c.b16 %v3487, %v3485
          %v3514 = vpack.c.b16 %v3488, %v3486
          %v3515 = vpack.c.b16 %v3491, %v3489
          %v3516 = vpack.c.b16 %v3492, %v3490
          %v3517 = vpack.c.b16 %v3495, %v3493
          %v3518 = vpack.c.b16 %v3496, %v3494
          %v3519 = vpack.c.b16 %v3499, %v3497
          %v3520 = vpack.c.b16 %v3500, %v3498
          %v3521 = vpack.c.b16 %v3503, %v3501
          %v3522 = vpack.c.b16 %v3504, %v3502
          %v3523 = vpack.c.b16 %v3507, %v3505
          %v3524 = vpack.c.b16 %v3508, %v3506
          %3541 = vmatpush.bf16.msra.mxu0 %v3523
          %3542 = vmatpush.bf16.msra.mxu0 %v3521
          %3543 = vmatpush.bf16.msra.mxu0 %v3519
          %3544 = vmatpush.bf16.msra.mxu0 %v3517
          %3545 = vmatpush.bf16.msra.mxu0 %v3515
          %3546 = vmatpush.bf16.msra.mxu0 %v3513
          %3547 = vmatpush.bf16.msra.mxu0 %v3511
          %3548 = vmatpush.bf16.msra.mxu0 %v3509
          %3549 = vmatmul.bf16.gmra.mxu0 %v3459
          %v3550 = vpop.f32.mrf.mxu0
          %v3551 = vadd.f32 0.0, %v3550
          %v3552 = vpop.f32.mrf.mxu0
          %3553 = vdwg.mxu0
          %3554 = vmatpush.bf16.msra.mxu0 %v3524
          %3555 = vmatpush.bf16.msra.mxu0 %v3522
          %3556 = vmatpush.bf16.msra.mxu0 %v3520
          %3557 = vmatpush.bf16.msra.mxu0 %v3518
          %3558 = vmatpush.bf16.msra.mxu0 %v3516
          %3559 = vmatpush.bf16.msra.mxu0 %v3514
          %3560 = vmatpush.bf16.msra.mxu0 %v3512
          %3561 = vmatpush.bf16.msra.mxu0 %v3510
          %3562 = vmatmul.bf16.gmra.mxu0 %v3459
          %v3563 = vpop.f32.mrf.mxu0
          %v3564 = vadd.f32 0.0, %v3563
          %v3565 = vpop.f32.mrf.mxu0
          %3566 = vdwg.mxu0
          %s3567 = sshll.u32 %s3141, 4
          %3568 = dma.done %s3146, %s3567
          %s3569 = scalar_lea.hbm %s21, 512
          // Predicated region
          $region233: #{_lambda_.1} parent=219 // pred_check
            _
          $region234: #{_lambda_.1} parent=219 // pred_check_branch
            %3571 = sbr.rel target = $region236
          $region235: #{_lambda_.1} parent=219 // pred_region
            %3572 = sst [smem:[#allocation36]] [#allocation61]
            %3573 = sst [smem:[#allocation37]] [#allocation60]
          $region236: #{_lambda_.1} parent=219 // pred_fallthru
            _
          %3575 = shalt.err (0)
          %s3577 = sshll.u32 %s3569, 4
          %s3578 = int_to_ptr.hbm [resolvable:$true] %s3577
          %s3579 = sshll.u32 [#allocation5], 4
          %s3580 = int_to_ptr.vmem [resolvable:$true] %s3579
          %3582 = dma.hbm_to_vmem [thread:$0]  %s3578, 2048, %s3580, [#allocation6]
          %v3583 = vld [vmem:[%s3145] sm:$0xff]
          %v3584 = vld [vmem:[%s3145 + $0x8] sm:$0xff]
          %v3585 = vld [vmem:[%s3145 + $0x10] sm:$0xff]
          %v3586 = vld [vmem:[%s3145 + $0x18] sm:$0xff]
          %v3587 = vld [vmem:[%s3145 + $0x20] sm:$0xff]
          %v3588 = vld [vmem:[%s3145 + $0x28] sm:$0xff]
          %v3589 = vld [vmem:[%s3145 + $0x30] sm:$0xff]
          %v3590 = vld [vmem:[%s3145 + $0x38] sm:$0xff]
          %v3591 = vld [vmem:[%s3145 + $0x40] sm:$0xff]
          %v3592 = vld [vmem:[%s3145 + $0x48] sm:$0xff]
          %v3593 = vld [vmem:[%s3145 + $0x50] sm:$0xff]
          %v3594 = vld [vmem:[%s3145 + $0x58] sm:$0xff]
          %v3595 = vld [vmem:[%s3145 + $0x60] sm:$0xff]
          %v3596 = vld [vmem:[%s3145 + $0x68] sm:$0xff]
          %v3597 = vld [vmem:[%s3145 + $0x70] sm:$0xff]
          %v3598 = vld [vmem:[%s3145 + $0x78] sm:$0xff]
          %v3599 = vrot.slane %v3318, 1
          %v3617 = vunpack.c.l.b16 %v3583
          %v3618 = vunpack.c.h.b16 %v3583
          %v3619 = vunpack.c.l.b16 %v3584
          %v3620 = vunpack.c.h.b16 %v3584
          %v3621 = vunpack.c.l.b16 %v3585
          %v3622 = vunpack.c.h.b16 %v3585
          %v3623 = vunpack.c.l.b16 %v3586
          %v3624 = vunpack.c.h.b16 %v3586
          %v3625 = vunpack.c.l.b16 %v3587
          %v3626 = vunpack.c.h.b16 %v3587
          %v3627 = vunpack.c.l.b16 %v3588
          %v3628 = vunpack.c.h.b16 %v3588
          %v3629 = vunpack.c.l.b16 %v3589
          %v3630 = vunpack.c.h.b16 %v3589
          %v3631 = vunpack.c.l.b16 %v3590
          %v3632 = vunpack.c.h.b16 %v3590
          %v3633 = vunpack.c.l.b16 %v3591
          %v3634 = vunpack.c.h.b16 %v3591
          %v3635 = vunpack.c.l.b16 %v3592
          %v3636 = vunpack.c.h.b16 %v3592
          %v3637 = vunpack.c.l.b16 %v3593
          %v3638 = vunpack.c.h.b16 %v3593
          %v3639 = vunpack.c.l.b16 %v3594
          %v3640 = vunpack.c.h.b16 %v3594
          %v3641 = vunpack.c.l.b16 %v3595
          %v3642 = vunpack.c.h.b16 %v3595
          %v3643 = vunpack.c.l.b16 %v3596
          %v3644 = vunpack.c.h.b16 %v3596
          %v3645 = vunpack.c.l.b16 %v3597
          %v3646 = vunpack.c.h.b16 %v3597
          %v3647 = vunpack.c.l.b16 %v3598
          %v3648 = vunpack.c.h.b16 %v3598
          %v3649 = vpack.c.b16 %v3619, %v3617
          %v3650 = vpack.c.b16 %v3620, %v3618
          %v3651 = vpack.c.b16 %v3623, %v3621
          %v3652 = vpack.c.b16 %v3624, %v3622
          %v3653 = vpack.c.b16 %v3627, %v3625
          %v3654 = vpack.c.b16 %v3628, %v3626
          %v3655 = vpack.c.b16 %v3631, %v3629
          %v3656 = vpack.c.b16 %v3632, %v3630
          %v3657 = vpack.c.b16 %v3635, %v3633
          %v3658 = vpack.c.b16 %v3636, %v3634
          %v3659 = vpack.c.b16 %v3639, %v3637
          %v3660 = vpack.c.b16 %v3640, %v3638
          %v3661 = vpack.c.b16 %v3643, %v3641
          %v3662 = vpack.c.b16 %v3644, %v3642
          %v3663 = vpack.c.b16 %v3647, %v3645
          %v3664 = vpack.c.b16 %v3648, %v3646
          %3681 = vmatpush.bf16.msra.mxu0 %v3663
          %3682 = vmatpush.bf16.msra.mxu0 %v3661
          %3683 = vmatpush.bf16.msra.mxu0 %v3659
          %3684 = vmatpush.bf16.msra.mxu0 %v3657
          %3685 = vmatpush.bf16.msra.mxu0 %v3655
          %3686 = vmatpush.bf16.msra.mxu0 %v3653
          %3687 = vmatpush.bf16.msra.mxu0 %v3651
          %3688 = vmatpush.bf16.msra.mxu0 %v3649
          %3689 = vmatmul.bf16.gmra.mxu0 %v3599
          %v3690 = vpop.f32.mrf.mxu0
          %v3691 = vadd.f32 0.0, %v3690
          %v3692 = vpop.f32.mrf.mxu0
          %3693 = vdwg.mxu0
          %3694 = vmatpush.bf16.msra.mxu0 %v3664
          %3695 = vmatpush.bf16.msra.mxu0 %v3662
          %3696 = vmatpush.bf16.msra.mxu0 %v3660
          %3697 = vmatpush.bf16.msra.mxu0 %v3658
          %3698 = vmatpush.bf16.msra.mxu0 %v3656
          %3699 = vmatpush.bf16.msra.mxu0 %v3654
          %3700 = vmatpush.bf16.msra.mxu0 %v3652
          %3701 = vmatpush.bf16.msra.mxu0 %v3650
          %3702 = vmatmul.bf16.gmra.mxu0 %v3599
          %v3703 = vpop.f32.mrf.mxu0
          %v3704 = vadd.f32 0.0, %v3703
          %v3705 = vpop.f32.mrf.mxu0
          %3706 = vdwg.mxu0
          %s3707 = sshll.u32 %s3141, 4
          %3708 = dma.done [#allocation6], %s3707
          %s3709 = scalar_lea.hbm %s21, 640
          // Predicated region
          $region237: #{_lambda_.1} parent=219 // pred_check
            _
          $region238: #{_lambda_.1} parent=219 // pred_check_branch
            %3711 = sbr.rel target = $region240
          $region239: #{_lambda_.1} parent=219 // pred_region
            %3712 = sst [smem:[#allocation36]] [#allocation63]
            %3713 = sst [smem:[#allocation37]] [#allocation62]
          $region240: #{_lambda_.1} parent=219 // pred_fallthru
            _
          %3715 = shalt.err (0)
          %s3717 = sshll.u32 %s3709, 4
          %s3718 = int_to_ptr.hbm [resolvable:$true] %s3717
          %s3719 = sshll.u32 %s3145, 4
          %s3720 = int_to_ptr.vmem [resolvable:$true] %s3719
          %3722 = dma.hbm_to_vmem [thread:$0]  %s3718, 2048, %s3720, %s3146
          %v3723 = vld [vmem:[#allocation5] sm:$0xff]
          %v3724 = vld [vmem:[#allocation5 + $0x8] sm:$0xff]
          %v3725 = vld [vmem:[#allocation5 + $0x10] sm:$0xff]
          %v3726 = vld [vmem:[#allocation5 + $0x18] sm:$0xff]
          %v3727 = vld [vmem:[#allocation5 + $0x20] sm:$0xff]
          %v3728 = vld [vmem:[#allocation5 + $0x28] sm:$0xff]
          %v3729 = vld [vmem:[#allocation5 + $0x30] sm:$0xff]
          %v3730 = vld [vmem:[#allocation5 + $0x38] sm:$0xff]
          %v3731 = vld [vmem:[#allocation5 + $0x40] sm:$0xff]
          %v3732 = vld [vmem:[#allocation5 + $0x48] sm:$0xff]
          %v3733 = vld [vmem:[#allocation5 + $0x50] sm:$0xff]
          %v3734 = vld [vmem:[#allocation5 + $0x58] sm:$0xff]
          %v3735 = vld [vmem:[#allocation5 + $0x60] sm:$0xff]
          %v3736 = vld [vmem:[#allocation5 + $0x68] sm:$0xff]
          %v3737 = vld [vmem:[#allocation5 + $0x70] sm:$0xff]
          %v3738 = vld [vmem:[#allocation5 + $0x78] sm:$0xff]
          %v3739 = vrot.slane %v3316, 2
          %v3757 = vunpack.c.l.b16 %v3723
          %v3758 = vunpack.c.h.b16 %v3723
          %v3759 = vunpack.c.l.b16 %v3724
          %v3760 = vunpack.c.h.b16 %v3724
          %v3761 = vunpack.c.l.b16 %v3725
          %v3762 = vunpack.c.h.b16 %v3725
          %v3763 = vunpack.c.l.b16 %v3726
          %v3764 = vunpack.c.h.b16 %v3726
          %v3765 = vunpack.c.l.b16 %v3727
          %v3766 = vunpack.c.h.b16 %v3727
          %v3767 = vunpack.c.l.b16 %v3728
          %v3768 = vunpack.c.h.b16 %v3728
          %v3769 = vunpack.c.l.b16 %v3729
          %v3770 = vunpack.c.h.b16 %v3729
          %v3771 = vunpack.c.l.b16 %v3730
          %v3772 = vunpack.c.h.b16 %v3730
          %v3773 = vunpack.c.l.b16 %v3731
          %v3774 = vunpack.c.h.b16 %v3731
          %v3775 = vunpack.c.l.b16 %v3732
          %v3776 = vunpack.c.h.b16 %v3732
          %v3777 = vunpack.c.l.b16 %v3733
          %v3778 = vunpack.c.h.b16 %v3733
          %v3779 = vunpack.c.l.b16 %v3734
          %v3780 = vunpack.c.h.b16 %v3734
          %v3781 = vunpack.c.l.b16 %v3735
          %v3782 = vunpack.c.h.b16 %v3735
          %v3783 = vunpack.c.l.b16 %v3736
          %v3784 = vunpack.c.h.b16 %v3736
          %v3785 = vunpack.c.l.b16 %v3737
          %v3786 = vunpack.c.h.b16 %v3737
          %v3787 = vunpack.c.l.b16 %v3738
          %v3788 = vunpack.c.h.b16 %v3738
          %v3789 = vpack.c.b16 %v3759, %v3757
          %v3790 = vpack.c.b16 %v3760, %v3758
          %v3791 = vpack.c.b16 %v3763, %v3761
          %v3792 = vpack.c.b16 %v3764, %v3762
          %v3793 = vpack.c.b16 %v3767, %v3765
          %v3794 = vpack.c.b16 %v3768, %v3766
          %v3795 = vpack.c.b16 %v3771, %v3769
          %v3796 = vpack.c.b16 %v3772, %v3770
          %v3797 = vpack.c.b16 %v3775, %v3773
          %v3798 = vpack.c.b16 %v3776, %v3774
          %v3799 = vpack.c.b16 %v3779, %v3777
          %v3800 = vpack.c.b16 %v3780, %v3778
          %v3801 = vpack.c.b16 %v3783, %v3781
          %v3802 = vpack.c.b16 %v3784, %v3782
          %v3803 = vpack.c.b16 %v3787, %v3785
          %v3804 = vpack.c.b16 %v3788, %v3786
          %3821 = vmatpush.bf16.msra.mxu0 %v3803
          %3822 = vmatpush.bf16.msra.mxu0 %v3801
          %3823 = vmatpush.bf16.msra.mxu0 %v3799
          %3824 = vmatpush.bf16.msra.mxu0 %v3797
          %3825 = vmatpush.bf16.msra.mxu0 %v3795
          %3826 = vmatpush.bf16.msra.mxu0 %v3793
          %3827 = vmatpush.bf16.msra.mxu0 %v3791
          %3828 = vmatpush.bf16.msra.mxu0 %v3789
          %3829 = vmatmul.bf16.gmra.mxu0 %v3739
          %v3830 = vpop.f32.mrf.mxu0
          %v3831 = vadd.f32 0.0, %v3830
          %v3832 = vpop.f32.mrf.mxu0
          %3833 = vdwg.mxu0
          %3834 = vmatpush.bf16.msra.mxu0 %v3804
          %3835 = vmatpush.bf16.msra.mxu0 %v3802
          %3836 = vmatpush.bf16.msra.mxu0 %v3800
          %3837 = vmatpush.bf16.msra.mxu0 %v3798
          %3838 = vmatpush.bf16.msra.mxu0 %v3796
          %3839 = vmatpush.bf16.msra.mxu0 %v3794
          %3840 = vmatpush.bf16.msra.mxu0 %v3792
          %3841 = vmatpush.bf16.msra.mxu0 %v3790
          %3842 = vmatmul.bf16.gmra.mxu0 %v3739
          %v3843 = vpop.f32.mrf.mxu0
          %v3844 = vadd.f32 0.0, %v3843
          %v3845 = vpop.f32.mrf.mxu0
          %3846 = vdwg.mxu0
          %s3847 = sshll.u32 %s3141, 4
          %3848 = dma.done %s3146, %s3847
          %s3849 = scalar_lea.hbm %s21, 768
          // Predicated region
          $region241: #{_lambda_.1} parent=219 // pred_check
            _
          $region242: #{_lambda_.1} parent=219 // pred_check_branch
            %3851 = sbr.rel target = $region244
          $region243: #{_lambda_.1} parent=219 // pred_region
            %3852 = sst [smem:[#allocation36]] [#allocation65]
            %3853 = sst [smem:[#allocation37]] [#allocation64]
          $region244: #{_lambda_.1} parent=219 // pred_fallthru
            _
          %3855 = shalt.err (0)
          %s3857 = sshll.u32 %s3849, 4
          %s3858 = int_to_ptr.hbm [resolvable:$true] %s3857
          %s3859 = sshll.u32 [#allocation5], 4
          %s3860 = int_to_ptr.vmem [resolvable:$true] %s3859
          %3862 = dma.hbm_to_vmem [thread:$0]  %s3858, 2048, %s3860, [#allocation6]
          %v3863 = vld [vmem:[%s3145] sm:$0xff]
          %v3864 = vld [vmem:[%s3145 + $0x8] sm:$0xff]
          %v3865 = vld [vmem:[%s3145 + $0x10] sm:$0xff]
          %v3866 = vld [vmem:[%s3145 + $0x18] sm:$0xff]
          %v3867 = vld [vmem:[%s3145 + $0x20] sm:$0xff]
          %v3868 = vld [vmem:[%s3145 + $0x28] sm:$0xff]
          %v3869 = vld [vmem:[%s3145 + $0x30] sm:$0xff]
          %v3870 = vld [vmem:[%s3145 + $0x38] sm:$0xff]
          %v3871 = vld [vmem:[%s3145 + $0x40] sm:$0xff]
          %v3872 = vld [vmem:[%s3145 + $0x48] sm:$0xff]
          %v3873 = vld [vmem:[%s3145 + $0x50] sm:$0xff]
          %v3874 = vld [vmem:[%s3145 + $0x58] sm:$0xff]
          %v3875 = vld [vmem:[%s3145 + $0x60] sm:$0xff]
          %v3876 = vld [vmem:[%s3145 + $0x68] sm:$0xff]
          %v3877 = vld [vmem:[%s3145 + $0x70] sm:$0xff]
          %v3878 = vld [vmem:[%s3145 + $0x78] sm:$0xff]
          %v3879 = vrot.slane %v3318, 2
          %v3897 = vunpack.c.l.b16 %v3863
          %v3898 = vunpack.c.h.b16 %v3863
          %v3899 = vunpack.c.l.b16 %v3864
          %v3900 = vunpack.c.h.b16 %v3864
          %v3901 = vunpack.c.l.b16 %v3865
          %v3902 = vunpack.c.h.b16 %v3865
          %v3903 = vunpack.c.l.b16 %v3866
          %v3904 = vunpack.c.h.b16 %v3866
          %v3905 = vunpack.c.l.b16 %v3867
          %v3906 = vunpack.c.h.b16 %v3867
          %v3907 = vunpack.c.l.b16 %v3868
          %v3908 = vunpack.c.h.b16 %v3868
          %v3909 = vunpack.c.l.b16 %v3869
          %v3910 = vunpack.c.h.b16 %v3869
          %v3911 = vunpack.c.l.b16 %v3870
          %v3912 = vunpack.c.h.b16 %v3870
          %v3913 = vunpack.c.l.b16 %v3871
          %v3914 = vunpack.c.h.b16 %v3871
          %v3915 = vunpack.c.l.b16 %v3872
          %v3916 = vunpack.c.h.b16 %v3872
          %v3917 = vunpack.c.l.b16 %v3873
          %v3918 = vunpack.c.h.b16 %v3873
          %v3919 = vunpack.c.l.b16 %v3874
          %v3920 = vunpack.c.h.b16 %v3874
          %v3921 = vunpack.c.l.b16 %v3875
          %v3922 = vunpack.c.h.b16 %v3875
          %v3923 = vunpack.c.l.b16 %v3876
          %v3924 = vunpack.c.h.b16 %v3876
          %v3925 = vunpack.c.l.b16 %v3877
          %v3926 = vunpack.c.h.b16 %v3877
          %v3927 = vunpack.c.l.b16 %v3878
          %v3928 = vunpack.c.h.b16 %v3878
          %v3929 = vpack.c.b16 %v3899, %v3897
          %v3930 = vpack.c.b16 %v3900, %v3898
          %v3931 = vpack.c.b16 %v3903, %v3901
          %v3932 = vpack.c.b16 %v3904, %v3902
          %v3933 = vpack.c.b16 %v3907, %v3905
          %v3934 = vpack.c.b16 %v3908, %v3906
          %v3935 = vpack.c.b16 %v3911, %v3909
          %v3936 = vpack.c.b16 %v3912, %v3910
          %v3937 = vpack.c.b16 %v3915, %v3913
          %v3938 = vpack.c.b16 %v3916, %v3914
          %v3939 = vpack.c.b16 %v3919, %v3917
          %v3940 = vpack.c.b16 %v3920, %v3918
          %v3941 = vpack.c.b16 %v3923, %v3921
          %v3942 = vpack.c.b16 %v3924, %v3922
          %v3943 = vpack.c.b16 %v3927, %v3925
          %v3944 = vpack.c.b16 %v3928, %v3926
          %3961 = vmatpush.bf16.msra.mxu0 %v3943
          %3962 = vmatpush.bf16.msra.mxu0 %v3941
          %3963 = vmatpush.bf16.msra.mxu0 %v3939
          %3964 = vmatpush.bf16.msra.mxu0 %v3937
          %3965 = vmatpush.bf16.msra.mxu0 %v3935
          %3966 = vmatpush.bf16.msra.mxu0 %v3933
          %3967 = vmatpush.bf16.msra.mxu0 %v3931
          %3968 = vmatpush.bf16.msra.mxu0 %v3929
          %3969 = vmatmul.bf16.gmra.mxu0 %v3879
          %v3970 = vpop.f32.mrf.mxu0
          %v3971 = vadd.f32 0.0, %v3970
          %v3972 = vpop.f32.mrf.mxu0
          %3973 = vdwg.mxu0
          %3974 = vmatpush.bf16.msra.mxu0 %v3944
          %3975 = vmatpush.bf16.msra.mxu0 %v3942
          %3976 = vmatpush.bf16.msra.mxu0 %v3940
          %3977 = vmatpush.bf16.msra.mxu0 %v3938
          %3978 = vmatpush.bf16.msra.mxu0 %v3936
          %3979 = vmatpush.bf16.msra.mxu0 %v3934
          %3980 = vmatpush.bf16.msra.mxu0 %v3932
          %3981 = vmatpush.bf16.msra.mxu0 %v3930
          %3982 = vmatmul.bf16.gmra.mxu0 %v3879
          %v3983 = vpop.f32.mrf.mxu0
          %v3984 = vadd.f32 0.0, %v3983
          %v3985 = vpop.f32.mrf.mxu0
          %3986 = vdwg.mxu0
          %s3987 = sshll.u32 %s3141, 4
          %3988 = dma.done [#allocation6], %s3987
          %s3989 = scalar_lea.hbm %s21, 896
          // Predicated region
          $region245: #{_lambda_.1} parent=219 // pred_check
            _
          $region246: #{_lambda_.1} parent=219 // pred_check_branch
            %3991 = sbr.rel target = $region248
          $region247: #{_lambda_.1} parent=219 // pred_region
            %3992 = sst [smem:[#allocation36]] [#allocation67]
            %3993 = sst [smem:[#allocation37]] [#allocation66]
          $region248: #{_lambda_.1} parent=219 // pred_fallthru
            _
          %3995 = shalt.err (0)
          %s3997 = sshll.u32 %s3989, 4
          %s3998 = int_to_ptr.hbm [resolvable:$true] %s3997
          %s3999 = sshll.u32 %s3145, 4
          %s4000 = int_to_ptr.vmem [resolvable:$true] %s3999
          %4002 = dma.hbm_to_vmem [thread:$0]  %s3998, 2048, %s4000, %s3146
          %v4003 = vld [vmem:[#allocation5] sm:$0xff]
          %v4004 = vld [vmem:[#allocation5 + $0x8] sm:$0xff]
          %v4005 = vld [vmem:[#allocation5 + $0x10] sm:$0xff]
          %v4006 = vld [vmem:[#allocation5 + $0x18] sm:$0xff]
          %v4007 = vld [vmem:[#allocation5 + $0x20] sm:$0xff]
          %v4008 = vld [vmem:[#allocation5 + $0x28] sm:$0xff]
          %v4009 = vld [vmem:[#allocation5 + $0x30] sm:$0xff]
          %v4010 = vld [vmem:[#allocation5 + $0x38] sm:$0xff]
          %v4011 = vld [vmem:[#allocation5 + $0x40] sm:$0xff]
          %v4012 = vld [vmem:[#allocation5 + $0x48] sm:$0xff]
          %v4013 = vld [vmem:[#allocation5 + $0x50] sm:$0xff]
          %v4014 = vld [vmem:[#allocation5 + $0x58] sm:$0xff]
          %v4015 = vld [vmem:[#allocation5 + $0x60] sm:$0xff]
          %v4016 = vld [vmem:[#allocation5 + $0x68] sm:$0xff]
          %v4017 = vld [vmem:[#allocation5 + $0x70] sm:$0xff]
          %v4018 = vld [vmem:[#allocation5 + $0x78] sm:$0xff]
          %v4019 = vrot.slane %v3316, 3
          %v4037 = vunpack.c.l.b16 %v4003
          %v4038 = vunpack.c.h.b16 %v4003
          %v4039 = vunpack.c.l.b16 %v4004
          %v4040 = vunpack.c.h.b16 %v4004
          %v4041 = vunpack.c.l.b16 %v4005
          %v4042 = vunpack.c.h.b16 %v4005
          %v4043 = vunpack.c.l.b16 %v4006
          %v4044 = vunpack.c.h.b16 %v4006
          %v4045 = vunpack.c.l.b16 %v4007
          %v4046 = vunpack.c.h.b16 %v4007
          %v4047 = vunpack.c.l.b16 %v4008
          %v4048 = vunpack.c.h.b16 %v4008
          %v4049 = vunpack.c.l.b16 %v4009
          %v4050 = vunpack.c.h.b16 %v4009
          %v4051 = vunpack.c.l.b16 %v4010
          %v4052 = vunpack.c.h.b16 %v4010
          %v4053 = vunpack.c.l.b16 %v4011
          %v4054 = vunpack.c.h.b16 %v4011
          %v4055 = vunpack.c.l.b16 %v4012
          %v4056 = vunpack.c.h.b16 %v4012
          %v4057 = vunpack.c.l.b16 %v4013
          %v4058 = vunpack.c.h.b16 %v4013
          %v4059 = vunpack.c.l.b16 %v4014
          %v4060 = vunpack.c.h.b16 %v4014
          %v4061 = vunpack.c.l.b16 %v4015
          %v4062 = vunpack.c.h.b16 %v4015
          %v4063 = vunpack.c.l.b16 %v4016
          %v4064 = vunpack.c.h.b16 %v4016
          %v4065 = vunpack.c.l.b16 %v4017
          %v4066 = vunpack.c.h.b16 %v4017
          %v4067 = vunpack.c.l.b16 %v4018
          %v4068 = vunpack.c.h.b16 %v4018
          %v4069 = vpack.c.b16 %v4039, %v4037
          %v4070 = vpack.c.b16 %v4040, %v4038
          %v4071 = vpack.c.b16 %v4043, %v4041
          %v4072 = vpack.c.b16 %v4044, %v4042
          %v4073 = vpack.c.b16 %v4047, %v4045
          %v4074 = vpack.c.b16 %v4048, %v4046
          %v4075 = vpack.c.b16 %v4051, %v4049
          %v4076 = vpack.c.b16 %v4052, %v4050
          %v4077 = vpack.c.b16 %v4055, %v4053
          %v4078 = vpack.c.b16 %v4056, %v4054
          %v4079 = vpack.c.b16 %v4059, %v4057
          %v4080 = vpack.c.b16 %v4060, %v4058
          %v4081 = vpack.c.b16 %v4063, %v4061
          %v4082 = vpack.c.b16 %v4064, %v4062
          %v4083 = vpack.c.b16 %v4067, %v4065
          %v4084 = vpack.c.b16 %v4068, %v4066
          %4101 = vmatpush.bf16.msra.mxu0 %v4083
          %4102 = vmatpush.bf16.msra.mxu0 %v4081
          %4103 = vmatpush.bf16.msra.mxu0 %v4079
          %4104 = vmatpush.bf16.msra.mxu0 %v4077
          %4105 = vmatpush.bf16.msra.mxu0 %v4075
          %4106 = vmatpush.bf16.msra.mxu0 %v4073
          %4107 = vmatpush.bf16.msra.mxu0 %v4071
          %4108 = vmatpush.bf16.msra.mxu0 %v4069
          %4109 = vmatmul.bf16.gmra.mxu0 %v4019
          %v4110 = vpop.f32.mrf.mxu0
          %v4111 = vadd.f32 0.0, %v4110
          %v4112 = vpop.f32.mrf.mxu0
          %4113 = vdwg.mxu0
          %4114 = vmatpush.bf16.msra.mxu0 %v4084
          %4115 = vmatpush.bf16.msra.mxu0 %v4082
          %4116 = vmatpush.bf16.msra.mxu0 %v4080
          %4117 = vmatpush.bf16.msra.mxu0 %v4078
          %4118 = vmatpush.bf16.msra.mxu0 %v4076
          %4119 = vmatpush.bf16.msra.mxu0 %v4074
          %4120 = vmatpush.bf16.msra.mxu0 %v4072
          %4121 = vmatpush.bf16.msra.mxu0 %v4070
          %4122 = vmatmul.bf16.gmra.mxu0 %v4019
          %v4123 = vpop.f32.mrf.mxu0
          %v4124 = vadd.f32 0.0, %v4123
          %v4125 = vpop.f32.mrf.mxu0
          %4126 = vdwg.mxu0
          %s4127 = sshll.u32 %s3141, 4
          %4128 = dma.done %s3146, %s4127
          %v4129 = vld [vmem:[%s3145] sm:$0xff]
          %v4130 = vld [vmem:[%s3145 + $0x8] sm:$0xff]
          %v4131 = vld [vmem:[%s3145 + $0x10] sm:$0xff]
          %v4132 = vld [vmem:[%s3145 + $0x18] sm:$0xff]
          %v4133 = vld [vmem:[%s3145 + $0x20] sm:$0xff]
          %v4134 = vld [vmem:[%s3145 + $0x28] sm:$0xff]
          %v4135 = vld [vmem:[%s3145 + $0x30] sm:$0xff]
          %v4136 = vld [vmem:[%s3145 + $0x38] sm:$0xff]
          %v4137 = vld [vmem:[%s3145 + $0x40] sm:$0xff]
          %v4138 = vld [vmem:[%s3145 + $0x48] sm:$0xff]
          %v4139 = vld [vmem:[%s3145 + $0x50] sm:$0xff]
          %v4140 = vld [vmem:[%s3145 + $0x58] sm:$0xff]
          %v4141 = vld [vmem:[%s3145 + $0x60] sm:$0xff]
          %v4142 = vld [vmem:[%s3145 + $0x68] sm:$0xff]
          %v4143 = vld [vmem:[%s3145 + $0x70] sm:$0xff]
          %v4144 = vld [vmem:[%s3145 + $0x78] sm:$0xff]
          %v4145 = vrot.slane %v3318, 3
          %v4163 = vunpack.c.l.b16 %v4129
          %v4164 = vunpack.c.h.b16 %v4129
          %v4165 = vunpack.c.l.b16 %v4130
          %v4166 = vunpack.c.h.b16 %v4130
          %v4167 = vunpack.c.l.b16 %v4131
          %v4168 = vunpack.c.h.b16 %v4131
          %v4169 = vunpack.c.l.b16 %v4132
          %v4170 = vunpack.c.h.b16 %v4132
          %v4171 = vunpack.c.l.b16 %v4133
          %v4172 = vunpack.c.h.b16 %v4133
          %v4173 = vunpack.c.l.b16 %v4134
          %v4174 = vunpack.c.h.b16 %v4134
          %v4175 = vunpack.c.l.b16 %v4135
          %v4176 = vunpack.c.h.b16 %v4135
          %v4177 = vunpack.c.l.b16 %v4136
          %v4178 = vunpack.c.h.b16 %v4136
          %v4179 = vunpack.c.l.b16 %v4137
          %v4180 = vunpack.c.h.b16 %v4137
          %v4181 = vunpack.c.l.b16 %v4138
          %v4182 = vunpack.c.h.b16 %v4138
          %v4183 = vunpack.c.l.b16 %v4139
          %v4184 = vunpack.c.h.b16 %v4139
          %v4185 = vunpack.c.l.b16 %v4140
          %v4186 = vunpack.c.h.b16 %v4140
          %v4187 = vunpack.c.l.b16 %v4141
          %v4188 = vunpack.c.h.b16 %v4141
          %v4189 = vunpack.c.l.b16 %v4142
          %v4190 = vunpack.c.h.b16 %v4142
          %v4191 = vunpack.c.l.b16 %v4143
          %v4192 = vunpack.c.h.b16 %v4143
          %v4193 = vunpack.c.l.b16 %v4144
          %v4194 = vunpack.c.h.b16 %v4144
          %v4195 = vpack.c.b16 %v4165, %v4163
          %v4196 = vpack.c.b16 %v4166, %v4164
          %v4197 = vpack.c.b16 %v4169, %v4167
          %v4198 = vpack.c.b16 %v4170, %v4168
          %v4199 = vpack.c.b16 %v4173, %v4171
          %v4200 = vpack.c.b16 %v4174, %v4172
          %v4201 = vpack.c.b16 %v4177, %v4175
          %v4202 = vpack.c.b16 %v4178, %v4176
          %v4203 = vpack.c.b16 %v4181, %v4179
          %v4204 = vpack.c.b16 %v4182, %v4180
          %v4205 = vpack.c.b16 %v4185, %v4183
          %v4206 = vpack.c.b16 %v4186, %v4184
          %v4207 = vpack.c.b16 %v4189, %v4187
          %v4208 = vpack.c.b16 %v4190, %v4188
          %v4209 = vpack.c.b16 %v4193, %v4191
          %v4210 = vpack.c.b16 %v4194, %v4192
          %4227 = vmatpush.bf16.msra.mxu0 %v4209
          %4228 = vmatpush.bf16.msra.mxu0 %v4207
          %4229 = vmatpush.bf16.msra.mxu0 %v4205
          %4230 = vmatpush.bf16.msra.mxu0 %v4203
          %4231 = vmatpush.bf16.msra.mxu0 %v4201
          %4232 = vmatpush.bf16.msra.mxu0 %v4199
          %4233 = vmatpush.bf16.msra.mxu0 %v4197
          %4234 = vmatpush.bf16.msra.mxu0 %v4195
          %4235 = vmatmul.bf16.gmra.mxu0 %v4145
          %v4236 = vpop.f32.mrf.mxu0
          %v4237 = vadd.f32 0.0, %v4236
          %v4238 = vpop.f32.mrf.mxu0
          %4239 = vdwg.mxu0
          %4240 = vmatpush.bf16.msra.mxu0 %v4210
          %4241 = vmatpush.bf16.msra.mxu0 %v4208
          %4242 = vmatpush.bf16.msra.mxu0 %v4206
          %4243 = vmatpush.bf16.msra.mxu0 %v4204
          %4244 = vmatpush.bf16.msra.mxu0 %v4202
          %4245 = vmatpush.bf16.msra.mxu0 %v4200
          %4246 = vmatpush.bf16.msra.mxu0 %v4198
          %4247 = vmatpush.bf16.msra.mxu0 %v4196
          %4248 = vmatmul.bf16.gmra.mxu0 %v4145
          %v4249 = vpop.f32.mrf.mxu0
          %v4250 = vadd.f32 0.0, %v4249
          %v4251 = vpop.f32.mrf.mxu0
          %4252 = vdwg.mxu0
          %v4255 = vrot.slane %v3411, 7
          %v4256 = vrot.slane %v3424, 7
          %v4261 = vrot.slane %v3551, 6
          %v4262 = vrot.slane %v3564, 6
          %v4267 = vrot.slane %v3691, 5
          %v4268 = vrot.slane %v3704, 5
          %v4273 = vrot.slane %v3831, 4
          %v4274 = vrot.slane %v3844, 4
          %v4279 = vrot.slane %v3971, 3
          %v4280 = vrot.slane %v3984, 3
          %v4285 = vrot.slane %v4111, 2
          %v4286 = vrot.slane %v4124, 2
          %v4291 = vrot.slane %v4237, 1
          %v4292 = vrot.slane %v4250, 1
          %vm4295 = vcmask 1040384
          %v4296 = vsel %vm4295, %v3266, %v4255
          %v4297 = vsel %vm4295, %v3279, %v4256
          %vm4298 = vcmask 1041408
          %v4299 = vsel %vm4298, %v4296, %v4261
          %v4300 = vsel %vm4298, %v4297, %v4262
          %vm4301 = vcmask 1042432
          %v4302 = vsel %vm4301, %v4299, %v4267
          %v4303 = vsel %vm4301, %v4300, %v4268
          %vm4304 = vcmask 1043456
          %v4305 = vsel %vm4304, %v4302, %v4273
          %v4306 = vsel %vm4304, %v4303, %v4274
          %vm4307 = vcmask 1044480
          %v4308 = vsel %vm4307, %v4305, %v4279
          %v4309 = vsel %vm4307, %v4306, %v4280
          %vm4310 = vcmask 1045504
          %v4311 = vsel %vm4310, %v4308, %v4285
          %v4312 = vsel %vm4310, %v4309, %v4286
          %vm4313 = vcmask 1046528
          %v4314 = vsel %vm4313, %v4311, %v4291
          %v4315 = vsel %vm4313, %v4312, %v4292
          %v4316 = vld [vmem:[#allocation32] sm:$0xff]
          %v4317 = vld [vmem:[#allocation32 + $0x8] sm:$0xff]
          %v4318 = vadd.f32 %v4314, %v4316
          %v4319 = vadd.f32 %v4315, %v4317
          %4320 = vst [vmem:[#allocation33] sm:$0xff] %v4318
          %4321 = vst [vmem:[#allocation33 + $0x8] sm:$0xff] %v4319
        $region220: #{_lambda_.1} parent=99 // pred_fallthru
          _
        // Predicated region
        $region249: #{_lambda_.1} parent=99 // pred_check
          %p4322 = pneg %p540
        $region250: #{_lambda_.1} parent=99 // pred_check_branch
          %4324 = sbr.rel (%p4322) target = $region252
        $region251: #{_lambda_.1} parent=99 // pred_region
          %4326 = vsyncadd [#allocation11], 0
          %s4328 = sshll.u32 [#allocation33], 4
          %s4329 = int_to_ptr.vmem [resolvable:$true] %s4328
          %s4330 = sshll.u32 %s23, 4
          %s4331 = int_to_ptr.hbm [resolvable:$true] %s4330
          %4333 = dma.vmem_to_hbm [thread:$0]  %s4329, 256, %s4331, [#allocation11]
        $region252: #{_lambda_.1} parent=99 // pred_fallthru
          _
        // Predicated region
        $region253: #{_lambda_.1} parent=99 // pred_check
          %p4334 = pneg %p540
        $region254: #{_lambda_.1} parent=99 // pred_check_branch
          %4336 = sbr.rel (%p4334) target = $region256
        $region255: #{_lambda_.1} parent=99 // pred_region
          %4338 = dma.done [#allocation11], 256
        $region256: #{_lambda_.1} parent=99 // pred_fallthru
          _
      $region100: #{_lambda_.1} parent=5 // pred_fallthru
        _
      %p4339 = scmp.le.s32.totalorder 2, %s42
      // Predicated region
      $region257: #{_lambda_.1} parent=5 // pred_check
        %p4340 = pneg %p4339
      $region258: #{_lambda_.1} parent=5 // pred_check_branch
        %4342 = sbr.rel (%p4340) target = $region260
      $region259: #{_lambda_.1} parent=5 // pred_region
        %s4343 = ssub.s32 %s42, 2
      $region260: #{_lambda_.1} parent=5 // pred_fallthru
        _
    $region6: #{_lambda_.1} parent=1 // loop_footer
      %s46 = sadd.s32 1, %s42
    $region7: #{_lambda_.1} parent=1 // loop_footer_branch
      %41 = sbr.rel target = $region3
    $region8: #{_lambda_.1} parent=1 // loop_exit
      _
    %4344 = vsyncpa [#allocation10], 1
    %s4345 = scalar_lea.sflag [#allocation10], 1
    %4346 = vsyncpa %s4345, 1
    %4347 = vsyncpa [#allocation13], 1
    %4348 = vsyncpa [#allocation16], 1
    %4349 = vsyncpa [#allocation19], 1
    %4350 = vsyncpa [#allocation11], 1
    %s4351 = scalar_lea.sflag [#allocation11], 1
    %4352 = vsyncpa %s4351, 1
  %4353 = vsyncmov [#allocation4]
  %s4354 = vpop.sfrf %4353
  %p4355 = scmp.eq.s32.totalorder %s4354, 0
  %p4356 = pneg %p4355
  %4358 = shalt.err (%p4356)
  %s4359 = scalar_lea.sflag [#allocation4], 1
  %4360 = vsyncmov %s4359
  %s4361 = vpop.sfrf %4360
  %p4362 = scmp.eq.s32.totalorder %s4361, 0
  %p4363 = pneg %p4362
  %4365 = shalt.err (%p4363)
  %s4366 = scalar_lea.sflag [#allocation4], 2
  %4367 = vsyncmov %s4366
  %s4368 = vpop.sfrf %4367
  %p4369 = scmp.eq.s32.totalorder %s4368, 0
  %p4370 = pneg %p4369
  %4372 = shalt.err (%p4370)
  %s4373 = scalar_lea.sflag [#allocation4], 3
  %4374 = vsyncmov %s4373
  %s4375 = vpop.sfrf %4374
  %p4376 = scmp.eq.s32.totalorder %s4375, 0
  %p4377 = pneg %p4376
  %4379 = shalt.err (%p4377)
  %s4380 = scalar_lea.sflag [#allocation4], 4
  %4381 = vsyncmov %s4380
  %s4382 = vpop.sfrf %4381
  %p4383 = scmp.eq.s32.totalorder %s4382, 0
  %p4384 = pneg %p4383
  %4386 = shalt.err (%p4384)
  %s4387 = scalar_lea.sflag [#allocation4], 5
  %4388 = vsyncmov %s4387
  %s4389 = vpop.sfrf %4388
  %p4390 = scmp.eq.s32.totalorder %s4389, 0
  %p4391 = pneg %p4390
  %4393 = shalt.err (%p4391)
  %s4394 = scalar_lea.sflag [#allocation4], 6
  %4395 = vsyncmov %s4394
  %s4396 = vpop.sfrf %4395
  %p4397 = scmp.eq.s32.totalorder %s4396, 0
  %p4398 = pneg %p4397
  %4400 = shalt.err (%p4398)
  %s4401 = scalar_lea.sflag [#allocation4], 7
  %4402 = vsyncmov %s4401
  %s4403 = vpop.sfrf %4402
  %p4404 = scmp.eq.s32.totalorder %s4403, 0
  %p4405 = pneg %p4404
  %4407 = shalt.err (%p4405)
  %4408 = vsyncmov [#allocation6]
  %s4409 = vpop.sfrf %4408
  %p4410 = scmp.eq.s32.totalorder %s4409, 0
  %p4411 = pneg %p4410
  %4413 = shalt.err (%p4411)
  %s4414 = scalar_lea.sflag [#allocation6], 1
  %4415 = vsyncmov %s4414
  %s4416 = vpop.sfrf %4415
  %p4417 = scmp.eq.s32.totalorder %s4416, 0
  %p4418 = pneg %p4417
  %4420 = shalt.err (%p4418)

</llo_original>
